<compile_context>
chip_gen: v7x
topology: tpu7x:2x2x1
jax: 0.10.0
libtpu: 0.0.40
codegen_flags: <defaults>
</compile_context>

<pallas_src>
import functools

import jax
import jax.numpy as jnp
from jax.experimental import pallas as pl
from jax.experimental.pallas import tpu as pltpu

# ---------------- config (scaled-down distilbert-base-uncased) ----------------
B = 2              # batch
S = 16             # sequence length
H = 128            # hidden size          (768 in the real model)
NH = 4             # attention heads      (12 in the real model)
DH = H // NH       # head dim
FFN = 4 * H        # feed-forward dim     (3072 in the real model)
NL = 2             # transformer layers   (6 in the real model)
VOCAB = 1000
MAX_POS = 64
NUM_CLASSES = 4
CLS_PAD = 128      # classifier output padded to a full lane width
LN_EPS = 1e-12
NEG_INF = -1e30    # additive key-mask bias for padded positions

ACT_DTYPE = jnp.bfloat16    # activation / matmul-operand storage dtype
W_DTYPE = jnp.bfloat16      # weight storage dtype
F32 = jnp.float32


# ------------------------------- in-kernel math --------------------------------
def _ln_f32(x, gamma, beta):
    """LayerNorm over the last axis, all math in f32.  gamma/beta: (1, H)."""
    mean = jnp.mean(x, axis=-1, keepdims=True)
    var = jnp.mean((x - mean) ** 2, axis=-1, keepdims=True)
    return (x - mean) * jax.lax.rsqrt(var + LN_EPS) * gamma + beta


def _gelu_f32(y):
    # TODO(synk): tanh-approx GELU; HF DistilBERT uses exact erf GELU (tiny divergence).
    return 0.5 * y * (1.0 + jnp.tanh(0.7978845608028654 * (y + 0.044715 * y * y * y)))


# --------------------------- fully fused forward kernel -------------------------
def _fused_forward_kernel(emb_ref, eg_ref, eb_ref, mb_ref,
                          wqkv_ref, bqkv_ref, wo_ref, bo_ref,
                          l1g_ref, l1b_ref, w1_ref, b1_ref,
                          w2_ref, b2_ref, l2g_ref, l2b_ref,
                          prew_ref, preb_ref, clsw_ref, clsb_ref,
                          out_ref, x_scr):
    """grid=(NL,): one DistilBERT TransformerBlock per step.

    Step 0 additionally runs the embedding LayerNorm; the last step runs CLS
    pooling + pre_classifier + ReLU + classifier.  The (B*S, H) activation is
    resident in the VMEM scratch `x_scr` across all grid steps.
    """
    layer = pl.program_id(0)

    # ---- phase 0: embedding LayerNorm (word + position already summed) ----
    @pl.when(layer == 0)
    def _():
        e = emb_ref[...].astype(F32)                               # (B*S, H)
        x_scr[...] = _ln_f32(e, eg_ref[...], eb_ref[...]).astype(x_scr.dtype)

    # ---- transformer block `layer` ----
    x = x_scr[...]                                                 # (B*S, H) bf16
    xf = x.astype(F32)

    # fused QKV projection over the whole batch (M = B*S = 32)
    qkv = (jnp.dot(x, wqkv_ref[0], preferred_element_type=F32)
           + bqkv_ref[0]).astype(jnp.bfloat16)                     # (B*S, 3H)
    q = qkv[:, 0 * H:1 * H]        # 1/sqrt(DH) baked into wqkv/bqkv Q columns
    k = qkv[:, 1 * H:2 * H]
    v = qkv[:, 2 * H:3 * H]

    # per-(batch, head) attention: one k-transpose per batch, additive mask
    # bias hoisted out of the head loop, bf16 context before lane reassembly.
    ctx_rows = []
    for b in range(B):
        r0 = b * S
        kbT = k[r0:r0 + S, :].T                                    # (H, S) bf16
        vb = v[r0:r0 + S, :]                                       # (S, H) bf16
        bias = mb_ref[b]                                           # (1, S) f32
        head_parts = []
        for h in range(NH):
            c0 = h * DH
            s = jnp.dot(q[r0:r0 + S, c0:c0 + DH], kbT[c0:c0 + DH, :],
                        preferred_element_type=F32) + bias         # (S, S) f32
            s = s - jnp.max(s, axis=-1, keepdims=True)
            p = jnp.exp(s)
            p = p * pl.reciprocal(jnp.sum(p, axis=-1, keepdims=True), approx=True)
            part = jnp.dot(p.astype(jnp.bfloat16), vb[:, c0:c0 + DH],
                           preferred_element_type=F32)             # (S, DH) f32
            head_parts.append(part.astype(jnp.bfloat16))
        ctx_rows.append(jnp.concatenate(head_parts, axis=-1))      # (S, H) bf16
    ctx = jnp.concatenate(ctx_rows, axis=0)                        # (B*S, H) bf16

    # output projection + residual + LN1 (whole batch)
    sa = jnp.dot(ctx, wo_ref[0], preferred_element_type=F32) + bo_ref[0]
    x1 = _ln_f32(sa + xf, l1g_ref[0], l1b_ref[0])                  # (B*S, H) f32

    # GELU FFN + residual + LN2 (whole batch)
    h1 = jnp.dot(x1.astype(jnp.bfloat16), w1_ref[0],
                 preferred_element_type=F32) + b1_ref[0]           # (B*S, FFN) f32
    h1 = _gelu_f32(h1)
    ff = jnp.dot(h1.astype(jnp.bfloat16), w2_ref[0],
                 preferred_element_type=F32) + b2_ref[0]           # (B*S, H) f32
    x2 = _ln_f32(ff + x1, l2g_ref[0], l2b_ref[0])
    x_scr[...] = x2.astype(x_scr.dtype)

    # ---- final phase: CLS pooling + pre_classifier + ReLU + classifier ----
    @pl.when(layer == pl.num_programs(0) - 1)
    def _():
        pooled = jnp.concatenate(
            [x2[b * S:b * S + 1, :] for b in range(B)], axis=0)    # (B, H) f32
        hid = jnp.dot(pooled.astype(jnp.bfloat16), prew_ref[...],
                      preferred_element_type=F32) + preb_ref[...]
        hid = jnp.maximum(hid, 0.0)
        # TODO(synk): torch.nn.Dropout(0.3) skipped (inference / eval -> identity).
        out_ref[...] = jnp.dot(hid.astype(jnp.bfloat16), clsw_ref[...],
                               preferred_element_type=F32) + clsb_ref[...]


# ------------------------------ model composition -------------------------------
def distilbert_class_forward(params, input_ids, attention_mask):
    # Embedding gather + positional add are plain-JAX glue (no clean Pallas
    # gather at this size; XLA fuses the elementwise add into the gather).
    we = jnp.take(params["word_emb"], input_ids, axis=0)           # (B, S, H) bf16
    emb = (we.astype(F32) + params["pos_emb"][:S].astype(F32)).astype(ACT_DTYPE)
    emb = emb.reshape(B * S, H)

    # additive key-mask bias precomputed once: 0 for real tokens, -1e30 for pad
    mask_bias = jnp.where(attention_mask.reshape(B, 1, S) > 0,
                          0.0, NEG_INF).astype(F32)

    layer_spec = lambda shape: pl.BlockSpec(shape, lambda l: (l, 0, 0))
    fixed2 = lambda shape: pl.BlockSpec(shape, lambda l: (0, 0))

    logits_pad = pl.pallas_call(
        _fused_forward_kernel,
        out_shape=jax.ShapeDtypeStruct((B, CLS_PAD), F32),
        grid=(NL,),
        in_specs=[
            fixed2((B * S, H)),                               # emb (resident)
            fixed2((1, H)),                                   # emb LN gamma
            fixed2((1, H)),                                   # emb LN beta
            pl.BlockSpec((B, 1, S), lambda l: (0, 0, 0)),     # mask bias (resident)
            layer_spec((1, H, 3 * H)),                        # wqkv  (streamed / layer)
            layer_spec((1, 1, 3 * H)),                        # bqkv
            layer_spec((1, H, H)),                            # wo
            layer_spec((1, 1, H)),                            # bo
            layer_spec((1, 1, H)),                            # ln1 gamma
            layer_spec((1, 1, H)),                            # ln1 beta
            layer_spec((1, H, FFN)),                          # w1
            layer_spec((1, 1, FFN)),                          # b1
            layer_spec((1, FFN, H)),                          # w2
            layer_spec((1, 1, H)),                            # b2
            layer_spec((1, 1, H)),                            # ln2 gamma
            layer_spec((1, 1, H)),                            # ln2 beta
            fixed2((H, H)),                                   # pre_classifier W
            fixed2((1, H)),                                   # pre_classifier b
            fixed2((H, CLS_PAD)),                             # classifier W (lane-padded)
            fixed2((1, CLS_PAD)),                             # classifier b (lane-padded)
        ],
        out_specs=pl.BlockSpec((B, CLS_PAD), lambda l: (0, 0)),
        scratch_shapes=[
            pltpu.VMEM((B * S, H), ACT_DTYPE),   # activation, resident across layers
        ],
        compiler_params=pltpu.CompilerParams(
            # layer axis is sequential (activation carried through VMEM scratch)
            dimension_semantics=("arbitrary",),
            vmem_limit_bytes=32 * 1024 * 1024,
        ),
    )(emb, params["emb_ln_g"], params["emb_ln_b"], mask_bias,
      params["wqkv"], params["bqkv"], params["wo"], params["bo"],
      params["ln1_g"], params["ln1_b"], params["w1"], params["b1"],
      params["w2"], params["b2"], params["ln2_g"], params["ln2_b"],
      params["pre_w"], params["pre_b"], params["cls_w"], params["cls_b"])

    return logits_pad[:, :NUM_CLASSES]                             # (B, 4) f32


# ------------------------------ deterministic init ------------------------------
def init_params(key):
    def nrm(k, shape, scale=0.02):
        return scale * jax.random.normal(k, shape, dtype=F32)

    keys = iter(jax.random.split(key, 4 + 4 * NL))

    cls_w = nrm(next(keys), (H, NUM_CLASSES))
    cls_w_pad = jnp.zeros((H, CLS_PAD), F32).at[:, :NUM_CLASSES].set(cls_w)

    params = {
        "word_emb": nrm(next(keys), (VOCAB, H)).astype(W_DTYPE),
        "pos_emb": nrm(next(keys), (MAX_POS, H)).astype(W_DTYPE),
        "emb_ln_g": jnp.ones((1, H), F32),
        "emb_ln_b": jnp.zeros((1, H), F32),
        "pre_w": nrm(next(keys), (H, H)).astype(W_DTYPE),
        "pre_b": jnp.zeros((1, H), F32),
        "cls_w": cls_w_pad.astype(W_DTYPE),        # padded to 128 lanes
        "cls_b": jnp.zeros((1, CLS_PAD), F32),     # padded to 128 lanes
    }

    # per-layer weights stacked along a leading NL axis (layer grid streaming)
    q_scale = 1.0 / (DH ** 0.5)
    wqkv_l, wo_l, w1_l, w2_l = [], [], [], []
    for _ in range(NL):
        wqkv = nrm(next(keys), (H, 3 * H))
        wqkv = wqkv.at[:, :H].multiply(q_scale)    # bake 1/sqrt(DH) into Q proj
        wqkv_l.append(wqkv.astype(W_DTYPE))
        wo_l.append(nrm(next(keys), (H, H)).astype(W_DTYPE))
        w1_l.append(nrm(next(keys), (H, FFN)).astype(W_DTYPE))
        w2_l.append(nrm(next(keys), (FFN, H)).astype(W_DTYPE))

    params.update({
        "wqkv": jnp.stack(wqkv_l),                        # (NL, H, 3H) bf16
        "bqkv": jnp.zeros((NL, 1, 3 * H), F32),           # (Q-bias would be scaled too)
        "wo": jnp.stack(wo_l),                            # (NL, H, H)
        "bo": jnp.zeros((NL, 1, H), F32),
        "ln1_g": jnp.ones((NL, 1, H), F32),
        "ln1_b": jnp.zeros((NL, 1, H), F32),
        "w1": jnp.stack(w1_l),                            # (NL, H, FFN)
        "b1": jnp.zeros((NL, 1, FFN), F32),
        "w2": jnp.stack(w2_l),                            # (NL, FFN, H)
        "b2": jnp.zeros((NL, 1, H), F32),
        "ln2_g": jnp.ones((NL, 1, H), F32),
        "ln2_b": jnp.zeros((NL, 1, H), F32),
    })
    return params


# ------------------------------------ main --------------------------------------
if __name__ == "__main__":
    root = jax.random.PRNGKey(0)
    k_param, k_ids = jax.random.split(root)

    params = init_params(k_param)
    input_ids = jax.random.randint(k_ids, (B, S), 0, VOCAB, dtype=jnp.int32)
    # second example has 4 padded (masked-out) positions to exercise the mask path
    attention_mask = jnp.array(
        [[1] * S, [1] * (S - 4) + [0] * 4], dtype=jnp.int32)

    fwd = jax.jit(functools.partial(distilbert_class_forward, params))
    logits = jax.block_until_ready(fwd(input_ids, attention_mask))

    assert logits.shape == (B, NUM_CLASSES)
    assert bool(jnp.all(jnp.isfinite(logits)))
    print("KERNEL_OK")
</pallas_src>

<mosaic_0001>
module attributes {stable_mosaic.version = 11 : i64} {
  func.func @_fused_forward_kernel(%arg0: i32, %arg1: memref<32x128xbf16, #tpu.memory_space<vmem>>, %arg2: memref<1x128xf32, #tpu.memory_space<vmem>>, %arg3: memref<1x128xf32, #tpu.memory_space<vmem>>, %arg4: memref<2x1x16xf32, #tpu.memory_space<vmem>>, %arg5: memref<1x128x384xbf16, #tpu.memory_space<vmem>>, %arg6: memref<1x1x384xf32, #tpu.memory_space<vmem>>, %arg7: memref<1x128x128xbf16, #tpu.memory_space<vmem>>, %arg8: memref<1x1x128xf32, #tpu.memory_space<vmem>>, %arg9: memref<1x1x128xf32, #tpu.memory_space<vmem>>, %arg10: memref<1x1x128xf32, #tpu.memory_space<vmem>>, %arg11: memref<1x128x512xbf16, #tpu.memory_space<vmem>>, %arg12: memref<1x1x512xf32, #tpu.memory_space<vmem>>, %arg13: memref<1x512x128xbf16, #tpu.memory_space<vmem>>, %arg14: memref<1x1x128xf32, #tpu.memory_space<vmem>>, %arg15: memref<1x1x128xf32, #tpu.memory_space<vmem>>, %arg16: memref<1x1x128xf32, #tpu.memory_space<vmem>>, %arg17: memref<128x128xbf16, #tpu.memory_space<vmem>>, %arg18: memref<1x128xf32, #tpu.memory_space<vmem>>, %arg19: memref<128x128xbf16, #tpu.memory_space<vmem>>, %arg20: memref<1x128xf32, #tpu.memory_space<vmem>>, %arg21: memref<2x128xf32, #tpu.memory_space<vmem>>, %arg22: memref<32x128xbf16, #tpu.memory_space<vmem>>) attributes {dimension_semantics = [#tpu.dimension_semantics<arbitrary>], iteration_bounds = array<i64: 2>, scalar_prefetch = 0 : i64, scratch_operands = 1 : i64, tpu.core_type = #tpu.core_type<tc>, window_params = [{pipeline_mode = #tpu.pipeline_mode<synchronous>, transform_indices = @transform_0, window_bounds = array<i64: 32, 128>}, {pipeline_mode = #tpu.pipeline_mode<synchronous>, transform_indices = @transform_1, window_bounds = array<i64: 1, 128>}, {pipeline_mode = #tpu.pipeline_mode<synchronous>, transform_indices = @transform_2, window_bounds = array<i64: 1, 128>}, {pipeline_mode = #tpu.pipeline_mode<synchronous>, transform_indices = @transform_3, window_bounds = array<i64: 2, 1, 16>}, {transform_indices = @transform_4, window_bounds = array<i64: 1, 128, 384>}, {transform_indices = @transform_5, window_bounds = array<i64: 1, 1, 384>}, {transform_indices = @transform_6, window_bounds = array<i64: 1, 128, 128>}, {transform_indices = @transform_7, window_bounds = array<i64: 1, 1, 128>}, {transform_indices = @transform_8, window_bounds = array<i64: 1, 1, 128>}, {transform_indices = @transform_9, window_bounds = array<i64: 1, 1, 128>}, {transform_indices = @transform_10, window_bounds = array<i64: 1, 128, 512>}, {transform_indices = @transform_11, window_bounds = array<i64: 1, 1, 512>}, {transform_indices = @transform_12, window_bounds = array<i64: 1, 512, 128>}, {transform_indices = @transform_13, window_bounds = array<i64: 1, 1, 128>}, {transform_indices = @transform_14, window_bounds = array<i64: 1, 1, 128>}, {transform_indices = @transform_15, window_bounds = array<i64: 1, 1, 128>}, {pipeline_mode = #tpu.pipeline_mode<synchronous>, transform_indices = @transform_16, window_bounds = array<i64: 128, 128>}, {pipeline_mode = #tpu.pipeline_mode<synchronous>, transform_indices = @transform_17, window_bounds = array<i64: 1, 128>}, {pipeline_mode = #tpu.pipeline_mode<synchronous>, transform_indices = @transform_18, window_bounds = array<i64: 128, 128>}, {pipeline_mode = #tpu.pipeline_mode<synchronous>, transform_indices = @transform_19, window_bounds = array<i64: 1, 128>}, {pipeline_mode = #tpu.pipeline_mode<synchronous>, transform_indices = @transform_20, window_bounds = array<i64: 2, 128>}]} {
    %c0_i32 = arith.constant 0 : i32
    %0 = arith.cmpi eq, %arg0, %c0_i32 : i32
    %1 = arith.extui %0 : i1 to i32
    %c0_i32_0 = arith.constant 0 : i32
    %2 = arith.cmpi ne, %1, %c0_i32_0 : i32
    scf.if %2 {
      %c0_95 = arith.constant 0 : index
      %c0_96 = arith.constant 0 : index
      %276 = vector.load %arg1[%c0_95, %c0_96] : memref<32x128xbf16, #tpu.memory_space<vmem>>, vector<32x128xbf16>
      %277 = arith.extf %276 : vector<32x128xbf16> to vector<32x128xf32>
      %c0_97 = arith.constant 0 : index
      %c0_98 = arith.constant 0 : index
      %278 = vector.load %arg2[%c0_97, %c0_98] : memref<1x128xf32, #tpu.memory_space<vmem>>, vector<1x128xf32>
      %c0_99 = arith.constant 0 : index
      %c0_100 = arith.constant 0 : index
      %279 = vector.load %arg3[%c0_99, %c0_100] : memref<1x128xf32, #tpu.memory_space<vmem>>, vector<1x128xf32>
      %cst_101 = arith.constant dense<0.000000e+00> : vector<32xf32>
      %280 = vector.multi_reduction <add>, %277, %cst_101 [1] : vector<32x128xf32> to vector<32xf32>
      %281 = vector.shape_cast %280 : vector<32xf32> to vector<32x1xf32>
      %cst_102 = arith.constant 1.280000e+02 : f32
      %282 = vector.broadcast %cst_102 : f32 to vector<32x1xf32>
      %283 = arith.divf %281, %282 : vector<32x1xf32>
      %284 = vector.broadcast %283 : vector<32x1xf32> to vector<32x128xf32>
      %285 = arith.subf %277, %284 : vector<32x128xf32>
      %286 = arith.mulf %285, %285 : vector<32x128xf32>
      %cst_103 = arith.constant dense<0.000000e+00> : vector<32xf32>
      %287 = vector.multi_reduction <add>, %286, %cst_103 [1] : vector<32x128xf32> to vector<32xf32>
      %288 = vector.shape_cast %287 : vector<32xf32> to vector<32x1xf32>
      %cst_104 = arith.constant 1.280000e+02 : f32
      %289 = vector.broadcast %cst_104 : f32 to vector<32x1xf32>
      %290 = arith.divf %288, %289 : vector<32x1xf32>
      %291 = vector.broadcast %283 : vector<32x1xf32> to vector<32x128xf32>
      %292 = arith.subf %277, %291 : vector<32x128xf32>
      %cst_105 = arith.constant 9.99999996E-13 : f32
      %293 = vector.broadcast %cst_105 : f32 to vector<32x1xf32>
      %294 = arith.addf %290, %293 : vector<32x1xf32>
      %295 = math.rsqrt %294 : vector<32x1xf32>
      %296 = vector.broadcast %295 : vector<32x1xf32> to vector<32x128xf32>
      %297 = arith.mulf %292, %296 : vector<32x128xf32>
      %298 = vector.broadcast %278 : vector<1x128xf32> to vector<32x128xf32>
      %299 = arith.mulf %297, %298 : vector<32x128xf32>
      %300 = vector.broadcast %279 : vector<1x128xf32> to vector<32x128xf32>
      %301 = arith.addf %299, %300 : vector<32x128xf32>
      %302 = arith.truncf %301 : vector<32x128xf32> to vector<32x128xbf16>
      %c0_106 = arith.constant 0 : index
      %c0_107 = arith.constant 0 : index
      %303 = vector.load %arg22[%c0_106, %c0_107] : memref<32x128xbf16, #tpu.memory_space<vmem>>, vector<32x128xbf16>
      tpu.vector_store %arg22[%c0_106, %c0_107], %302 {strides = array<i32>} : memref<32x128xbf16, #tpu.memory_space<vmem>>, vector<32x128xbf16>,
    } else {
    }
    %c0 = arith.constant 0 : index
    %c0_1 = arith.constant 0 : index
    %3 = vector.load %arg22[%c0, %c0_1] : memref<32x128xbf16, #tpu.memory_space<vmem>>, vector<32x128xbf16>
    %4 = arith.extf %3 : vector<32x128xbf16> to vector<32x128xf32>
    %c0_2 = arith.constant 0 : index
    %c0_3 = arith.constant 0 : index
    %c0_4 = arith.constant 0 : index
    %5 = vector.load %arg5[%c0_2, %c0_3, %c0_4] : memref<1x128x384xbf16, #tpu.memory_space<vmem>>, vector<1x128x384xbf16>
    %6 = vector.shape_cast %5 : vector<1x128x384xbf16> to vector<128x384xbf16>
    %cst = arith.constant dense<0.000000e+00> : vector<32x384xf32>
    %7 = tpu.matmul %3, %6, %cst {dimension_numbers = #tpu.dot_dimension_numbers<[1], [0], [0], [1], [0, 0, 1, 1], [], []>} : vector<32x128xbf16>, vector<128x384xbf16>, vector<32x384xf32> -> vector<32x384xf32>
    %c0_5 = arith.constant 0 : index
    %c0_6 = arith.constant 0 : index
    %c0_7 = arith.constant 0 : index
    %8 = vector.load %arg6[%c0_5, %c0_6, %c0_7] : memref<1x1x384xf32, #tpu.memory_space<vmem>>, vector<1x1x384xf32>
    %9 = vector.shape_cast %8 : vector<1x1x384xf32> to vector<1x384xf32>
    %10 = vector.broadcast %9 : vector<1x384xf32> to vector<32x384xf32>
    %11 = arith.addf %7, %10 : vector<32x384xf32>
    %12 = arith.truncf %11 : vector<32x384xf32> to vector<32x384xbf16>
    %13 = vector.extract_strided_slice %12 {offsets = [0, 0], sizes = [32, 128], strides = [1, 1]} : vector<32x384xbf16> to vector<32x128xbf16>
    %14 = vector.extract_strided_slice %12 {offsets = [0, 128], sizes = [32, 128], strides = [1, 1]} : vector<32x384xbf16> to vector<32x128xbf16>
    %15 = vector.extract_strided_slice %12 {offsets = [0, 256], sizes = [32, 128], strides = [1, 1]} : vector<32x384xbf16> to vector<32x128xbf16>
    %16 = vector.extract_strided_slice %14 {offsets = [0, 0], sizes = [16, 128], strides = [1, 1]} : vector<32x128xbf16> to vector<16x128xbf16>
    %17 = tpu.transpose %16, [1, 0] : vector<16x128xbf16> -> vector<128x16xbf16>
    %18 = vector.extract_strided_slice %15 {offsets = [0, 0], sizes = [16, 128], strides = [1, 1]} : vector<32x128xbf16> to vector<16x128xbf16>
    %c0_8 = arith.constant 0 : index
    %c0_9 = arith.constant 0 : index
    %c0_10 = arith.constant 0 : index
    %19 = vector.load %arg4[%c0_8, %c0_9, %c0_10] : memref<2x1x16xf32, #tpu.memory_space<vmem>>, vector<1x1x16xf32>
    %20 = vector.shape_cast %19 : vector<1x1x16xf32> to vector<1x16xf32>
    %21 = vector.extract_strided_slice %13 {offsets = [0, 0], sizes = [16, 32], strides = [1, 1]} : vector<32x128xbf16> to vector<16x32xbf16>
    %22 = vector.extract_strided_slice %17 {offsets = [0, 0], sizes = [32, 16], strides = [1, 1]} : vector<128x16xbf16> to vector<32x16xbf16>
    %cst_11 = arith.constant dense<0.000000e+00> : vector<16x16xf32>
    %23 = tpu.matmul %21, %22, %cst_11 {dimension_numbers = #tpu.dot_dimension_numbers<[1], [0], [0], [1], [0, 0, 1, 1], [], []>} : vector<16x32xbf16>, vector<32x16xbf16>, vector<16x16xf32> -> vector<16x16xf32>
    %24 = vector.broadcast %20 : vector<1x16xf32> to vector<16x16xf32>
    %25 = arith.addf %23, %24 : vector<16x16xf32>
    %cst_12 = arith.constant dense<0xFF800000> : vector<16xf32>
    %26 = vector.multi_reduction <maximumf>, %25, %cst_12 [1] : vector<16x16xf32> to vector<16xf32>
    %27 = vector.shape_cast %26 : vector<16xf32> to vector<16x1xf32>
    %28 = vector.broadcast %27 : vector<16x1xf32> to vector<16x16xf32>
    %29 = arith.subf %25, %28 : vector<16x16xf32>
    %30 = math.exp %29 : vector<16x16xf32>
    %cst_13 = arith.constant dense<0.000000e+00> : vector<16xf32>
    %31 = vector.multi_reduction <add>, %30, %cst_13 [1] : vector<16x16xf32> to vector<16xf32>
    %32 = vector.shape_cast %31 : vector<16xf32> to vector<16x1xf32>
    %33 = tpu.reciprocal %32 {approx = true} : vector<16x1xf32> -> vector<16x1xf32>
    %34 = vector.broadcast %33 : vector<16x1xf32> to vector<16x16xf32>
    %35 = arith.mulf %30, %34 : vector<16x16xf32>
    %36 = arith.truncf %35 : vector<16x16xf32> to vector<16x16xbf16>
    %37 = vector.extract_strided_slice %18 {offsets = [0, 0], sizes = [16, 32], strides = [1, 1]} : vector<16x128xbf16> to vector<16x32xbf16>
    %cst_14 = arith.constant dense<0.000000e+00> : vector<16x32xf32>
    %38 = tpu.matmul %36, %37, %cst_14 {dimension_numbers = #tpu.dot_dimension_numbers<[1], [0], [0], [1], [0, 0, 1, 1], [], []>} : vector<16x16xbf16>, vector<16x32xbf16>, vector<16x32xf32> -> vector<16x32xf32>
    %39 = arith.truncf %38 : vector<16x32xf32> to vector<16x32xbf16>
    %40 = vector.extract_strided_slice %13 {offsets = [0, 32], sizes = [16, 32], strides = [1, 1]} : vector<32x128xbf16> to vector<16x32xbf16>
    %41 = vector.extract_strided_slice %17 {offsets = [32, 0], sizes = [32, 16], strides = [1, 1]} : vector<128x16xbf16> to vector<32x16xbf16>
    %cst_15 = arith.constant dense<0.000000e+00> : vector<16x16xf32>
    %42 = tpu.matmul %40, %41, %cst_15 {dimension_numbers = #tpu.dot_dimension_numbers<[1], [0], [0], [1], [0, 0, 1, 1], [], []>} : vector<16x32xbf16>, vector<32x16xbf16>, vector<16x16xf32> -> vector<16x16xf32>
    %43 = vector.broadcast %20 : vector<1x16xf32> to vector<16x16xf32>
    %44 = arith.addf %42, %43 : vector<16x16xf32>
    %cst_16 = arith.constant dense<0xFF800000> : vector<16xf32>
    %45 = vector.multi_reduction <maximumf>, %44, %cst_16 [1] : vector<16x16xf32> to vector<16xf32>
    %46 = vector.shape_cast %45 : vector<16xf32> to vector<16x1xf32>
    %47 = vector.broadcast %46 : vector<16x1xf32> to vector<16x16xf32>
    %48 = arith.subf %44, %47 : vector<16x16xf32>
    %49 = math.exp %48 : vector<16x16xf32>
    %cst_17 = arith.constant dense<0.000000e+00> : vector<16xf32>
    %50 = vector.multi_reduction <add>, %49, %cst_17 [1] : vector<16x16xf32> to vector<16xf32>
    %51 = vector.shape_cast %50 : vector<16xf32> to vector<16x1xf32>
    %52 = tpu.reciprocal %51 {approx = true} : vector<16x1xf32> -> vector<16x1xf32>
    %53 = vector.broadcast %52 : vector<16x1xf32> to vector<16x16xf32>
    %54 = arith.mulf %49, %53 : vector<16x16xf32>
    %55 = arith.truncf %54 : vector<16x16xf32> to vector<16x16xbf16>
    %56 = vector.extract_strided_slice %18 {offsets = [0, 32], sizes = [16, 32], strides = [1, 1]} : vector<16x128xbf16> to vector<16x32xbf16>
    %cst_18 = arith.constant dense<0.000000e+00> : vector<16x32xf32>
    %57 = tpu.matmul %55, %56, %cst_18 {dimension_numbers = #tpu.dot_dimension_numbers<[1], [0], [0], [1], [0, 0, 1, 1], [], []>} : vector<16x16xbf16>, vector<16x32xbf16>, vector<16x32xf32> -> vector<16x32xf32>
    %58 = arith.truncf %57 : vector<16x32xf32> to vector<16x32xbf16>
    %59 = vector.extract_strided_slice %13 {offsets = [0, 64], sizes = [16, 32], strides = [1, 1]} : vector<32x128xbf16> to vector<16x32xbf16>
    %60 = vector.extract_strided_slice %17 {offsets = [64, 0], sizes = [32, 16], strides = [1, 1]} : vector<128x16xbf16> to vector<32x16xbf16>
    %cst_19 = arith.constant dense<0.000000e+00> : vector<16x16xf32>
    %61 = tpu.matmul %59, %60, %cst_19 {dimension_numbers = #tpu.dot_dimension_numbers<[1], [0], [0], [1], [0, 0, 1, 1], [], []>} : vector<16x32xbf16>, vector<32x16xbf16>, vector<16x16xf32> -> vector<16x16xf32>
    %62 = vector.broadcast %20 : vector<1x16xf32> to vector<16x16xf32>
    %63 = arith.addf %61, %62 : vector<16x16xf32>
    %cst_20 = arith.constant dense<0xFF800000> : vector<16xf32>
    %64 = vector.multi_reduction <maximumf>, %63, %cst_20 [1] : vector<16x16xf32> to vector<16xf32>
    %65 = vector.shape_cast %64 : vector<16xf32> to vector<16x1xf32>
    %66 = vector.broadcast %65 : vector<16x1xf32> to vector<16x16xf32>
    %67 = arith.subf %63, %66 : vector<16x16xf32>
    %68 = math.exp %67 : vector<16x16xf32>
    %cst_21 = arith.constant dense<0.000000e+00> : vector<16xf32>
    %69 = vector.multi_reduction <add>, %68, %cst_21 [1] : vector<16x16xf32> to vector<16xf32>
    %70 = vector.shape_cast %69 : vector<16xf32> to vector<16x1xf32>
    %71 = tpu.reciprocal %70 {approx = true} : vector<16x1xf32> -> vector<16x1xf32>
    %72 = vector.broadcast %71 : vector<16x1xf32> to vector<16x16xf32>
    %73 = arith.mulf %68, %72 : vector<16x16xf32>
    %74 = arith.truncf %73 : vector<16x16xf32> to vector<16x16xbf16>
    %75 = vector.extract_strided_slice %18 {offsets = [0, 64], sizes = [16, 32], strides = [1, 1]} : vector<16x128xbf16> to vector<16x32xbf16>
    %cst_22 = arith.constant dense<0.000000e+00> : vector<16x32xf32>
    %76 = tpu.matmul %74, %75, %cst_22 {dimension_numbers = #tpu.dot_dimension_numbers<[1], [0], [0], [1], [0, 0, 1, 1], [], []>} : vector<16x16xbf16>, vector<16x32xbf16>, vector<16x32xf32> -> vector<16x32xf32>
    %77 = arith.truncf %76 : vector<16x32xf32> to vector<16x32xbf16>
    %78 = vector.extract_strided_slice %13 {offsets = [0, 96], sizes = [16, 32], strides = [1, 1]} : vector<32x128xbf16> to vector<16x32xbf16>
    %79 = vector.extract_strided_slice %17 {offsets = [96, 0], sizes = [32, 16], strides = [1, 1]} : vector<128x16xbf16> to vector<32x16xbf16>
    %cst_23 = arith.constant dense<0.000000e+00> : vector<16x16xf32>
    %80 = tpu.matmul %78, %79, %cst_23 {dimension_numbers = #tpu.dot_dimension_numbers<[1], [0], [0], [1], [0, 0, 1, 1], [], []>} : vector<16x32xbf16>, vector<32x16xbf16>, vector<16x16xf32> -> vector<16x16xf32>
    %81 = vector.broadcast %20 : vector<1x16xf32> to vector<16x16xf32>
    %82 = arith.addf %80, %81 : vector<16x16xf32>
    %cst_24 = arith.constant dense<0xFF800000> : vector<16xf32>
    %83 = vector.multi_reduction <maximumf>, %82, %cst_24 [1] : vector<16x16xf32> to vector<16xf32>
    %84 = vector.shape_cast %83 : vector<16xf32> to vector<16x1xf32>
    %85 = vector.broadcast %84 : vector<16x1xf32> to vector<16x16xf32>
    %86 = arith.subf %82, %85 : vector<16x16xf32>
    %87 = math.exp %86 : vector<16x16xf32>
    %cst_25 = arith.constant dense<0.000000e+00> : vector<16xf32>
    %88 = vector.multi_reduction <add>, %87, %cst_25 [1] : vector<16x16xf32> to vector<16xf32>
    %89 = vector.shape_cast %88 : vector<16xf32> to vector<16x1xf32>
    %90 = tpu.reciprocal %89 {approx = true} : vector<16x1xf32> -> vector<16x1xf32>
    %91 = vector.broadcast %90 : vector<16x1xf32> to vector<16x16xf32>
    %92 = arith.mulf %87, %91 : vector<16x16xf32>
    %93 = arith.truncf %92 : vector<16x16xf32> to vector<16x16xbf16>
    %94 = vector.extract_strided_slice %18 {offsets = [0, 96], sizes = [16, 32], strides = [1, 1]} : vector<16x128xbf16> to vector<16x32xbf16>
    %cst_26 = arith.constant dense<0.000000e+00> : vector<16x32xf32>
    %95 = tpu.matmul %93, %94, %cst_26 {dimension_numbers = #tpu.dot_dimension_numbers<[1], [0], [0], [1], [0, 0, 1, 1], [], []>} : vector<16x16xbf16>, vector<16x32xbf16>, vector<16x32xf32> -> vector<16x32xf32>
    %96 = arith.truncf %95 : vector<16x32xf32> to vector<16x32xbf16>
    %97 = tpu.concatenate %39, %58, %77, %96 in 1 : vector<16x32xbf16>, vector<16x32xbf16>, vector<16x32xbf16>, vector<16x32xbf16> -> vector<16x128xbf16>
    %98 = vector.extract_strided_slice %14 {offsets = [16, 0], sizes = [16, 128], strides = [1, 1]} : vector<32x128xbf16> to vector<16x128xbf16>
    %99 = tpu.transpose %98, [1, 0] : vector<16x128xbf16> -> vector<128x16xbf16>
    %100 = vector.extract_strided_slice %15 {offsets = [16, 0], sizes = [16, 128], strides = [1, 1]} : vector<32x128xbf16> to vector<16x128xbf16>
    %c1 = arith.constant 1 : index
    %c0_27 = arith.constant 0 : index
    %c0_28 = arith.constant 0 : index
    %101 = vector.load %arg4[%c1, %c0_27, %c0_28] : memref<2x1x16xf32, #tpu.memory_space<vmem>>, vector<1x1x16xf32>
    %102 = vector.shape_cast %101 : vector<1x1x16xf32> to vector<1x16xf32>
    %103 = vector.extract_strided_slice %13 {offsets = [16, 0], sizes = [16, 32], strides = [1, 1]} : vector<32x128xbf16> to vector<16x32xbf16>
    %104 = vector.extract_strided_slice %99 {offsets = [0, 0], sizes = [32, 16], strides = [1, 1]} : vector<128x16xbf16> to vector<32x16xbf16>
    %cst_29 = arith.constant dense<0.000000e+00> : vector<16x16xf32>
    %105 = tpu.matmul %103, %104, %cst_29 {dimension_numbers = #tpu.dot_dimension_numbers<[1], [0], [0], [1], [0, 0, 1, 1], [], []>} : vector<16x32xbf16>, vector<32x16xbf16>, vector<16x16xf32> -> vector<16x16xf32>
    %106 = vector.broadcast %102 : vector<1x16xf32> to vector<16x16xf32>
    %107 = arith.addf %105, %106 : vector<16x16xf32>
    %cst_30 = arith.constant dense<0xFF800000> : vector<16xf32>
    %108 = vector.multi_reduction <maximumf>, %107, %cst_30 [1] : vector<16x16xf32> to vector<16xf32>
    %109 = vector.shape_cast %108 : vector<16xf32> to vector<16x1xf32>
    %110 = vector.broadcast %109 : vector<16x1xf32> to vector<16x16xf32>
    %111 = arith.subf %107, %110 : vector<16x16xf32>
    %112 = math.exp %111 : vector<16x16xf32>
    %cst_31 = arith.constant dense<0.000000e+00> : vector<16xf32>
    %113 = vector.multi_reduction <add>, %112, %cst_31 [1] : vector<16x16xf32> to vector<16xf32>
    %114 = vector.shape_cast %113 : vector<16xf32> to vector<16x1xf32>
    %115 = tpu.reciprocal %114 {approx = true} : vector<16x1xf32> -> vector<16x1xf32>
    %116 = vector.broadcast %115 : vector<16x1xf32> to vector<16x16xf32>
    %117 = arith.mulf %112, %116 : vector<16x16xf32>
    %118 = arith.truncf %117 : vector<16x16xf32> to vector<16x16xbf16>
    %119 = vector.extract_strided_slice %100 {offsets = [0, 0], sizes = [16, 32], strides = [1, 1]} : vector<16x128xbf16> to vector<16x32xbf16>
    %cst_32 = arith.constant dense<0.000000e+00> : vector<16x32xf32>
    %120 = tpu.matmul %118, %119, %cst_32 {dimension_numbers = #tpu.dot_dimension_numbers<[1], [0], [0], [1], [0, 0, 1, 1], [], []>} : vector<16x16xbf16>, vector<16x32xbf16>, vector<16x32xf32> -> vector<16x32xf32>
    %121 = arith.truncf %120 : vector<16x32xf32> to vector<16x32xbf16>
    %122 = vector.extract_strided_slice %13 {offsets = [16, 32], sizes = [16, 32], strides = [1, 1]} : vector<32x128xbf16> to vector<16x32xbf16>
    %123 = vector.extract_strided_slice %99 {offsets = [32, 0], sizes = [32, 16], strides = [1, 1]} : vector<128x16xbf16> to vector<32x16xbf16>
    %cst_33 = arith.constant dense<0.000000e+00> : vector<16x16xf32>
    %124 = tpu.matmul %122, %123, %cst_33 {dimension_numbers = #tpu.dot_dimension_numbers<[1], [0], [0], [1], [0, 0, 1, 1], [], []>} : vector<16x32xbf16>, vector<32x16xbf16>, vector<16x16xf32> -> vector<16x16xf32>
    %125 = vector.broadcast %102 : vector<1x16xf32> to vector<16x16xf32>
    %126 = arith.addf %124, %125 : vector<16x16xf32>
    %cst_34 = arith.constant dense<0xFF800000> : vector<16xf32>
    %127 = vector.multi_reduction <maximumf>, %126, %cst_34 [1] : vector<16x16xf32> to vector<16xf32>
    %128 = vector.shape_cast %127 : vector<16xf32> to vector<16x1xf32>
    %129 = vector.broadcast %128 : vector<16x1xf32> to vector<16x16xf32>
    %130 = arith.subf %126, %129 : vector<16x16xf32>
    %131 = math.exp %130 : vector<16x16xf32>
    %cst_35 = arith.constant dense<0.000000e+00> : vector<16xf32>
    %132 = vector.multi_reduction <add>, %131, %cst_35 [1] : vector<16x16xf32> to vector<16xf32>
    %133 = vector.shape_cast %132 : vector<16xf32> to vector<16x1xf32>
    %134 = tpu.reciprocal %133 {approx = true} : vector<16x1xf32> -> vector<16x1xf32>
    %135 = vector.broadcast %134 : vector<16x1xf32> to vector<16x16xf32>
    %136 = arith.mulf %131, %135 : vector<16x16xf32>
    %137 = arith.truncf %136 : vector<16x16xf32> to vector<16x16xbf16>
    %138 = vector.extract_strided_slice %100 {offsets = [0, 32], sizes = [16, 32], strides = [1, 1]} : vector<16x128xbf16> to vector<16x32xbf16>
    %cst_36 = arith.constant dense<0.000000e+00> : vector<16x32xf32>
    %139 = tpu.matmul %137, %138, %cst_36 {dimension_numbers = #tpu.dot_dimension_numbers<[1], [0], [0], [1], [0, 0, 1, 1], [], []>} : vector<16x16xbf16>, vector<16x32xbf16>, vector<16x32xf32> -> vector<16x32xf32>
    %140 = arith.truncf %139 : vector<16x32xf32> to vector<16x32xbf16>
    %141 = vector.extract_strided_slice %13 {offsets = [16, 64], sizes = [16, 32], strides = [1, 1]} : vector<32x128xbf16> to vector<16x32xbf16>
    %142 = vector.extract_strided_slice %99 {offsets = [64, 0], sizes = [32, 16], strides = [1, 1]} : vector<128x16xbf16> to vector<32x16xbf16>
    %cst_37 = arith.constant dense<0.000000e+00> : vector<16x16xf32>
    %143 = tpu.matmul %141, %142, %cst_37 {dimension_numbers = #tpu.dot_dimension_numbers<[1], [0], [0], [1], [0, 0, 1, 1], [], []>} : vector<16x32xbf16>, vector<32x16xbf16>, vector<16x16xf32> -> vector<16x16xf32>
    %144 = vector.broadcast %102 : vector<1x16xf32> to vector<16x16xf32>
    %145 = arith.addf %143, %144 : vector<16x16xf32>
    %cst_38 = arith.constant dense<0xFF800000> : vector<16xf32>
    %146 = vector.multi_reduction <maximumf>, %145, %cst_38 [1] : vector<16x16xf32> to vector<16xf32>
    %147 = vector.shape_cast %146 : vector<16xf32> to vector<16x1xf32>
    %148 = vector.broadcast %147 : vector<16x1xf32> to vector<16x16xf32>
    %149 = arith.subf %145, %148 : vector<16x16xf32>
    %150 = math.exp %149 : vector<16x16xf32>
    %cst_39 = arith.constant dense<0.000000e+00> : vector<16xf32>
    %151 = vector.multi_reduction <add>, %150, %cst_39 [1] : vector<16x16xf32> to vector<16xf32>
    %152 = vector.shape_cast %151 : vector<16xf32> to vector<16x1xf32>
    %153 = tpu.reciprocal %152 {approx = true} : vector<16x1xf32> -> vector<16x1xf32>
    %154 = vector.broadcast %153 : vector<16x1xf32> to vector<16x16xf32>
    %155 = arith.mulf %150, %154 : vector<16x16xf32>
    %156 = arith.truncf %155 : vector<16x16xf32> to vector<16x16xbf16>
    %157 = vector.extract_strided_slice %100 {offsets = [0, 64], sizes = [16, 32], strides = [1, 1]} : vector<16x128xbf16> to vector<16x32xbf16>
    %cst_40 = arith.constant dense<0.000000e+00> : vector<16x32xf32>
    %158 = tpu.matmul %156, %157, %cst_40 {dimension_numbers = #tpu.dot_dimension_numbers<[1], [0], [0], [1], [0, 0, 1, 1], [], []>} : vector<16x16xbf16>, vector<16x32xbf16>, vector<16x32xf32> -> vector<16x32xf32>
    %159 = arith.truncf %158 : vector<16x32xf32> to vector<16x32xbf16>
    %160 = vector.extract_strided_slice %13 {offsets = [16, 96], sizes = [16, 32], strides = [1, 1]} : vector<32x128xbf16> to vector<16x32xbf16>
    %161 = vector.extract_strided_slice %99 {offsets = [96, 0], sizes = [32, 16], strides = [1, 1]} : vector<128x16xbf16> to vector<32x16xbf16>
    %cst_41 = arith.constant dense<0.000000e+00> : vector<16x16xf32>
    %162 = tpu.matmul %160, %161, %cst_41 {dimension_numbers = #tpu.dot_dimension_numbers<[1], [0], [0], [1], [0, 0, 1, 1], [], []>} : vector<16x32xbf16>, vector<32x16xbf16>, vector<16x16xf32> -> vector<16x16xf32>
    %163 = vector.broadcast %102 : vector<1x16xf32> to vector<16x16xf32>
    %164 = arith.addf %162, %163 : vector<16x16xf32>
    %cst_42 = arith.constant dense<0xFF800000> : vector<16xf32>
    %165 = vector.multi_reduction <maximumf>, %164, %cst_42 [1] : vector<16x16xf32> to vector<16xf32>
    %166 = vector.shape_cast %165 : vector<16xf32> to vector<16x1xf32>
    %167 = vector.broadcast %166 : vector<16x1xf32> to vector<16x16xf32>
    %168 = arith.subf %164, %167 : vector<16x16xf32>
    %169 = math.exp %168 : vector<16x16xf32>
    %cst_43 = arith.constant dense<0.000000e+00> : vector<16xf32>
    %170 = vector.multi_reduction <add>, %169, %cst_43 [1] : vector<16x16xf32> to vector<16xf32>
    %171 = vector.shape_cast %170 : vector<16xf32> to vector<16x1xf32>
    %172 = tpu.reciprocal %171 {approx = true} : vector<16x1xf32> -> vector<16x1xf32>
    %173 = vector.broadcast %172 : vector<16x1xf32> to vector<16x16xf32>
    %174 = arith.mulf %169, %173 : vector<16x16xf32>
    %175 = arith.truncf %174 : vector<16x16xf32> to vector<16x16xbf16>
    %176 = vector.extract_strided_slice %100 {offsets = [0, 96], sizes = [16, 32], strides = [1, 1]} : vector<16x128xbf16> to vector<16x32xbf16>
    %cst_44 = arith.constant dense<0.000000e+00> : vector<16x32xf32>
    %177 = tpu.matmul %175, %176, %cst_44 {dimension_numbers = #tpu.dot_dimension_numbers<[1], [0], [0], [1], [0, 0, 1, 1], [], []>} : vector<16x16xbf16>, vector<16x32xbf16>, vector<16x32xf32> -> vector<16x32xf32>
    %178 = arith.truncf %177 : vector<16x32xf32> to vector<16x32xbf16>
    %179 = tpu.concatenate %121, %140, %159, %178 in 1 : vector<16x32xbf16>, vector<16x32xbf16>, vector<16x32xbf16>, vector<16x32xbf16> -> vector<16x128xbf16>
    %180 = tpu.concatenate %97, %179 in 0 : vector<16x128xbf16>, vector<16x128xbf16> -> vector<32x128xbf16>
    %c0_45 = arith.constant 0 : index
    %c0_46 = arith.constant 0 : index
    %c0_47 = arith.constant 0 : index
    %181 = vector.load %arg7[%c0_45, %c0_46, %c0_47] : memref<1x128x128xbf16, #tpu.memory_space<vmem>>, vector<1x128x128xbf16>
    %182 = vector.shape_cast %181 : vector<1x128x128xbf16> to vector<128x128xbf16>
    %cst_48 = arith.constant dense<0.000000e+00> : vector<32x128xf32>
    %183 = tpu.matmul %180, %182, %cst_48 {dimension_numbers = #tpu.dot_dimension_numbers<[1], [0], [0], [1], [0, 0, 1, 1], [], []>} : vector<32x128xbf16>, vector<128x128xbf16>, vector<32x128xf32> -> vector<32x128xf32>
    %c0_49 = arith.constant 0 : index
    %c0_50 = arith.constant 0 : index
    %c0_51 = arith.constant 0 : index
    %184 = vector.load %arg8[%c0_49, %c0_50, %c0_51] : memref<1x1x128xf32, #tpu.memory_space<vmem>>, vector<1x1x128xf32>
    %185 = vector.shape_cast %184 : vector<1x1x128xf32> to vector<1x128xf32>
    %186 = vector.broadcast %185 : vector<1x128xf32> to vector<32x128xf32>
    %187 = arith.addf %183, %186 : vector<32x128xf32>
    %188 = arith.addf %187, %4 : vector<32x128xf32>
    %c0_52 = arith.constant 0 : index
    %c0_53 = arith.constant 0 : index
    %c0_54 = arith.constant 0 : index
    %189 = vector.load %arg9[%c0_52, %c0_53, %c0_54] : memref<1x1x128xf32, #tpu.memory_space<vmem>>, vector<1x1x128xf32>
    %190 = vector.shape_cast %189 : vector<1x1x128xf32> to vector<1x128xf32>
    %c0_55 = arith.constant 0 : index
    %c0_56 = arith.constant 0 : index
    %c0_57 = arith.constant 0 : index
    %191 = vector.load %arg10[%c0_55, %c0_56, %c0_57] : memref<1x1x128xf32, #tpu.memory_space<vmem>>, vector<1x1x128xf32>
    %192 = vector.shape_cast %191 : vector<1x1x128xf32> to vector<1x128xf32>
    %cst_58 = arith.constant dense<0.000000e+00> : vector<32xf32>
    %193 = vector.multi_reduction <add>, %188, %cst_58 [1] : vector<32x128xf32> to vector<32xf32>
    %194 = vector.shape_cast %193 : vector<32xf32> to vector<32x1xf32>
    %cst_59 = arith.constant 1.280000e+02 : f32
    %195 = vector.broadcast %cst_59 : f32 to vector<32x1xf32>
    %196 = arith.divf %194, %195 : vector<32x1xf32>
    %197 = vector.broadcast %196 : vector<32x1xf32> to vector<32x128xf32>
    %198 = arith.subf %188, %197 : vector<32x128xf32>
    %199 = arith.mulf %198, %198 : vector<32x128xf32>
    %cst_60 = arith.constant dense<0.000000e+00> : vector<32xf32>
    %200 = vector.multi_reduction <add>, %199, %cst_60 [1] : vector<32x128xf32> to vector<32xf32>
    %201 = vector.shape_cast %200 : vector<32xf32> to vector<32x1xf32>
    %cst_61 = arith.constant 1.280000e+02 : f32
    %202 = vector.broadcast %cst_61 : f32 to vector<32x1xf32>
    %203 = arith.divf %201, %202 : vector<32x1xf32>
    %204 = vector.broadcast %196 : vector<32x1xf32> to vector<32x128xf32>
    %205 = arith.subf %188, %204 : vector<32x128xf32>
    %cst_62 = arith.constant 9.99999996E-13 : f32
    %206 = vector.broadcast %cst_62 : f32 to vector<32x1xf32>
    %207 = arith.addf %203, %206 : vector<32x1xf32>
    %208 = math.rsqrt %207 : vector<32x1xf32>
    %209 = vector.broadcast %208 : vector<32x1xf32> to vector<32x128xf32>
    %210 = arith.mulf %205, %209 : vector<32x128xf32>
    %211 = vector.broadcast %190 : vector<1x128xf32> to vector<32x128xf32>
    %212 = arith.mulf %210, %211 : vector<32x128xf32>
    %213 = vector.broadcast %192 : vector<1x128xf32> to vector<32x128xf32>
    %214 = arith.addf %212, %213 : vector<32x128xf32>
    %215 = arith.truncf %214 : vector<32x128xf32> to vector<32x128xbf16>
    %c0_63 = arith.constant 0 : index
    %c0_64 = arith.constant 0 : index
    %c0_65 = arith.constant 0 : index
    %216 = vector.load %arg11[%c0_63, %c0_64, %c0_65] : memref<1x128x512xbf16, #tpu.memory_space<vmem>>, vector<1x128x512xbf16>
    %217 = vector.shape_cast %216 : vector<1x128x512xbf16> to vector<128x512xbf16>
    %cst_66 = arith.constant dense<0.000000e+00> : vector<32x512xf32>
    %218 = tpu.matmul %215, %217, %cst_66 {dimension_numbers = #tpu.dot_dimension_numbers<[1], [0], [0], [1], [0, 0, 1, 1], [], []>} : vector<32x128xbf16>, vector<128x512xbf16>, vector<32x512xf32> -> vector<32x512xf32>
    %c0_67 = arith.constant 0 : index
    %c0_68 = arith.constant 0 : index
    %c0_69 = arith.constant 0 : index
    %219 = vector.load %arg12[%c0_67, %c0_68, %c0_69] : memref<1x1x512xf32, #tpu.memory_space<vmem>>, vector<1x1x512xf32>
    %220 = vector.shape_cast %219 : vector<1x1x512xf32> to vector<1x512xf32>
    %221 = vector.broadcast %220 : vector<1x512xf32> to vector<32x512xf32>
    %222 = arith.addf %218, %221 : vector<32x512xf32>
    %cst_70 = arith.constant 5.000000e-01 : f32
    %223 = vector.broadcast %cst_70 : f32 to vector<32x512xf32>
    %224 = arith.mulf %223, %222 : vector<32x512xf32>
    %cst_71 = arith.constant 4.471500e-02 : f32
    %225 = vector.broadcast %cst_71 : f32 to vector<32x512xf32>
    %226 = arith.mulf %225, %222 : vector<32x512xf32>
    %227 = arith.mulf %226, %222 : vector<32x512xf32>
    %228 = arith.mulf %227, %222 : vector<32x512xf32>
    %229 = arith.addf %222, %228 : vector<32x512xf32>
    %cst_72 = arith.constant 0.797884583 : f32
    %230 = vector.broadcast %cst_72 : f32 to vector<32x512xf32>
    %231 = arith.mulf %230, %229 : vector<32x512xf32>
    %232 = math.tanh %231 : vector<32x512xf32>
    %cst_73 = arith.constant 1.000000e+00 : f32
    %233 = vector.broadcast %cst_73 : f32 to vector<32x512xf32>
    %234 = arith.addf %233, %232 : vector<32x512xf32>
    %235 = arith.mulf %224, %234 : vector<32x512xf32>
    %236 = arith.truncf %235 : vector<32x512xf32> to vector<32x512xbf16>
    %c0_74 = arith.constant 0 : index
    %c0_75 = arith.constant 0 : index
    %c0_76 = arith.constant 0 : index
    %237 = vector.load %arg13[%c0_74, %c0_75, %c0_76] : memref<1x512x128xbf16, #tpu.memory_space<vmem>>, vector<1x512x128xbf16>
    %238 = vector.shape_cast %237 : vector<1x512x128xbf16> to vector<512x128xbf16>
    %cst_77 = arith.constant dense<0.000000e+00> : vector<32x128xf32>
    %239 = tpu.matmul %236, %238, %cst_77 {dimension_numbers = #tpu.dot_dimension_numbers<[1], [0], [0], [1], [0, 0, 1, 1], [], []>} : vector<32x512xbf16>, vector<512x128xbf16>, vector<32x128xf32> -> vector<32x128xf32>
    %c0_78 = arith.constant 0 : index
    %c0_79 = arith.constant 0 : index
    %c0_80 = arith.constant 0 : index
    %240 = vector.load %arg14[%c0_78, %c0_79, %c0_80] : memref<1x1x128xf32, #tpu.memory_space<vmem>>, vector<1x1x128xf32>
    %241 = vector.shape_cast %240 : vector<1x1x128xf32> to vector<1x128xf32>
    %242 = vector.broadcast %241 : vector<1x128xf32> to vector<32x128xf32>
    %243 = arith.addf %239, %242 : vector<32x128xf32>
    %244 = arith.addf %243, %214 : vector<32x128xf32>
    %c0_81 = arith.constant 0 : index
    %c0_82 = arith.constant 0 : index
    %c0_83 = arith.constant 0 : index
    %245 = vector.load %arg15[%c0_81, %c0_82, %c0_83] : memref<1x1x128xf32, #tpu.memory_space<vmem>>, vector<1x1x128xf32>
    %246 = vector.shape_cast %245 : vector<1x1x128xf32> to vector<1x128xf32>
    %c0_84 = arith.constant 0 : index
    %c0_85 = arith.constant 0 : index
    %c0_86 = arith.constant 0 : index
    %247 = vector.load %arg16[%c0_84, %c0_85, %c0_86] : memref<1x1x128xf32, #tpu.memory_space<vmem>>, vector<1x1x128xf32>
    %248 = vector.shape_cast %247 : vector<1x1x128xf32> to vector<1x128xf32>
    %cst_87 = arith.constant dense<0.000000e+00> : vector<32xf32>
    %249 = vector.multi_reduction <add>, %244, %cst_87 [1] : vector<32x128xf32> to vector<32xf32>
    %250 = vector.shape_cast %249 : vector<32xf32> to vector<32x1xf32>
    %cst_88 = arith.constant 1.280000e+02 : f32
    %251 = vector.broadcast %cst_88 : f32 to vector<32x1xf32>
    %252 = arith.divf %250, %251 : vector<32x1xf32>
    %253 = vector.broadcast %252 : vector<32x1xf32> to vector<32x128xf32>
    %254 = arith.subf %244, %253 : vector<32x128xf32>
    %255 = arith.mulf %254, %254 : vector<32x128xf32>
    %cst_89 = arith.constant dense<0.000000e+00> : vector<32xf32>
    %256 = vector.multi_reduction <add>, %255, %cst_89 [1] : vector<32x128xf32> to vector<32xf32>
    %257 = vector.shape_cast %256 : vector<32xf32> to vector<32x1xf32>
    %cst_90 = arith.constant 1.280000e+02 : f32
    %258 = vector.broadcast %cst_90 : f32 to vector<32x1xf32>
    %259 = arith.divf %257, %258 : vector<32x1xf32>
    %260 = vector.broadcast %252 : vector<32x1xf32> to vector<32x128xf32>
    %261 = arith.subf %244, %260 : vector<32x128xf32>
    %cst_91 = arith.constant 9.99999996E-13 : f32
    %262 = vector.broadcast %cst_91 : f32 to vector<32x1xf32>
    %263 = arith.addf %259, %262 : vector<32x1xf32>
    %264 = math.rsqrt %263 : vector<32x1xf32>
    %265 = vector.broadcast %264 : vector<32x1xf32> to vector<32x128xf32>
    %266 = arith.mulf %261, %265 : vector<32x128xf32>
    %267 = vector.broadcast %246 : vector<1x128xf32> to vector<32x128xf32>
    %268 = arith.mulf %266, %267 : vector<32x128xf32>
    %269 = vector.broadcast %248 : vector<1x128xf32> to vector<32x128xf32>
    %270 = arith.addf %268, %269 : vector<32x128xf32>
    %271 = arith.truncf %270 : vector<32x128xf32> to vector<32x128xbf16>
    %c0_92 = arith.constant 0 : index
    %c0_93 = arith.constant 0 : index
    %272 = vector.load %arg22[%c0_92, %c0_93] : memref<32x128xbf16, #tpu.memory_space<vmem>>, vector<32x128xbf16>
    tpu.vector_store %arg22[%c0_92, %c0_93], %271 {strides = array<i32>} : memref<32x128xbf16, #tpu.memory_space<vmem>>, vector<32x128xbf16>,
    %c1_i32 = arith.constant 1 : i32
    %273 = arith.cmpi eq, %arg0, %c1_i32 : i32
    %274 = arith.extui %273 : i1 to i32
    %c0_i32_94 = arith.constant 0 : i32
    %275 = arith.cmpi ne, %274, %c0_i32_94 : i32
    scf.if %275 {
      %276 = vector.extract_strided_slice %270 {offsets = [0, 0], sizes = [1, 128], strides = [1, 1]} : vector<32x128xf32> to vector<1x128xf32>
      %277 = vector.extract_strided_slice %270 {offsets = [16, 0], sizes = [1, 128], strides = [1, 1]} : vector<32x128xf32> to vector<1x128xf32>
      %278 = tpu.concatenate %276, %277 in 0 : vector<1x128xf32>, vector<1x128xf32> -> vector<2x128xf32>
      %279 = arith.truncf %278 : vector<2x128xf32> to vector<2x128xbf16>
      %c0_95 = arith.constant 0 : index
      %c0_96 = arith.constant 0 : index
      %280 = vector.load %arg17[%c0_95, %c0_96] : memref<128x128xbf16, #tpu.memory_space<vmem>>, vector<128x128xbf16>
      %cst_97 = arith.constant dense<0.000000e+00> : vector<2x128xf32>
      %281 = tpu.matmul %279, %280, %cst_97 {dimension_numbers = #tpu.dot_dimension_numbers<[1], [0], [0], [1], [0, 0, 1, 1], [], []>} : vector<2x128xbf16>, vector<128x128xbf16>, vector<2x128xf32> -> vector<2x128xf32>
      %c0_98 = arith.constant 0 : index
      %c0_99 = arith.constant 0 : index
      %282 = vector.load %arg18[%c0_98, %c0_99] : memref<1x128xf32, #tpu.memory_space<vmem>>, vector<1x128xf32>
      %283 = vector.broadcast %282 : vector<1x128xf32> to vector<2x128xf32>
      %284 = arith.addf %281, %283 : vector<2x128xf32>
      %cst_100 = arith.constant 0.000000e+00 : f32
      %285 = vector.broadcast %cst_100 : f32 to vector<2x128xf32>
      %286 = arith.maximumf %284, %285 : vector<2x128xf32>
      %287 = arith.truncf %286 : vector<2x128xf32> to vector<2x128xbf16>
      %c0_101 = arith.constant 0 : index
      %c0_102 = arith.constant 0 : index
      %288 = vector.load %arg19[%c0_101, %c0_102] : memref<128x128xbf16, #tpu.memory_space<vmem>>, vector<128x128xbf16>
      %cst_103 = arith.constant dense<0.000000e+00> : vector<2x128xf32>
      %289 = tpu.matmul %287, %288, %cst_103 {dimension_numbers = #tpu.dot_dimension_numbers<[1], [0], [0], [1], [0, 0, 1, 1], [], []>} : vector<2x128xbf16>, vector<128x128xbf16>, vector<2x128xf32> -> vector<2x128xf32>
      %c0_104 = arith.constant 0 : index
      %c0_105 = arith.constant 0 : index
      %290 = vector.load %arg20[%c0_104, %c0_105] : memref<1x128xf32, #tpu.memory_space<vmem>>, vector<1x128xf32>
      %291 = vector.broadcast %290 : vector<1x128xf32> to vector<2x128xf32>
      %292 = arith.addf %289, %291 : vector<2x128xf32>
      %c0_106 = arith.constant 0 : index
      %c0_107 = arith.constant 0 : index
      %293 = vector.load %arg21[%c0_106, %c0_107] : memref<2x128xf32, #tpu.memory_space<vmem>>, vector<2x128xf32>
      tpu.vector_store %arg21[%c0_106, %c0_107], %292 {strides = array<i32>} : memref<2x128xf32, #tpu.memory_space<vmem>>, vector<2x128xf32>,
    } else {
    }
    return
  }
  func.func @transform_0(%arg0: i32) -> (i32, i32) {
    %c0_i32 = arith.constant 0 : i32
    %c0_i32_0 = arith.constant 0 : i32
    %c0_i32_1 = arith.constant 0 : i32
    return %c0_i32, %c0_i32_0 : i32, i32
  }
  func.func @transform_1(%arg0: i32) -> (i32, i32) {
    %c0_i32 = arith.constant 0 : i32
    %c0_i32_0 = arith.constant 0 : i32
    %c0_i32_1 = arith.constant 0 : i32
    return %c0_i32, %c0_i32_0 : i32, i32
  }
  func.func @transform_2(%arg0: i32) -> (i32, i32) {
    %c0_i32 = arith.constant 0 : i32
    %c0_i32_0 = arith.constant 0 : i32
    %c0_i32_1 = arith.constant 0 : i32
    return %c0_i32, %c0_i32_0 : i32, i32
  }
  func.func @transform_3(%arg0: i32) -> (i32, i32, i32) {
    %c0_i32 = arith.constant 0 : i32
    %c0_i32_0 = arith.constant 0 : i32
    %c0_i32_1 = arith.constant 0 : i32
    %c0_i32_2 = arith.constant 0 : i32
    return %c0_i32, %c0_i32_0, %c0_i32_1 : i32, i32, i32
  }
  func.func @transform_4(%arg0: i32) -> (i32, i32, i32) {
    %c0_i32 = arith.constant 0 : i32
    %c0_i32_0 = arith.constant 0 : i32
    %c0_i32_1 = arith.constant 0 : i32
    return %arg0, %c0_i32, %c0_i32_0 : i32, i32, i32
  }
  func.func @transform_5(%arg0: i32) -> (i32, i32, i32) {
    %c0_i32 = arith.constant 0 : i32
    %c0_i32_0 = arith.constant 0 : i32
    %c0_i32_1 = arith.constant 0 : i32
    return %arg0, %c0_i32, %c0_i32_0 : i32, i32, i32
  }
  func.func @transform_6(%arg0: i32) -> (i32, i32, i32) {
    %c0_i32 = arith.constant 0 : i32
    %c0_i32_0 = arith.constant 0 : i32
    %c0_i32_1 = arith.constant 0 : i32
    return %arg0, %c0_i32, %c0_i32_0 : i32, i32, i32
  }
  func.func @transform_7(%arg0: i32) -> (i32, i32, i32) {
    %c0_i32 = arith.constant 0 : i32
    %c0_i32_0 = arith.constant 0 : i32
    %c0_i32_1 = arith.constant 0 : i32
    return %arg0, %c0_i32, %c0_i32_0 : i32, i32, i32
  }
  func.func @transform_8(%arg0: i32) -> (i32, i32, i32) {
    %c0_i32 = arith.constant 0 : i32
    %c0_i32_0 = arith.constant 0 : i32
    %c0_i32_1 = arith.constant 0 : i32
    return %arg0, %c0_i32, %c0_i32_0 : i32, i32, i32
  }
  func.func @transform_9(%arg0: i32) -> (i32, i32, i32) {
    %c0_i32 = arith.constant 0 : i32
    %c0_i32_0 = arith.constant 0 : i32
    %c0_i32_1 = arith.constant 0 : i32
    return %arg0, %c0_i32, %c0_i32_0 : i32, i32, i32
  }
  func.func @transform_10(%arg0: i32) -> (i32, i32, i32) {
    %c0_i32 = arith.constant 0 : i32
    %c0_i32_0 = arith.constant 0 : i32
    %c0_i32_1 = arith.constant 0 : i32
    return %arg0, %c0_i32, %c0_i32_0 : i32, i32, i32
  }
  func.func @transform_11(%arg0: i32) -> (i32, i32, i32) {
    %c0_i32 = arith.constant 0 : i32
    %c0_i32_0 = arith.constant 0 : i32
    %c0_i32_1 = arith.constant 0 : i32
    return %arg0, %c0_i32, %c0_i32_0 : i32, i32, i32
  }
  func.func @transform_12(%arg0: i32) -> (i32, i32, i32) {
    %c0_i32 = arith.constant 0 : i32
    %c0_i32_0 = arith.constant 0 : i32
    %c0_i32_1 = arith.constant 0 : i32
    return %arg0, %c0_i32, %c0_i32_0 : i32, i32, i32
  }
  func.func @transform_13(%arg0: i32) -> (i32, i32, i32) {
    %c0_i32 = arith.constant 0 : i32
    %c0_i32_0 = arith.constant 0 : i32
    %c0_i32_1 = arith.constant 0 : i32
    return %arg0, %c0_i32, %c0_i32_0 : i32, i32, i32
  }
  func.func @transform_14(%arg0: i32) -> (i32, i32, i32) {
    %c0_i32 = arith.constant 0 : i32
    %c0_i32_0 = arith.constant 0 : i32
    %c0_i32_1 = arith.constant 0 : i32
    return %arg0, %c0_i32, %c0_i32_0 : i32, i32, i32
  }
  func.func @transform_15(%arg0: i32) -> (i32, i32, i32) {
    %c0_i32 = arith.constant 0 : i32
    %c0_i32_0 = arith.constant 0 : i32
    %c0_i32_1 = arith.constant 0 : i32
    return %arg0, %c0_i32, %c0_i32_0 : i32, i32, i32
  }
  func.func @transform_16(%arg0: i32) -> (i32, i32) {
    %c0_i32 = arith.constant 0 : i32
    %c0_i32_0 = arith.constant 0 : i32
    %c0_i32_1 = arith.constant 0 : i32
    return %c0_i32, %c0_i32_0 : i32, i32
  }
  func.func @transform_17(%arg0: i32) -> (i32, i32) {
    %c0_i32 = arith.constant 0 : i32
    %c0_i32_0 = arith.constant 0 : i32
    %c0_i32_1 = arith.constant 0 : i32
    return %c0_i32, %c0_i32_0 : i32, i32
  }
  func.func @transform_18(%arg0: i32) -> (i32, i32) {
    %c0_i32 = arith.constant 0 : i32
    %c0_i32_0 = arith.constant 0 : i32
    %c0_i32_1 = arith.constant 0 : i32
    return %c0_i32, %c0_i32_0 : i32, i32
  }
  func.func @transform_19(%arg0: i32) -> (i32, i32) {
    %c0_i32 = arith.constant 0 : i32
    %c0_i32_0 = arith.constant 0 : i32
    %c0_i32_1 = arith.constant 0 : i32
    return %c0_i32, %c0_i32_0 : i32, i32
  }
  func.func @transform_20(%arg0: i32) -> (i32, i32) {
    %c0_i32 = arith.constant 0 : i32
    %c0_i32_0 = arith.constant 0 : i32
    %c0_i32_1 = arith.constant 0 : i32
    return %c0_i32, %c0_i32_0 : i32, i32
  }
}

</mosaic_0001>

<llo_original>
// kernel: distilbert_class_forward.1
$region0: #{distilbert_class_forward.1}
  #allocation0 [shape = 'u32[]', space=smem, size = 0x4, offset = 0x4, fixed_abs, tag = 'smem constant byte address 0x4 - core index']
  #allocation1 [shape = 'u32[144,128]{1,0:T(1,128)}', space=vmem, size = 0x12000, scoped, tag = 'internal scratch']
  #allocation2 [shape = 'bf16[32,128]{1,0:T(16,128)(2,1)}', space=vmem, size = 0x2000, scoped, tag = 'scratch operand']
  %s0 = inlined_call_operand.vmem [shape: bf16[32,128], index: 0, kind: input, shape index: {}]
  %s1 = inlined_call_operand.vmem [shape: f32[1,128], index: 1, kind: input, shape index: {}]
  %s2 = inlined_call_operand.vmem [shape: f32[1,128], index: 2, kind: input, shape index: {}, may-alias: {2,17,19}]
  %s3 = inlined_call_operand.vmem [shape: f32[2,1,16], index: 3, kind: input, shape index: {}]
  %s4 = inlined_call_operand.vmem [shape: bf16[2,128,384], index: 4, kind: input, shape index: {}]
  %s5 = inlined_call_operand.vmem [shape: f32[2,1,384], index: 5, kind: input, shape index: {}]
  %s6 = inlined_call_operand.vmem [shape: bf16[2,128,128], index: 6, kind: input, shape index: {}]
  %s7 = inlined_call_operand.vmem [shape: f32[2,1,128], index: 7, kind: input, shape index: {}, may-alias: {7,9,13,15}]
  %s8 = inlined_call_operand.vmem [shape: f32[2,1,128], index: 8, kind: input, shape index: {}, may-alias: {8,14}]
  %s9 = inlined_call_operand.vmem [shape: f32[2,1,128], index: 9, kind: input, shape index: {}, may-alias: {7,9,13,15}]
  %s10 = inlined_call_operand.vmem [shape: bf16[2,128,512], index: 10, kind: input, shape index: {}]
  %s11 = inlined_call_operand.vmem [shape: f32[2,1,512], index: 11, kind: input, shape index: {}]
  %s12 = inlined_call_operand.vmem [shape: bf16[2,512,128], index: 12, kind: input, shape index: {}]
  %s13 = inlined_call_operand.vmem [shape: f32[2,1,128], index: 13, kind: input, shape index: {}, may-alias: {7,9,13,15}]
  %s14 = inlined_call_operand.vmem [shape: f32[2,1,128], index: 14, kind: input, shape index: {}, may-alias: {8,14}]
  %s15 = inlined_call_operand.vmem [shape: f32[2,1,128], index: 15, kind: input, shape index: {}, may-alias: {7,9,13,15}]
  %s16 = inlined_call_operand.vmem [shape: bf16[128,128], index: 16, kind: input, shape index: {}]
  %s17 = inlined_call_operand.vmem [shape: f32[1,128], index: 17, kind: input, shape index: {}, may-alias: {2,17,19}]
  %s18 = inlined_call_operand.vmem [shape: bf16[128,128], index: 18, kind: input, shape index: {}]
  %s19 = inlined_call_operand.vmem [shape: f32[1,128], index: 19, kind: input, shape index: {}, may-alias: {2,17,19}]
  %s20 = inlined_call_operand.hbm [shape: f32[2,128], index: 20, kind: output, shape index: {}]
  %s21 = sld [smem:[#allocation0]]
  $region121: #{distilbert_class_forward.1} parent=0
    _
  %s23 = ssub.s32 1, %s21
  %s24 = scalar_select 0, %s23, %s21
  $region1: #{distilbert_class_forward.1} parent=0
    #allocation3 [shape = 'u8[1024]{0}', space=vmem, size = 0x400, scoped, tag = 'output window, operand 0, single buffered']
    #allocation4 [shape = 's32[2]{0}', space=sflag, size = 0x8, scoped, tag = 'scoped memory for distilbert_class_forward.1']
    %25 = vsyncpa [#allocation4], 0
    loop: start=0, step=1, limit=4
    $region2: #{distilbert_class_forward.1} parent=1 // loop_pre_header
      _
    $region3: #{distilbert_class_forward.1} parent=1 // loop_header
      %s27 = sphi 0, %s31
      %p28 = scmp.ge.s32.totalorder %s27, 4
      %s35 = sphi 0, %s35
      %s37 = sphi 0, %s35
      %s38 = sphi 0, %s37
      %s52 = sphi 0, %s38
      %s56 = sphi 0, %s56
      %s58 = sphi 0, %s56
      %s59 = sphi 0, %s58
      %s73 = sphi 0, %s59
      %s77 = sphi 0, %s77
      %s79 = sphi 0, %s77
      %s80 = sphi 0, %s79
      %s94 = sphi 0, %s80
      %s98 = sphi 0, %s98
      %s100 = sphi 0, %s98
      %s101 = sphi 0, %s100
      %s115 = sphi 0, %s101
      %s121 = sphi 0, %s123
      %s124 = sphi 0, %s121
      %s125 = sphi 0, %s124
      %s141 = sphi 0, %s125
      %s147 = sphi 0, %s149
      %s150 = sphi 0, %s147
      %s151 = sphi 0, %s150
      %s167 = sphi 0, %s151
      %s173 = sphi 0, %s175
      %s176 = sphi 0, %s173
      %s177 = sphi 0, %s176
      %s193 = sphi 0, %s177
      %s199 = sphi 0, %s201
      %s202 = sphi 0, %s199
      %s203 = sphi 0, %s202
      %s219 = sphi 0, %s203
      %s225 = sphi 0, %s227
      %s228 = sphi 0, %s225
      %s229 = sphi 0, %s228
      %s245 = sphi 0, %s229
      %s251 = sphi 0, %s253
      %s254 = sphi 0, %s251
      %s255 = sphi 0, %s254
      %s271 = sphi 0, %s255
      %s277 = sphi 0, %s279
      %s280 = sphi 0, %s277
      %s281 = sphi 0, %s280
      %s297 = sphi 0, %s281
      %s303 = sphi 0, %s305
      %s306 = sphi 0, %s303
      %s307 = sphi 0, %s306
      %s323 = sphi 0, %s307
      %s329 = sphi 0, %s331
      %s332 = sphi 0, %s329
      %s333 = sphi 0, %s332
      %s349 = sphi 0, %s333
      %s355 = sphi 0, %s357
      %s358 = sphi 0, %s355
      %s359 = sphi 0, %s358
      %s375 = sphi 0, %s359
      %s381 = sphi 0, %s383
      %s384 = sphi 0, %s381
      %s385 = sphi 0, %s384
      %s401 = sphi 0, %s385
      %s407 = sphi 0, %s409
      %s410 = sphi 0, %s407
      %s411 = sphi 0, %s410
      %s427 = sphi 0, %s411
      %s431 = sphi 0, %s431
      %s433 = sphi 0, %s431
      %s434 = sphi 0, %s433
      %s448 = sphi 0, %s434
      %s452 = sphi 0, %s452
      %s454 = sphi 0, %s452
      %s455 = sphi 0, %s454
      %s469 = sphi 0, %s455
      %s473 = sphi 0, %s473
      %s475 = sphi 0, %s473
      %s476 = sphi 0, %s475
      %s490 = sphi 0, %s476
      %s494 = sphi 0, %s494
      %s496 = sphi 0, %s494
      %s497 = sphi 0, %s496
      %s511 = sphi 0, %s497
      %s515 = sphi 0, %s515
      %s517 = sphi 0, %s515
      %s518 = sphi 0, %s517
      %s532 = sphi 0, %s518
    $region4: #{distilbert_class_forward.1} parent=1 // loop_header_branch
      %30 = sbr.rel (%p28) target = $region8
    $region5: #{distilbert_class_forward.1} parent=1 // loop_body
      %s32 = ssub.s32 %s27, 1
      %s33 = ssub.s32 %s27, 2
      %s34 = sadd.s32 %s27, 1
      %s36 = sadd.s32 %s35, 1
      %p39 = scmp.eq.s32.totalorder %s27, 1
      %p40 = scmp.ne.s32.totalorder %s35, %s37
      %p41 = scmp.eq.s32.totalorder %s27, 0
      %p42 = por %p40, %p41
      %p43 = scmp.ne.s32.totalorder %s35, %s37
      %p44 = scmp.eq.s32.totalorder %s32, 1
      %p45 = por %p43, %p44
      %p46 = scmp.ne.s32.totalorder %s37, %s38
      %p47 = scmp.eq.s32.totalorder %s32, 0
      %p48 = por %p46, %p47
      %p49 = scmp.ne.s32.totalorder %s37, %s38
      %p50 = scmp.eq.s32.totalorder %s33, 1
      %p51 = por %p49, %p50
      %p53 = scmp.ne.s32.totalorder %s38, %s52
      %p54 = scmp.eq.s32.totalorder %s33, 0
      %p55 = por %p53, %p54
      %s57 = sadd.s32 %s56, 1
      %p60 = scmp.eq.s32.totalorder %s27, 1
      %p61 = scmp.ne.s32.totalorder %s56, %s58
      %p62 = scmp.eq.s32.totalorder %s27, 0
      %p63 = por %p61, %p62
      %p64 = scmp.ne.s32.totalorder %s56, %s58
      %p65 = scmp.eq.s32.totalorder %s32, 1
      %p66 = por %p64, %p65
      %p67 = scmp.ne.s32.totalorder %s58, %s59
      %p68 = scmp.eq.s32.totalorder %s32, 0
      %p69 = por %p67, %p68
      %p70 = scmp.ne.s32.totalorder %s58, %s59
      %p71 = scmp.eq.s32.totalorder %s33, 1
      %p72 = por %p70, %p71
      %p74 = scmp.ne.s32.totalorder %s59, %s73
      %p75 = scmp.eq.s32.totalorder %s33, 0
      %p76 = por %p74, %p75
      %s78 = sadd.s32 %s77, 1
      %p81 = scmp.eq.s32.totalorder %s27, 1
      %p82 = scmp.ne.s32.totalorder %s77, %s79
      %p83 = scmp.eq.s32.totalorder %s27, 0
      %p84 = por %p82, %p83
      %p85 = scmp.ne.s32.totalorder %s77, %s79
      %p86 = scmp.eq.s32.totalorder %s32, 1
      %p87 = por %p85, %p86
      %p88 = scmp.ne.s32.totalorder %s79, %s80
      %p89 = scmp.eq.s32.totalorder %s32, 0
      %p90 = por %p88, %p89
      %p91 = scmp.ne.s32.totalorder %s79, %s80
      %p92 = scmp.eq.s32.totalorder %s33, 1
      %p93 = por %p91, %p92
      %p95 = scmp.ne.s32.totalorder %s80, %s94
      %p96 = scmp.eq.s32.totalorder %s33, 0
      %p97 = por %p95, %p96
      %s99 = sadd.s32 %s98, 1
      %p102 = scmp.eq.s32.totalorder %s27, 1
      %p103 = scmp.ne.s32.totalorder %s98, %s100
      %p104 = scmp.eq.s32.totalorder %s27, 0
      %p105 = por %p103, %p104
      %p106 = scmp.ne.s32.totalorder %s98, %s100
      %p107 = scmp.eq.s32.totalorder %s32, 1
      %p108 = por %p106, %p107
      %p109 = scmp.ne.s32.totalorder %s100, %s101
      %p110 = scmp.eq.s32.totalorder %s32, 0
      %p111 = por %p109, %p110
      %p112 = scmp.ne.s32.totalorder %s100, %s101
      %p113 = scmp.eq.s32.totalorder %s33, 1
      %p114 = por %p112, %p113
      %p116 = scmp.ne.s32.totalorder %s101, %s115
      %p117 = scmp.eq.s32.totalorder %s33, 0
      %p118 = por %p116, %p117
      %s119 = ssub.s32 %s27, %s34
      %p120 = scmp.eq.s32.totalorder %s119, 0
      %s122 = sadd.s32 %s121, 1
      %s123 = scalar_select %p120, %s121, %s122
      %p126 = pneg %p120
      %p127 = scmp.eq.s32.totalorder %s27, 1
      %p128 = por %p126, %p127
      %p129 = scmp.ne.s32.totalorder %s121, %s124
      %p130 = scmp.eq.s32.totalorder %s27, 0
      %p131 = por %p129, %p130
      %p132 = scmp.ne.s32.totalorder %s121, %s124
      %p133 = scmp.eq.s32.totalorder %s32, 1
      %p134 = por %p132, %p133
      %p135 = scmp.ne.s32.totalorder %s124, %s125
      %p136 = scmp.eq.s32.totalorder %s32, 0
      %p137 = por %p135, %p136
      %p138 = scmp.ne.s32.totalorder %s124, %s125
      %p139 = scmp.eq.s32.totalorder %s33, 1
      %p140 = por %p138, %p139
      %p142 = scmp.ne.s32.totalorder %s125, %s141
      %p143 = scmp.eq.s32.totalorder %s33, 0
      %p144 = por %p142, %p143
      %s145 = ssub.s32 %s27, %s34
      %p146 = scmp.eq.s32.totalorder %s145, 0
      %s148 = sadd.s32 %s147, 1
      %s149 = scalar_select %p146, %s147, %s148
      %p152 = pneg %p146
      %p153 = scmp.eq.s32.totalorder %s27, 1
      %p154 = por %p152, %p153
      %p155 = scmp.ne.s32.totalorder %s147, %s150
      %p156 = scmp.eq.s32.totalorder %s27, 0
      %p157 = por %p155, %p156
      %p158 = scmp.ne.s32.totalorder %s147, %s150
      %p159 = scmp.eq.s32.totalorder %s32, 1
      %p160 = por %p158, %p159
      %p161 = scmp.ne.s32.totalorder %s150, %s151
      %p162 = scmp.eq.s32.totalorder %s32, 0
      %p163 = por %p161, %p162
      %p164 = scmp.ne.s32.totalorder %s150, %s151
      %p165 = scmp.eq.s32.totalorder %s33, 1
      %p166 = por %p164, %p165
      %p168 = scmp.ne.s32.totalorder %s151, %s167
      %p169 = scmp.eq.s32.totalorder %s33, 0
      %p170 = por %p168, %p169
      %s171 = ssub.s32 %s27, %s34
      %p172 = scmp.eq.s32.totalorder %s171, 0
      %s174 = sadd.s32 %s173, 1
      %s175 = scalar_select %p172, %s173, %s174
      %p178 = pneg %p172
      %p179 = scmp.eq.s32.totalorder %s27, 1
      %p180 = por %p178, %p179
      %p181 = scmp.ne.s32.totalorder %s173, %s176
      %p182 = scmp.eq.s32.totalorder %s27, 0
      %p183 = por %p181, %p182
      %p184 = scmp.ne.s32.totalorder %s173, %s176
      %p185 = scmp.eq.s32.totalorder %s32, 1
      %p186 = por %p184, %p185
      %p187 = scmp.ne.s32.totalorder %s176, %s177
      %p188 = scmp.eq.s32.totalorder %s32, 0
      %p189 = por %p187, %p188
      %p190 = scmp.ne.s32.totalorder %s176, %s177
      %p191 = scmp.eq.s32.totalorder %s33, 1
      %p192 = por %p190, %p191
      %p194 = scmp.ne.s32.totalorder %s177, %s193
      %p195 = scmp.eq.s32.totalorder %s33, 0
      %p196 = por %p194, %p195
      %s197 = ssub.s32 %s27, %s34
      %p198 = scmp.eq.s32.totalorder %s197, 0
      %s200 = sadd.s32 %s199, 1
      %s201 = scalar_select %p198, %s199, %s200
      %p204 = pneg %p198
      %p205 = scmp.eq.s32.totalorder %s27, 1
      %p206 = por %p204, %p205
      %p207 = scmp.ne.s32.totalorder %s199, %s202
      %p208 = scmp.eq.s32.totalorder %s27, 0
      %p209 = por %p207, %p208
      %p210 = scmp.ne.s32.totalorder %s199, %s202
      %p211 = scmp.eq.s32.totalorder %s32, 1
      %p212 = por %p210, %p211
      %p213 = scmp.ne.s32.totalorder %s202, %s203
      %p214 = scmp.eq.s32.totalorder %s32, 0
      %p215 = por %p213, %p214
      %p216 = scmp.ne.s32.totalorder %s202, %s203
      %p217 = scmp.eq.s32.totalorder %s33, 1
      %p218 = por %p216, %p217
      %p220 = scmp.ne.s32.totalorder %s203, %s219
      %p221 = scmp.eq.s32.totalorder %s33, 0
      %p222 = por %p220, %p221
      %s223 = ssub.s32 %s27, %s34
      %p224 = scmp.eq.s32.totalorder %s223, 0
      %s226 = sadd.s32 %s225, 1
      %s227 = scalar_select %p224, %s225, %s226
      %p230 = pneg %p224
      %p231 = scmp.eq.s32.totalorder %s27, 1
      %p232 = por %p230, %p231
      %p233 = scmp.ne.s32.totalorder %s225, %s228
      %p234 = scmp.eq.s32.totalorder %s27, 0
      %p235 = por %p233, %p234
      %p236 = scmp.ne.s32.totalorder %s225, %s228
      %p237 = scmp.eq.s32.totalorder %s32, 1
      %p238 = por %p236, %p237
      %p239 = scmp.ne.s32.totalorder %s228, %s229
      %p240 = scmp.eq.s32.totalorder %s32, 0
      %p241 = por %p239, %p240
      %p242 = scmp.ne.s32.totalorder %s228, %s229
      %p243 = scmp.eq.s32.totalorder %s33, 1
      %p244 = por %p242, %p243
      %p246 = scmp.ne.s32.totalorder %s229, %s245
      %p247 = scmp.eq.s32.totalorder %s33, 0
      %p248 = por %p246, %p247
      %s249 = ssub.s32 %s27, %s34
      %p250 = scmp.eq.s32.totalorder %s249, 0
      %s252 = sadd.s32 %s251, 1
      %s253 = scalar_select %p250, %s251, %s252
      %p256 = pneg %p250
      %p257 = scmp.eq.s32.totalorder %s27, 1
      %p258 = por %p256, %p257
      %p259 = scmp.ne.s32.totalorder %s251, %s254
      %p260 = scmp.eq.s32.totalorder %s27, 0
      %p261 = por %p259, %p260
      %p262 = scmp.ne.s32.totalorder %s251, %s254
      %p263 = scmp.eq.s32.totalorder %s32, 1
      %p264 = por %p262, %p263
      %p265 = scmp.ne.s32.totalorder %s254, %s255
      %p266 = scmp.eq.s32.totalorder %s32, 0
      %p267 = por %p265, %p266
      %p268 = scmp.ne.s32.totalorder %s254, %s255
      %p269 = scmp.eq.s32.totalorder %s33, 1
      %p270 = por %p268, %p269
      %p272 = scmp.ne.s32.totalorder %s255, %s271
      %p273 = scmp.eq.s32.totalorder %s33, 0
      %p274 = por %p272, %p273
      %s275 = ssub.s32 %s27, %s34
      %p276 = scmp.eq.s32.totalorder %s275, 0
      %s278 = sadd.s32 %s277, 1
      %s279 = scalar_select %p276, %s277, %s278
      %p282 = pneg %p276
      %p283 = scmp.eq.s32.totalorder %s27, 1
      %p284 = por %p282, %p283
      %p285 = scmp.ne.s32.totalorder %s277, %s280
      %p286 = scmp.eq.s32.totalorder %s27, 0
      %p287 = por %p285, %p286
      %p288 = scmp.ne.s32.totalorder %s277, %s280
      %p289 = scmp.eq.s32.totalorder %s32, 1
      %p290 = por %p288, %p289
      %p291 = scmp.ne.s32.totalorder %s280, %s281
      %p292 = scmp.eq.s32.totalorder %s32, 0
      %p293 = por %p291, %p292
      %p294 = scmp.ne.s32.totalorder %s280, %s281
      %p295 = scmp.eq.s32.totalorder %s33, 1
      %p296 = por %p294, %p295
      %p298 = scmp.ne.s32.totalorder %s281, %s297
      %p299 = scmp.eq.s32.totalorder %s33, 0
      %p300 = por %p298, %p299
      %s301 = ssub.s32 %s27, %s34
      %p302 = scmp.eq.s32.totalorder %s301, 0
      %s304 = sadd.s32 %s303, 1
      %s305 = scalar_select %p302, %s303, %s304
      %p308 = pneg %p302
      %p309 = scmp.eq.s32.totalorder %s27, 1
      %p310 = por %p308, %p309
      %p311 = scmp.ne.s32.totalorder %s303, %s306
      %p312 = scmp.eq.s32.totalorder %s27, 0
      %p313 = por %p311, %p312
      %p314 = scmp.ne.s32.totalorder %s303, %s306
      %p315 = scmp.eq.s32.totalorder %s32, 1
      %p316 = por %p314, %p315
      %p317 = scmp.ne.s32.totalorder %s306, %s307
      %p318 = scmp.eq.s32.totalorder %s32, 0
      %p319 = por %p317, %p318
      %p320 = scmp.ne.s32.totalorder %s306, %s307
      %p321 = scmp.eq.s32.totalorder %s33, 1
      %p322 = por %p320, %p321
      %p324 = scmp.ne.s32.totalorder %s307, %s323
      %p325 = scmp.eq.s32.totalorder %s33, 0
      %p326 = por %p324, %p325
      %s327 = ssub.s32 %s27, %s34
      %p328 = scmp.eq.s32.totalorder %s327, 0
      %s330 = sadd.s32 %s329, 1
      %s331 = scalar_select %p328, %s329, %s330
      %p334 = pneg %p328
      %p335 = scmp.eq.s32.totalorder %s27, 1
      %p336 = por %p334, %p335
      %p337 = scmp.ne.s32.totalorder %s329, %s332
      %p338 = scmp.eq.s32.totalorder %s27, 0
      %p339 = por %p337, %p338
      %p340 = scmp.ne.s32.totalorder %s329, %s332
      %p341 = scmp.eq.s32.totalorder %s32, 1
      %p342 = por %p340, %p341
      %p343 = scmp.ne.s32.totalorder %s332, %s333
      %p344 = scmp.eq.s32.totalorder %s32, 0
      %p345 = por %p343, %p344
      %p346 = scmp.ne.s32.totalorder %s332, %s333
      %p347 = scmp.eq.s32.totalorder %s33, 1
      %p348 = por %p346, %p347
      %p350 = scmp.ne.s32.totalorder %s333, %s349
      %p351 = scmp.eq.s32.totalorder %s33, 0
      %p352 = por %p350, %p351
      %s353 = ssub.s32 %s27, %s34
      %p354 = scmp.eq.s32.totalorder %s353, 0
      %s356 = sadd.s32 %s355, 1
      %s357 = scalar_select %p354, %s355, %s356
      %p360 = pneg %p354
      %p361 = scmp.eq.s32.totalorder %s27, 1
      %p362 = por %p360, %p361
      %p363 = scmp.ne.s32.totalorder %s355, %s358
      %p364 = scmp.eq.s32.totalorder %s27, 0
      %p365 = por %p363, %p364
      %p366 = scmp.ne.s32.totalorder %s355, %s358
      %p367 = scmp.eq.s32.totalorder %s32, 1
      %p368 = por %p366, %p367
      %p369 = scmp.ne.s32.totalorder %s358, %s359
      %p370 = scmp.eq.s32.totalorder %s32, 0
      %p371 = por %p369, %p370
      %p372 = scmp.ne.s32.totalorder %s358, %s359
      %p373 = scmp.eq.s32.totalorder %s33, 1
      %p374 = por %p372, %p373
      %p376 = scmp.ne.s32.totalorder %s359, %s375
      %p377 = scmp.eq.s32.totalorder %s33, 0
      %p378 = por %p376, %p377
      %s379 = ssub.s32 %s27, %s34
      %p380 = scmp.eq.s32.totalorder %s379, 0
      %s382 = sadd.s32 %s381, 1
      %s383 = scalar_select %p380, %s381, %s382
      %p386 = pneg %p380
      %p387 = scmp.eq.s32.totalorder %s27, 1
      %p388 = por %p386, %p387
      %p389 = scmp.ne.s32.totalorder %s381, %s384
      %p390 = scmp.eq.s32.totalorder %s27, 0
      %p391 = por %p389, %p390
      %p392 = scmp.ne.s32.totalorder %s381, %s384
      %p393 = scmp.eq.s32.totalorder %s32, 1
      %p394 = por %p392, %p393
      %p395 = scmp.ne.s32.totalorder %s384, %s385
      %p396 = scmp.eq.s32.totalorder %s32, 0
      %p397 = por %p395, %p396
      %p398 = scmp.ne.s32.totalorder %s384, %s385
      %p399 = scmp.eq.s32.totalorder %s33, 1
      %p400 = por %p398, %p399
      %p402 = scmp.ne.s32.totalorder %s385, %s401
      %p403 = scmp.eq.s32.totalorder %s33, 0
      %p404 = por %p402, %p403
      %s405 = ssub.s32 %s27, %s34
      %p406 = scmp.eq.s32.totalorder %s405, 0
      %s408 = sadd.s32 %s407, 1
      %s409 = scalar_select %p406, %s407, %s408
      %p412 = pneg %p406
      %p413 = scmp.eq.s32.totalorder %s27, 1
      %p414 = por %p412, %p413
      %p415 = scmp.ne.s32.totalorder %s407, %s410
      %p416 = scmp.eq.s32.totalorder %s27, 0
      %p417 = por %p415, %p416
      %p418 = scmp.ne.s32.totalorder %s407, %s410
      %p419 = scmp.eq.s32.totalorder %s32, 1
      %p420 = por %p418, %p419
      %p421 = scmp.ne.s32.totalorder %s410, %s411
      %p422 = scmp.eq.s32.totalorder %s32, 0
      %p423 = por %p421, %p422
      %p424 = scmp.ne.s32.totalorder %s410, %s411
      %p425 = scmp.eq.s32.totalorder %s33, 1
      %p426 = por %p424, %p425
      %p428 = scmp.ne.s32.totalorder %s411, %s427
      %p429 = scmp.eq.s32.totalorder %s33, 0
      %p430 = por %p428, %p429
      %s432 = sadd.s32 %s431, 1
      %p435 = scmp.eq.s32.totalorder %s27, 1
      %p436 = scmp.ne.s32.totalorder %s431, %s433
      %p437 = scmp.eq.s32.totalorder %s27, 0
      %p438 = por %p436, %p437
      %p439 = scmp.ne.s32.totalorder %s431, %s433
      %p440 = scmp.eq.s32.totalorder %s32, 1
      %p441 = por %p439, %p440
      %p442 = scmp.ne.s32.totalorder %s433, %s434
      %p443 = scmp.eq.s32.totalorder %s32, 0
      %p444 = por %p442, %p443
      %p445 = scmp.ne.s32.totalorder %s433, %s434
      %p446 = scmp.eq.s32.totalorder %s33, 1
      %p447 = por %p445, %p446
      %p449 = scmp.ne.s32.totalorder %s434, %s448
      %p450 = scmp.eq.s32.totalorder %s33, 0
      %p451 = por %p449, %p450
      %s453 = sadd.s32 %s452, 1
      %p456 = scmp.eq.s32.totalorder %s27, 1
      %p457 = scmp.ne.s32.totalorder %s452, %s454
      %p458 = scmp.eq.s32.totalorder %s27, 0
      %p459 = por %p457, %p458
      %p460 = scmp.ne.s32.totalorder %s452, %s454
      %p461 = scmp.eq.s32.totalorder %s32, 1
      %p462 = por %p460, %p461
      %p463 = scmp.ne.s32.totalorder %s454, %s455
      %p464 = scmp.eq.s32.totalorder %s32, 0
      %p465 = por %p463, %p464
      %p466 = scmp.ne.s32.totalorder %s454, %s455
      %p467 = scmp.eq.s32.totalorder %s33, 1
      %p468 = por %p466, %p467
      %p470 = scmp.ne.s32.totalorder %s455, %s469
      %p471 = scmp.eq.s32.totalorder %s33, 0
      %p472 = por %p470, %p471
      %s474 = sadd.s32 %s473, 1
      %p477 = scmp.eq.s32.totalorder %s27, 1
      %p478 = scmp.ne.s32.totalorder %s473, %s475
      %p479 = scmp.eq.s32.totalorder %s27, 0
      %p480 = por %p478, %p479
      %p481 = scmp.ne.s32.totalorder %s473, %s475
      %p482 = scmp.eq.s32.totalorder %s32, 1
      %p483 = por %p481, %p482
      %p484 = scmp.ne.s32.totalorder %s475, %s476
      %p485 = scmp.eq.s32.totalorder %s32, 0
      %p486 = por %p484, %p485
      %p487 = scmp.ne.s32.totalorder %s475, %s476
      %p488 = scmp.eq.s32.totalorder %s33, 1
      %p489 = por %p487, %p488
      %p491 = scmp.ne.s32.totalorder %s476, %s490
      %p492 = scmp.eq.s32.totalorder %s33, 0
      %p493 = por %p491, %p492
      %s495 = sadd.s32 %s494, 1
      %p498 = scmp.eq.s32.totalorder %s27, 1
      %p499 = scmp.ne.s32.totalorder %s494, %s496
      %p500 = scmp.eq.s32.totalorder %s27, 0
      %p501 = por %p499, %p500
      %p502 = scmp.ne.s32.totalorder %s494, %s496
      %p503 = scmp.eq.s32.totalorder %s32, 1
      %p504 = por %p502, %p503
      %p505 = scmp.ne.s32.totalorder %s496, %s497
      %p506 = scmp.eq.s32.totalorder %s32, 0
      %p507 = por %p505, %p506
      %p508 = scmp.ne.s32.totalorder %s496, %s497
      %p509 = scmp.eq.s32.totalorder %s33, 1
      %p510 = por %p508, %p509
      %p512 = scmp.ne.s32.totalorder %s497, %s511
      %p513 = scmp.eq.s32.totalorder %s33, 0
      %p514 = por %p512, %p513
      %s516 = sadd.s32 %s515, 1
      %p519 = scmp.eq.s32.totalorder %s27, 1
      %p520 = scmp.ne.s32.totalorder %s515, %s517
      %p521 = scmp.eq.s32.totalorder %s27, 0
      %p522 = por %p520, %p521
      %p523 = scmp.ne.s32.totalorder %s515, %s517
      %p524 = scmp.eq.s32.totalorder %s32, 1
      %p525 = por %p523, %p524
      %p526 = scmp.ne.s32.totalorder %s517, %s518
      %p527 = scmp.eq.s32.totalorder %s32, 0
      %p528 = por %p526, %p527
      %p529 = scmp.ne.s32.totalorder %s517, %s518
      %p530 = scmp.eq.s32.totalorder %s33, 1
      %p531 = por %p529, %p530
      %p533 = scmp.ne.s32.totalorder %s518, %s532
      %p534 = scmp.eq.s32.totalorder %s33, 0
      %p535 = por %p533, %p534
      %p536 = scmp.le.s32.totalorder 1, %s27
      %p537 = scmp.lt.s32.totalorder %s27, 3
      %p538 = pnand %p536, %p537
      %p539 = pneg %p538
      // Predicated region
      $region9: #{distilbert_class_forward.1} parent=5 // pred_check
        _
      $region10: #{distilbert_class_forward.1} parent=5 // pred_check_branch
        %541 = sbr.rel (%p538) target = $region12
      $region11: #{distilbert_class_forward.1} parent=5 // pred_region
        %s542 = ssub.s32 %s27, 1
        // Predicated region
        $region13: #{distilbert_class_forward.1} parent=11 // pred_check
          %p543 = pneg %p48
        $region14: #{distilbert_class_forward.1} parent=11 // pred_check_branch
          %545 = sbr.rel (%p543) target = $region16
        $region15: #{distilbert_class_forward.1} parent=11 // pred_region
          _
        $region16: #{distilbert_class_forward.1} parent=11 // pred_fallthru
          _
        // Predicated region
        $region17: #{distilbert_class_forward.1} parent=11 // pred_check
          %p546 = pneg %p69
        $region18: #{distilbert_class_forward.1} parent=11 // pred_check_branch
          %548 = sbr.rel (%p546) target = $region20
        $region19: #{distilbert_class_forward.1} parent=11 // pred_region
          _
        $region20: #{distilbert_class_forward.1} parent=11 // pred_fallthru
          _
        // Predicated region
        $region21: #{distilbert_class_forward.1} parent=11 // pred_check
          %p549 = pneg %p90
        $region22: #{distilbert_class_forward.1} parent=11 // pred_check_branch
          %551 = sbr.rel (%p549) target = $region24
        $region23: #{distilbert_class_forward.1} parent=11 // pred_region
          _
        $region24: #{distilbert_class_forward.1} parent=11 // pred_fallthru
          _
        // Predicated region
        $region25: #{distilbert_class_forward.1} parent=11 // pred_check
          %p552 = pneg %p111
        $region26: #{distilbert_class_forward.1} parent=11 // pred_check_branch
          %554 = sbr.rel (%p552) target = $region28
        $region27: #{distilbert_class_forward.1} parent=11 // pred_region
          _
        $region28: #{distilbert_class_forward.1} parent=11 // pred_fallthru
          _
        // Predicated region
        $region29: #{distilbert_class_forward.1} parent=11 // pred_check
          %p555 = pneg %p444
        $region30: #{distilbert_class_forward.1} parent=11 // pred_check_branch
          %557 = sbr.rel (%p555) target = $region32
        $region31: #{distilbert_class_forward.1} parent=11 // pred_region
          _
        $region32: #{distilbert_class_forward.1} parent=11 // pred_fallthru
          _
        // Predicated region
        $region33: #{distilbert_class_forward.1} parent=11 // pred_check
          %p558 = pneg %p465
        $region34: #{distilbert_class_forward.1} parent=11 // pred_check_branch
          %560 = sbr.rel (%p558) target = $region36
        $region35: #{distilbert_class_forward.1} parent=11 // pred_region
          _
        $region36: #{distilbert_class_forward.1} parent=11 // pred_fallthru
          _
        // Predicated region
        $region37: #{distilbert_class_forward.1} parent=11 // pred_check
          %p561 = pneg %p486
        $region38: #{distilbert_class_forward.1} parent=11 // pred_check_branch
          %563 = sbr.rel (%p561) target = $region40
        $region39: #{distilbert_class_forward.1} parent=11 // pred_region
          _
        $region40: #{distilbert_class_forward.1} parent=11 // pred_fallthru
          _
        // Predicated region
        $region41: #{distilbert_class_forward.1} parent=11 // pred_check
          %p564 = pneg %p507
        $region42: #{distilbert_class_forward.1} parent=11 // pred_check_branch
          %566 = sbr.rel (%p564) target = $region44
        $region43: #{distilbert_class_forward.1} parent=11 // pred_region
          _
        $region44: #{distilbert_class_forward.1} parent=11 // pred_fallthru
          _
      $region12: #{distilbert_class_forward.1} parent=5 // pred_fallthru
        _
      %p567 = scmp.lt.s32.totalorder %s27, 2
      // Predicated region
      $region45: #{distilbert_class_forward.1} parent=5 // pred_check
        %p568 = pneg %p567
      $region46: #{distilbert_class_forward.1} parent=5 // pred_check_branch
        %570 = sbr.rel (%p568) target = $region48
      $region47: #{distilbert_class_forward.1} parent=5 // pred_region
        // Predicated region
        $region49: #{distilbert_class_forward.1} parent=47 // pred_check
          %p571 = pneg %p131
        $region50: #{distilbert_class_forward.1} parent=47 // pred_check_branch
          %573 = sbr.rel (%p571) target = $region52
        $region51: #{distilbert_class_forward.1} parent=47 // pred_region
          %p574 = scmp.lt.s32.totalorder %s27, 1
          %s575 = scalar_select %p574, %s27, 1
          %s576 = smul.addr %s575, 48
          %s577 = smul.addr %s576, 4
          %s578 = scalar_lea.vmem %s4, %s577
        $region52: #{distilbert_class_forward.1} parent=47 // pred_fallthru
          _
        // Predicated region
        $region53: #{distilbert_class_forward.1} parent=47 // pred_check
          %p579 = pneg %p157
        $region54: #{distilbert_class_forward.1} parent=47 // pred_check_branch
          %581 = sbr.rel (%p579) target = $region56
        $region55: #{distilbert_class_forward.1} parent=47 // pred_region
          %p582 = scmp.lt.s32.totalorder %s27, 1
          %s583 = scalar_select %p582, %s27, 1
          %s584 = smul.addr %s583, 3
          %s585 = scalar_lea.vmem %s5, %s584
        $region56: #{distilbert_class_forward.1} parent=47 // pred_fallthru
          _
        // Predicated region
        $region57: #{distilbert_class_forward.1} parent=47 // pred_check
          %p586 = pneg %p183
        $region58: #{distilbert_class_forward.1} parent=47 // pred_check_branch
          %588 = sbr.rel (%p586) target = $region60
        $region59: #{distilbert_class_forward.1} parent=47 // pred_region
          %p589 = scmp.lt.s32.totalorder %s27, 1
          %s590 = scalar_select %p589, %s27, 1
          %s591 = smul.addr %s590, 16
          %s592 = smul.addr %s591, 4
          %s593 = scalar_lea.vmem %s6, %s592
        $region60: #{distilbert_class_forward.1} parent=47 // pred_fallthru
          _
        // Predicated region
        $region61: #{distilbert_class_forward.1} parent=47 // pred_check
          %p594 = pneg %p209
        $region62: #{distilbert_class_forward.1} parent=47 // pred_check_branch
          %596 = sbr.rel (%p594) target = $region64
        $region63: #{distilbert_class_forward.1} parent=47 // pred_region
          %p597 = scmp.lt.s32.totalorder %s27, 1
          %s598 = scalar_select %p597, %s27, 1
          %s599 = scalar_lea.vmem %s7, %s598
        $region64: #{distilbert_class_forward.1} parent=47 // pred_fallthru
          _
        // Predicated region
        $region65: #{distilbert_class_forward.1} parent=47 // pred_check
          %p600 = pneg %p235
        $region66: #{distilbert_class_forward.1} parent=47 // pred_check_branch
          %602 = sbr.rel (%p600) target = $region68
        $region67: #{distilbert_class_forward.1} parent=47 // pred_region
          %p603 = scmp.lt.s32.totalorder %s27, 1
          %s604 = scalar_select %p603, %s27, 1
          %s605 = scalar_lea.vmem %s8, %s604
        $region68: #{distilbert_class_forward.1} parent=47 // pred_fallthru
          _
        // Predicated region
        $region69: #{distilbert_class_forward.1} parent=47 // pred_check
          %p606 = pneg %p261
        $region70: #{distilbert_class_forward.1} parent=47 // pred_check_branch
          %608 = sbr.rel (%p606) target = $region72
        $region71: #{distilbert_class_forward.1} parent=47 // pred_region
          %p609 = scmp.lt.s32.totalorder %s27, 1
          %s610 = scalar_select %p609, %s27, 1
          %s611 = scalar_lea.vmem %s9, %s610
        $region72: #{distilbert_class_forward.1} parent=47 // pred_fallthru
          _
        // Predicated region
        $region73: #{distilbert_class_forward.1} parent=47 // pred_check
          %p612 = pneg %p287
        $region74: #{distilbert_class_forward.1} parent=47 // pred_check_branch
          %614 = sbr.rel (%p612) target = $region76
        $region75: #{distilbert_class_forward.1} parent=47 // pred_region
          %p615 = scmp.lt.s32.totalorder %s27, 1
          %s616 = scalar_select %p615, %s27, 1
          %s617 = smul.addr %s616, 64
          %s618 = smul.addr %s617, 4
          %s619 = scalar_lea.vmem %s10, %s618
        $region76: #{distilbert_class_forward.1} parent=47 // pred_fallthru
          _
        // Predicated region
        $region77: #{distilbert_class_forward.1} parent=47 // pred_check
          %p620 = pneg %p313
        $region78: #{distilbert_class_forward.1} parent=47 // pred_check_branch
          %622 = sbr.rel (%p620) target = $region80
        $region79: #{distilbert_class_forward.1} parent=47 // pred_region
          %p623 = scmp.lt.s32.totalorder %s27, 1
          %s624 = scalar_select %p623, %s27, 1
          %s625 = smul.addr %s624, 4
          %s626 = scalar_lea.vmem %s11, %s625
        $region80: #{distilbert_class_forward.1} parent=47 // pred_fallthru
          _
        // Predicated region
        $region81: #{distilbert_class_forward.1} parent=47 // pred_check
          %p627 = pneg %p339
        $region82: #{distilbert_class_forward.1} parent=47 // pred_check_branch
          %629 = sbr.rel (%p627) target = $region84
        $region83: #{distilbert_class_forward.1} parent=47 // pred_region
          %p630 = scmp.lt.s32.totalorder %s27, 1
          %s631 = scalar_select %p630, %s27, 1
          %s632 = smul.addr %s631, 64
          %s633 = smul.addr %s632, 4
          %s634 = scalar_lea.vmem %s12, %s633
        $region84: #{distilbert_class_forward.1} parent=47 // pred_fallthru
          _
        // Predicated region
        $region85: #{distilbert_class_forward.1} parent=47 // pred_check
          %p635 = pneg %p365
        $region86: #{distilbert_class_forward.1} parent=47 // pred_check_branch
          %637 = sbr.rel (%p635) target = $region88
        $region87: #{distilbert_class_forward.1} parent=47 // pred_region
          %p638 = scmp.lt.s32.totalorder %s27, 1
          %s639 = scalar_select %p638, %s27, 1
          %s640 = scalar_lea.vmem %s13, %s639
        $region88: #{distilbert_class_forward.1} parent=47 // pred_fallthru
          _
        // Predicated region
        $region89: #{distilbert_class_forward.1} parent=47 // pred_check
          %p641 = pneg %p391
        $region90: #{distilbert_class_forward.1} parent=47 // pred_check_branch
          %643 = sbr.rel (%p641) target = $region92
        $region91: #{distilbert_class_forward.1} parent=47 // pred_region
          %p644 = scmp.lt.s32.totalorder %s27, 1
          %s645 = scalar_select %p644, %s27, 1
          %s646 = scalar_lea.vmem %s14, %s645
        $region92: #{distilbert_class_forward.1} parent=47 // pred_fallthru
          _
        // Predicated region
        $region93: #{distilbert_class_forward.1} parent=47 // pred_check
          %p647 = pneg %p417
        $region94: #{distilbert_class_forward.1} parent=47 // pred_check_branch
          %649 = sbr.rel (%p647) target = $region96
        $region95: #{distilbert_class_forward.1} parent=47 // pred_region
          %p650 = scmp.lt.s32.totalorder %s27, 1
          %s651 = scalar_select %p650, %s27, 1
          %s652 = scalar_lea.vmem %s15, %s651
        $region96: #{distilbert_class_forward.1} parent=47 // pred_fallthru
          _
      $region48: #{distilbert_class_forward.1} parent=5 // pred_fallthru
        _
      %p653 = scmp.le.s32.totalorder 1, %s27
      %p654 = scmp.lt.s32.totalorder %s27, 3
      %p655 = pnand %p653, %p654
      %p656 = pneg %p655
      // Predicated region
      $region97: #{distilbert_class_forward.1} parent=5 // pred_check
        _
      $region98: #{distilbert_class_forward.1} parent=5 // pred_check_branch
        %658 = sbr.rel (%p655) target = $region100
      $region99: #{distilbert_class_forward.1} parent=5 // pred_region
        %s659 = ssub.s32 %s27, 1
        %p660 = pneg %p48
        %p661 = pneg %p45
        %p662 = pneg %p69
        %p663 = pneg %p66
        %p664 = pneg %p90
        %p665 = pneg %p87
        %p666 = pneg %p111
        %p667 = pneg %p108
        %p668 = scmp.lt.s32.totalorder %s32, 1
        %s669 = scalar_select %p668, %s32, 1
        %s670 = smul.addr %s669, 48
        %s671 = smul.addr %s670, 4
        %s672 = scalar_lea.vmem %s4, %s671
        %p673 = pneg %p137
        %p674 = pneg %p134
        %p675 = scmp.lt.s32.totalorder %s32, 1
        %s676 = scalar_select %p675, %s32, 1
        %s677 = smul.addr %s676, 3
        %s678 = scalar_lea.vmem %s5, %s677
        %p679 = pneg %p163
        %p680 = pneg %p160
        %p681 = scmp.lt.s32.totalorder %s32, 1
        %s682 = scalar_select %p681, %s32, 1
        %s683 = smul.addr %s682, 16
        %s684 = smul.addr %s683, 4
        %s685 = scalar_lea.vmem %s6, %s684
        %p686 = pneg %p189
        %p687 = pneg %p186
        %p688 = scmp.lt.s32.totalorder %s32, 1
        %s689 = scalar_select %p688, %s32, 1
        %s690 = scalar_lea.vmem %s7, %s689
        %p691 = pneg %p215
        %p692 = pneg %p212
        %p693 = scmp.lt.s32.totalorder %s32, 1
        %s694 = scalar_select %p693, %s32, 1
        %s695 = scalar_lea.vmem %s8, %s694
        %p696 = pneg %p241
        %p697 = pneg %p238
        %p698 = scmp.lt.s32.totalorder %s32, 1
        %s699 = scalar_select %p698, %s32, 1
        %s700 = scalar_lea.vmem %s9, %s699
        %p701 = pneg %p267
        %p702 = pneg %p264
        %p703 = scmp.lt.s32.totalorder %s32, 1
        %s704 = scalar_select %p703, %s32, 1
        %s705 = smul.addr %s704, 64
        %s706 = smul.addr %s705, 4
        %s707 = scalar_lea.vmem %s10, %s706
        %p708 = pneg %p293
        %p709 = pneg %p290
        %p710 = scmp.lt.s32.totalorder %s32, 1
        %s711 = scalar_select %p710, %s32, 1
        %s712 = smul.addr %s711, 4
        %s713 = scalar_lea.vmem %s11, %s712
        %p714 = pneg %p319
        %p715 = pneg %p316
        %p716 = scmp.lt.s32.totalorder %s32, 1
        %s717 = scalar_select %p716, %s32, 1
        %s718 = smul.addr %s717, 64
        %s719 = smul.addr %s718, 4
        %s720 = scalar_lea.vmem %s12, %s719
        %p721 = pneg %p345
        %p722 = pneg %p342
        %p723 = scmp.lt.s32.totalorder %s32, 1
        %s724 = scalar_select %p723, %s32, 1
        %s725 = scalar_lea.vmem %s13, %s724
        %p726 = pneg %p371
        %p727 = pneg %p368
        %p728 = scmp.lt.s32.totalorder %s32, 1
        %s729 = scalar_select %p728, %s32, 1
        %s730 = scalar_lea.vmem %s14, %s729
        %p731 = pneg %p397
        %p732 = pneg %p394
        %p733 = scmp.lt.s32.totalorder %s32, 1
        %s734 = scalar_select %p733, %s32, 1
        %s735 = scalar_lea.vmem %s15, %s734
        %p736 = pneg %p423
        %p737 = pneg %p420
        %p738 = pneg %p444
        %p739 = pneg %p441
        %p740 = pneg %p465
        %p741 = pneg %p462
        %p742 = pneg %p486
        %p743 = pneg %p483
        %p744 = pneg %p507
        %p745 = pneg %p504
        %p746 = pneg %p528
        %p747 = pneg %p525
        %p748 = scmp.lt.s32.totalorder %s32, 1
        %s749 = scalar_select %p748, %s32, 1
        %s750 = smul.addr %s749, 48
        %s751 = smul.addr %s750, 4
        %s752 = scalar_lea.vmem %s4, %s751
        %p753 = scmp.lt.s32.totalorder %s32, 1
        %s754 = scalar_select %p753, %s32, 1
        %s755 = smul.addr %s754, 3
        %s756 = scalar_lea.vmem %s5, %s755
        %p757 = scmp.lt.s32.totalorder %s32, 1
        %s758 = scalar_select %p757, %s32, 1
        %s759 = smul.addr %s758, 16
        %s760 = smul.addr %s759, 4
        %s761 = scalar_lea.vmem %s6, %s760
        %p762 = scmp.lt.s32.totalorder %s32, 1
        %s763 = scalar_select %p762, %s32, 1
        %s764 = scalar_lea.vmem %s7, %s763
        %p765 = scmp.lt.s32.totalorder %s32, 1
        %s766 = scalar_select %p765, %s32, 1
        %s767 = scalar_lea.vmem %s8, %s766
        %p768 = scmp.lt.s32.totalorder %s32, 1
        %s769 = scalar_select %p768, %s32, 1
        %s770 = scalar_lea.vmem %s9, %s769
        %p771 = scmp.lt.s32.totalorder %s32, 1
        %s772 = scalar_select %p771, %s32, 1
        %s773 = smul.addr %s772, 64
        %s774 = smul.addr %s773, 4
        %s775 = scalar_lea.vmem %s10, %s774
        %p776 = scmp.lt.s32.totalorder %s32, 1
        %s777 = scalar_select %p776, %s32, 1
        %s778 = smul.addr %s777, 4
        %s779 = scalar_lea.vmem %s11, %s778
        %p780 = scmp.lt.s32.totalorder %s32, 1
        %s781 = scalar_select %p780, %s32, 1
        %s782 = smul.addr %s781, 64
        %s783 = smul.addr %s782, 4
        %s784 = scalar_lea.vmem %s12, %s783
        %p785 = scmp.lt.s32.totalorder %s32, 1
        %s786 = scalar_select %p785, %s32, 1
        %s787 = scalar_lea.vmem %s13, %s786
        %p788 = scmp.lt.s32.totalorder %s32, 1
        %s789 = scalar_select %p788, %s32, 1
        %s790 = scalar_lea.vmem %s14, %s789
        %p791 = scmp.lt.s32.totalorder %s32, 1
        %s792 = scalar_select %p791, %s32, 1
        %s793 = scalar_lea.vmem %s15, %s792
        %p795 = scmp.eq.s32.totalorder %s32, 0
        // Predicated region
        $region101: #{distilbert_class_forward.1} parent=99 // pred_check
          %p796 = pneg %p795
        $region102: #{distilbert_class_forward.1} parent=99 // pred_check_branch
          %798 = sbr.rel (%p796) target = $region104
        $region103: #{distilbert_class_forward.1} parent=99 // pred_region
          %v799 = vld [vmem:[%s0] sm:$0xf]
          %v800 = vld [vmem:[%s0 + $0x4] sm:$0xf]
          %v801 = vld [vmem:[%s0 + $0x8] sm:$0xf]
          %v802 = vld [vmem:[%s0 + $0xc] sm:$0xf]
          %v803 = vunpack.c.l.bf16 %v799
          %v804 = vunpack.c.l.bf16 %v800
          %v805 = vunpack.c.l.bf16 %v801
          %v806 = vunpack.c.l.bf16 %v802
          %v807 = vld [vmem:[%s1] sm:$0x1]
          %v808 = vld [vmem:[%s2] sm:$0x1]
          %809 = vadd.xlane.f32.xlu0 %v803
          %v810 = vpop.xlane.xlu0 %809
          %811 = vadd.xlane.f32.xlu0 %v804
          %v812 = vpop.xlane.xlu0 %811
          %813 = vadd.xlane.f32.xlu0 %v805
          %v814 = vpop.xlane.xlu0 %813
          %815 = vadd.xlane.f32.xlu0 %v806
          %v816 = vpop.xlane.xlu0 %815
          %v817 = vrcp.pop 128.0
          %v818 = vmul.f32 %v810, %v817
          %v819 = vmul.f32 %v812, %v817
          %v820 = vmul.f32 %v814, %v817
          %v821 = vmul.f32 %v816, %v817
          %v822 = vsub.f32 %v803, %v818
          %v823 = vsub.f32 %v804, %v819
          %v824 = vsub.f32 %v805, %v820
          %v825 = vsub.f32 %v806, %v821
          %v826 = vmul.f32 %v822, %v822
          %v827 = vmul.f32 %v823, %v823
          %v828 = vmul.f32 %v824, %v824
          %v829 = vmul.f32 %v825, %v825
          %830 = vadd.xlane.f32.xlu0 %v826
          %v831 = vpop.xlane.xlu0 %830
          %832 = vadd.xlane.f32.xlu0 %v827
          %v833 = vpop.xlane.xlu0 %832
          %834 = vadd.xlane.f32.xlu0 %v828
          %v835 = vpop.xlane.xlu0 %834
          %836 = vadd.xlane.f32.xlu0 %v829
          %v837 = vpop.xlane.xlu0 %836
          %v838 = vmul.f32 %v831, %v817
          %v839 = vmul.f32 %v833, %v817
          %v840 = vmul.f32 %v835, %v817
          %v841 = vmul.f32 %v837, %v817
          %v842 = vadd.f32 %v838, 1e-12
          %v843 = vadd.f32 %v839, 1e-12
          %v844 = vadd.f32 %v840, 1e-12
          %v845 = vadd.f32 %v841, 1e-12
          %v846 = vrsqrt.pop %v842
          %v847 = vrsqrt.pop %v843
          %v848 = vrsqrt.pop %v844
          %v849 = vrsqrt.pop %v845
          %v850 = vmul.f32 %v822, %v846
          %v851 = vmul.f32 %v823, %v847
          %v852 = vmul.f32 %v824, %v848
          %v853 = vmul.f32 %v825, %v849
          %v855 = vlaneseq
          %v856 = vshrl.u32 %v855, 7
          %v857 = vsub.s32 0, %v856
          %v858 = vrot.slane %v807, %v857
          %v860 = vmul.f32 %v850, %v858
          %v861 = vmul.f32 %v851, %v858
          %v862 = vmul.f32 %v852, %v858
          %v863 = vmul.f32 %v853, %v858
          %v865 = vlaneseq
          %v866 = vshrl.u32 %v865, 7
          %v867 = vsub.s32 0, %v866
          %v868 = vrot.slane %v808, %v867
          %v870 = vadd.f32 %v860, %v868
          %v871 = vadd.f32 %v861, %v868
          %v872 = vadd.f32 %v862, %v868
          %v873 = vadd.f32 %v863, %v868
          %v874 = vpack.c.bf16 %v871, %v870
          %v875 = vpack.c.bf16 %v873, %v872
          %876 = vst [vmem:[#allocation2] sm:$0xff] %v874
          %877 = vst [vmem:[#allocation2 + $0x8] sm:$0xff] %v875
        $region104: #{distilbert_class_forward.1} parent=99 // pred_fallthru
          _
        %v878 = vld [vmem:[#allocation2] sm:$0xff]
        %v879 = vld [vmem:[#allocation2 + $0x8] sm:$0xff]
        %v880 = vunpack.c.l.bf16 %v878
        %v881 = vunpack.c.h.bf16 %v878
        %v882 = vunpack.c.l.bf16 %v879
        %v883 = vunpack.c.h.bf16 %v879
        %v884 = vld [vmem:[%s752] sm:$0xff]
        %v885 = vld [vmem:[%s752 + $0x8] sm:$0xf]
        %v886 = vld [vmem:[%s752 + $0xc] sm:$0xff]
        %v887 = vld [vmem:[%s752 + $0x14] sm:$0xf]
        %v888 = vld [vmem:[%s752 + $0x18] sm:$0xff]
        %v889 = vld [vmem:[%s752 + $0x20] sm:$0xf]
        %v890 = vld [vmem:[%s752 + $0x24] sm:$0xff]
        %v891 = vld [vmem:[%s752 + $0x2c] sm:$0xf]
        %v892 = vld [vmem:[%s752 + $0x30] sm:$0xff]
        %v893 = vld [vmem:[%s752 + $0x38] sm:$0xf]
        %v894 = vld [vmem:[%s752 + $0x3c] sm:$0xff]
        %v895 = vld [vmem:[%s752 + $0x44] sm:$0xf]
        %v896 = vld [vmem:[%s752 + $0x48] sm:$0xff]
        %v897 = vld [vmem:[%s752 + $0x50] sm:$0xf]
        %v898 = vld [vmem:[%s752 + $0x54] sm:$0xff]
        %v899 = vld [vmem:[%s752 + $0x5c] sm:$0xf]
        %v900 = vld [vmem:[%s752 + $0x60] sm:$0xff]
        %v901 = vld [vmem:[%s752 + $0x68] sm:$0xf]
        %v902 = vld [vmem:[%s752 + $0x6c] sm:$0xff]
        %v903 = vld [vmem:[%s752 + $0x74] sm:$0xf]
        %v904 = vld [vmem:[%s752 + $0x78] sm:$0xff]
        %v905 = vld [vmem:[%s752 + $0x80] sm:$0xf]
        %v906 = vld [vmem:[%s752 + $0x84] sm:$0xff]
        %v907 = vld [vmem:[%s752 + $0x8c] sm:$0xf]
        %v908 = vld [vmem:[%s752 + $0x90] sm:$0xff]
        %v909 = vld [vmem:[%s752 + $0x98] sm:$0xf]
        %v910 = vld [vmem:[%s752 + $0x9c] sm:$0xff]
        %v911 = vld [vmem:[%s752 + $0xa4] sm:$0xf]
        %v912 = vld [vmem:[%s752 + $0xa8] sm:$0xff]
        %v913 = vld [vmem:[%s752 + $0xb0] sm:$0xf]
        %v914 = vld [vmem:[%s752 + $0xb4] sm:$0xff]
        %v915 = vld [vmem:[%s752 + $0xbc] sm:$0xf]
        %v916 = vld [vmem:[%s756] sm:$0x7]
        %v918 = vlaneseq
        %v919 = vshrl.u32 %v918, 7
        %v920 = vsub.s32 0, %v919
        %v921 = vrot.slane %v916, %v920
        %v922 = vlaneseq
        %v923 = vshrl.u32 %v922, 7
        %v924 = vsub.s32 1, %v923
        %v925 = vrot.slane %v916, %v924
        %v926 = vlaneseq
        %v927 = vshrl.u32 %v926, 7
        %v928 = vsub.s32 2, %v927
        %v929 = vrot.slane %v916, %v928
        %v965 = vunpack.c.l.b16 %v884
        %v966 = vunpack.c.h.b16 %v884
        %v967 = vunpack.c.l.b16 %v885
        %v968 = vunpack.c.l.b16 %v886
        %v969 = vunpack.c.h.b16 %v886
        %v970 = vunpack.c.l.b16 %v887
        %v971 = vunpack.c.l.b16 %v888
        %v972 = vunpack.c.h.b16 %v888
        %v973 = vunpack.c.l.b16 %v889
        %v974 = vunpack.c.l.b16 %v890
        %v975 = vunpack.c.h.b16 %v890
        %v976 = vunpack.c.l.b16 %v891
        %v977 = vunpack.c.l.b16 %v892
        %v978 = vunpack.c.h.b16 %v892
        %v979 = vunpack.c.l.b16 %v893
        %v980 = vunpack.c.l.b16 %v894
        %v981 = vunpack.c.h.b16 %v894
        %v982 = vunpack.c.l.b16 %v895
        %v983 = vunpack.c.l.b16 %v896
        %v984 = vunpack.c.h.b16 %v896
        %v985 = vunpack.c.l.b16 %v897
        %v986 = vunpack.c.l.b16 %v898
        %v987 = vunpack.c.h.b16 %v898
        %v988 = vunpack.c.l.b16 %v899
        %v989 = vunpack.c.l.b16 %v900
        %v990 = vunpack.c.h.b16 %v900
        %v991 = vunpack.c.l.b16 %v901
        %v992 = vunpack.c.l.b16 %v902
        %v993 = vunpack.c.h.b16 %v902
        %v994 = vunpack.c.l.b16 %v903
        %v995 = vunpack.c.l.b16 %v904
        %v996 = vunpack.c.h.b16 %v904
        %v997 = vunpack.c.l.b16 %v905
        %v998 = vunpack.c.l.b16 %v906
        %v999 = vunpack.c.h.b16 %v906
        %v1000 = vunpack.c.l.b16 %v907
        %v1001 = vunpack.c.l.b16 %v908
        %v1002 = vunpack.c.h.b16 %v908
        %v1003 = vunpack.c.l.b16 %v909
        %v1004 = vunpack.c.l.b16 %v910
        %v1005 = vunpack.c.h.b16 %v910
        %v1006 = vunpack.c.l.b16 %v911
        %v1007 = vunpack.c.l.b16 %v912
        %v1008 = vunpack.c.h.b16 %v912
        %v1009 = vunpack.c.l.b16 %v913
        %v1010 = vunpack.c.l.b16 %v914
        %v1011 = vunpack.c.h.b16 %v914
        %v1012 = vunpack.c.l.b16 %v915
        %v1013 = vpack.c.b16 %v968, %v965
        %v1014 = vpack.c.b16 %v969, %v966
        %v1015 = vpack.c.b16 %v970, %v967
        %v1016 = vpack.c.b16 %v974, %v971
        %v1017 = vpack.c.b16 %v975, %v972
        %v1018 = vpack.c.b16 %v976, %v973
        %v1019 = vpack.c.b16 %v980, %v977
        %v1020 = vpack.c.b16 %v981, %v978
        %v1021 = vpack.c.b16 %v982, %v979
        %v1022 = vpack.c.b16 %v986, %v983
        %v1023 = vpack.c.b16 %v987, %v984
        %v1024 = vpack.c.b16 %v988, %v985
        %v1025 = vpack.c.b16 %v992, %v989
        %v1026 = vpack.c.b16 %v993, %v990
        %v1027 = vpack.c.b16 %v994, %v991
        %v1028 = vpack.c.b16 %v998, %v995
        %v1029 = vpack.c.b16 %v999, %v996
        %v1030 = vpack.c.b16 %v1000, %v997
        %v1031 = vpack.c.b16 %v1004, %v1001
        %v1032 = vpack.c.b16 %v1005, %v1002
        %v1033 = vpack.c.b16 %v1006, %v1003
        %v1034 = vpack.c.b16 %v1010, %v1007
        %v1035 = vpack.c.b16 %v1011, %v1008
        %v1036 = vpack.c.b16 %v1012, %v1009
        %1061 = vmatprep.subr.bf16.mxu0 %v1014
        %1062 = vmatpush1.bf16.msra.mxu0 %v1013
        %1063 = vmatprep.subr.bf16.mxu0 %v1017
        %1064 = vmatpush1.bf16.msra.mxu0 %v1016
        %1065 = vmatprep.subr.bf16.mxu0 %v1020
        %1066 = vmatpush1.bf16.msra.mxu0 %v1019
        %1067 = vmatprep.subr.bf16.mxu0 %v1023
        %1068 = vmatpush1.bf16.msra.mxu0 %v1022
        %1069 = vmatprep.subr.bf16.mxu0 %v1026
        %1070 = vmatpush1.bf16.msra.mxu0 %v1025
        %1071 = vmatprep.subr.bf16.mxu0 %v1029
        %1072 = vmatpush1.bf16.msra.mxu0 %v1028
        %1073 = vmatprep.subr.bf16.mxu0 %v1032
        %1074 = vmatpush1.bf16.msra.mxu0 %v1031
        %1075 = vmatprep.subr.bf16.mxu0 %v1035
        %1076 = vmatpush1.bf16.msra.mxu0 %v1034
        %1077 = vmatprep.subr.bf16.mxu0 0
        %1078 = vmatpush1.bf16.msra.mxu0 0
        %1079 = vmatprep.subr.bf16.mxu0 0
        %1080 = vmatpush1.bf16.msra.mxu0 0
        %1081 = vmatprep.subr.bf16.mxu0 0
        %1082 = vmatpush1.bf16.msra.mxu0 0
        %1083 = vmatprep.subr.bf16.mxu0 0
        %1084 = vmatpush1.bf16.msra.mxu0 0
        %1085 = vmatprep.subr.bf16.mxu0 0
        %1086 = vmatpush1.bf16.msra.mxu0 0
        %1087 = vmatprep.subr.bf16.mxu0 0
        %1088 = vmatpush1.bf16.msra.mxu0 0
        %1089 = vmatprep.subr.bf16.mxu0 0
        %1090 = vmatpush1.bf16.msra.mxu0 0
        %1091 = vmatprep.subr.bf16.mxu0 0
        %1092 = vmatpush1.bf16.msra.mxu0 0
        %1093 = vmatprep.mubr.bf16.mxu0 0
        %1094 = vmatmul.mubr.bf16.gmra.mrb[0].mxu0 %v878
        %v1095 = vpop.f32.mrb[0].mxu0
        %v1096 = vadd.f32 %v921, %v1095
        %v1097 = vpop.f32.mrb[0].mxu0
        %v1098 = vadd.f32 %v925, %v1097
        %v1099 = vpop.f32.mrb[0].mxu0
        %v1100 = vadd.f32 %v921, %v1099
        %v1101 = vpop.f32.mrb[0].mxu0
        %v1102 = vadd.f32 %v925, %v1101
        %1103 = vmatprep.mubr.bf16.mxu0 0
        %1104 = vmatmul.mubr.bf16.gmra.mrb[0].mxu0 %v879
        %v1105 = vpop.f32.mrb[0].mxu0
        %v1106 = vadd.f32 %v921, %v1105
        %v1107 = vpop.f32.mrb[0].mxu0
        %v1108 = vadd.f32 %v925, %v1107
        %v1109 = vpop.f32.mrb[0].mxu0
        %v1110 = vadd.f32 %v921, %v1109
        %v1111 = vpop.f32.mrb[0].mxu0
        %v1112 = vadd.f32 %v925, %v1111
        %1113 = vdwg.mxu0
        %1114 = vmatprep.subr.bf16.mxu0 0
        %1115 = vmatpush1.bf16.msra.mxu0 %v1015
        %1116 = vmatprep.subr.bf16.mxu0 0
        %1117 = vmatpush1.bf16.msra.mxu0 %v1018
        %1118 = vmatprep.subr.bf16.mxu0 0
        %1119 = vmatpush1.bf16.msra.mxu0 %v1021
        %1120 = vmatprep.subr.bf16.mxu0 0
        %1121 = vmatpush1.bf16.msra.mxu0 %v1024
        %1122 = vmatprep.subr.bf16.mxu0 0
        %1123 = vmatpush1.bf16.msra.mxu0 %v1027
        %1124 = vmatprep.subr.bf16.mxu0 0
        %1125 = vmatpush1.bf16.msra.mxu0 %v1030
        %1126 = vmatprep.subr.bf16.mxu0 0
        %1127 = vmatpush1.bf16.msra.mxu0 %v1033
        %1128 = vmatprep.subr.bf16.mxu0 0
        %1129 = vmatpush1.bf16.msra.mxu0 %v1036
        %1130 = vmatprep.subr.bf16.mxu0 0
        %1131 = vmatpush1.bf16.msra.mxu0 0
        %1132 = vmatprep.subr.bf16.mxu0 0
        %1133 = vmatpush1.bf16.msra.mxu0 0
        %1134 = vmatprep.subr.bf16.mxu0 0
        %1135 = vmatpush1.bf16.msra.mxu0 0
        %1136 = vmatprep.subr.bf16.mxu0 0
        %1137 = vmatpush1.bf16.msra.mxu0 0
        %1138 = vmatprep.subr.bf16.mxu0 0
        %1139 = vmatpush1.bf16.msra.mxu0 0
        %1140 = vmatprep.subr.bf16.mxu0 0
        %1141 = vmatpush1.bf16.msra.mxu0 0
        %1142 = vmatprep.subr.bf16.mxu0 0
        %1143 = vmatpush1.bf16.msra.mxu0 0
        %1144 = vmatprep.subr.bf16.mxu0 0
        %1145 = vmatpush1.bf16.msra.mxu0 0
        %1146 = vmatprep.mubr.bf16.mxu0 0
        %1147 = vmatmul.mubr.bf16.gmra.mrb[0].mxu0 %v878
        %v1148 = vpop.f32.mrb[0].mxu0
        %v1149 = vadd.f32 %v929, %v1148
        %v1150 = vpop.f32.mrb[0].mxu0
        %v1151 = vpop.f32.mrb[0].mxu0
        %v1152 = vadd.f32 %v929, %v1151
        %v1153 = vpop.f32.mrb[0].mxu0
        %1154 = vmatprep.mubr.bf16.mxu0 0
        %1155 = vmatmul.mubr.bf16.gmra.mrb[0].mxu0 %v879
        %v1156 = vpop.f32.mrb[0].mxu0
        %v1157 = vadd.f32 %v929, %v1156
        %v1158 = vpop.f32.mrb[0].mxu0
        %v1159 = vpop.f32.mrb[0].mxu0
        %v1160 = vadd.f32 %v929, %v1159
        %v1161 = vpop.f32.mrb[0].mxu0
        %1162 = vdwg.mxu0
        %v1163 = vpack.c.bf16 %v1100, %v1096
        %v1164 = vpack.c.bf16 %v1102, %v1098
        %v1165 = vpack.c.bf16 %v1152, %v1149
        %v1166 = vpack.c.bf16 %v1110, %v1106
        %v1167 = vpack.c.bf16 %v1112, %v1108
        %v1168 = vpack.c.bf16 %v1160, %v1157
        %v1169 = vld [vmem:[%s3] sm:$0x1]
        %v1171 = vlaneseq
        %v1172 = vshrl.u32 %v1171, 7
        %v1173 = vsub.s32 0, %v1172
        %v1174 = vrot.slane %v1169, %v1173
        %vm1176 = vcmask 261120
        %v1178 = vsel %vm1176, %v1163, 0
        %v1181 = vsel %vm1176, %v1164, 0
        %1183 = vmatprep.subr.bf16.mxu0 0
        %1184 = vmatpush1.bf16.xpose.msra.mxu0 %v1181
        %1185 = vmatprep.subr.bf16.mxu0 0
        %1186 = vmatpush1.bf16.xpose.msra.mxu0 0
        %1187 = vmatprep.subr.bf16.mxu0 0
        %1188 = vmatpush1.bf16.xpose.msra.mxu0 0
        %1189 = vmatprep.subr.bf16.mxu0 0
        %1190 = vmatpush1.bf16.xpose.msra.mxu0 0
        %1191 = vmatprep.subr.bf16.mxu0 0
        %1192 = vmatpush1.bf16.xpose.msra.mxu0 0
        %1193 = vmatprep.subr.bf16.mxu0 0
        %1194 = vmatpush1.bf16.xpose.msra.mxu0 0
        %1195 = vmatprep.subr.bf16.mxu0 0
        %1196 = vmatpush1.bf16.xpose.msra.mxu0 0
        %1197 = vmatprep.subr.bf16.mxu0 0
        %1198 = vmatpush1.bf16.xpose.msra.mxu0 0
        %1199 = vmatprep.subr.bf16.mxu0 0
        %1200 = vmatpush1.bf16.xpose.msra.mxu0 0
        %1201 = vmatprep.subr.bf16.mxu0 0
        %1202 = vmatpush1.bf16.xpose.msra.mxu0 0
        %1203 = vmatprep.subr.bf16.mxu0 0
        %1204 = vmatpush1.bf16.xpose.msra.mxu0 0
        %1205 = vmatprep.subr.bf16.mxu0 0
        %1206 = vmatpush1.bf16.xpose.msra.mxu0 0
        %1207 = vmatprep.subr.bf16.mxu0 0
        %1208 = vmatpush1.bf16.xpose.msra.mxu0 0
        %1209 = vmatprep.subr.bf16.mxu0 0
        %1210 = vmatpush1.bf16.xpose.msra.mxu0 0
        %1211 = vmatprep.subr.bf16.mxu0 0
        %1212 = vmatpush1.bf16.xpose.msra.mxu0 0
        %1213 = vmatprep.subr.bf16.mxu0 0
        %1214 = vmatpush1.bf16.xpose.msra.mxu0 0
        %1215 = vmatprep.mubr.bf16.mxu0 0
        %1216 = vmatmul.mubr.bf16.gmra.mrb[0].mxu0 %v1178
        %v1217 = vpop.f32.mrb[0].mxu0
        %v1218 = vadd.f32 %v1174, %v1217
        %v1219 = vpop.f32.mrb[0].mxu0
        %v1220 = vpop.f32.mrb[0].mxu0
        %v1221 = vadd.f32 %v1174, %v1220
        %v1222 = vpop.f32.mrb[0].mxu0
        %1223 = vdwg.mxu0
        %vm1224 = vcmask 130048
        %v1225 = vsel %vm1224, %v1218, -inf
        %1226 = vmax.xlane.f32.xlu0 %v1225
        %v1227 = vpop.xlane.xlu0 %1226
        %v1228 = vsel %vm1224, %v1221, -inf
        %1229 = vmax.xlane.f32.xlu0 %v1228
        %v1230 = vpop.xlane.xlu0 %1229
        %v1231 = vsub.f32 %v1218, %v1227
        %v1232 = vsub.f32 %v1221, %v1230
        %v1233 = vmul.f32 %v1231, 1.442695
        %v1234 = vpow.pop %v1233
        %v1235 = vmul.f32 %v1232, 1.442695
        %v1236 = vpow.pop %v1235
        %v1237 = vsel %vm1224, %v1234, 0.0
        %1238 = vadd.xlane.f32.xlu0 %v1237
        %v1239 = vpop.xlane.xlu0 %1238
        %v1240 = vsel %vm1224, %v1236, 0.0
        %1241 = vadd.xlane.f32.xlu0 %v1240
        %v1242 = vpop.xlane.xlu0 %1241
        %v1243 = vrcp.pop %v1239
        %v1244 = vrcp.pop %v1242
        %v1245 = vmul.f32 %v1234, %v1243
        %v1246 = vmul.f32 %v1236, %v1244
        %v1247 = vpack.c.bf16 %v1246, %v1245
        %v1249 = vsel %vm1224, %v1247, 0
        %1251 = vmatprep.subr.bf16.mxu0 0
        %1252 = vmatpush1.bf16.msra.mxu0 %v1165
        %1253 = vmatprep.subr.bf16.mxu0 0
        %1254 = vmatpush1.bf16.msra.mxu0 0
        %1255 = vmatprep.subr.bf16.mxu0 0
        %1256 = vmatpush1.bf16.msra.mxu0 0
        %1257 = vmatprep.subr.bf16.mxu0 0
        %1258 = vmatpush1.bf16.msra.mxu0 0
        %1259 = vmatprep.subr.bf16.mxu0 0
        %1260 = vmatpush1.bf16.msra.mxu0 0
        %1261 = vmatprep.subr.bf16.mxu0 0
        %1262 = vmatpush1.bf16.msra.mxu0 0
        %1263 = vmatprep.subr.bf16.mxu0 0
        %1264 = vmatpush1.bf16.msra.mxu0 0
        %1265 = vmatprep.subr.bf16.mxu0 0
        %1266 = vmatpush1.bf16.msra.mxu0 0
        %1267 = vmatprep.subr.bf16.mxu0 0
        %1268 = vmatpush1.bf16.msra.mxu0 0
        %1269 = vmatprep.subr.bf16.mxu0 0
        %1270 = vmatpush1.bf16.msra.mxu0 0
        %1271 = vmatprep.subr.bf16.mxu0 0
        %1272 = vmatpush1.bf16.msra.mxu0 0
        %1273 = vmatprep.subr.bf16.mxu0 0
        %1274 = vmatpush1.bf16.msra.mxu0 0
        %1275 = vmatprep.subr.bf16.mxu0 0
        %1276 = vmatpush1.bf16.msra.mxu0 0
        %1277 = vmatprep.subr.bf16.mxu0 0
        %1278 = vmatpush1.bf16.msra.mxu0 0
        %1279 = vmatprep.subr.bf16.mxu0 0
        %1280 = vmatpush1.bf16.msra.mxu0 0
        %1281 = vmatprep.subr.bf16.mxu0 0
        %1282 = vmatpush1.bf16.msra.mxu0 0
        %1283 = vmatprep.mubr.bf16.mxu0 0
        %1284 = vmatmul.mubr.bf16.gmra.mrb[0].mxu0 %v1249
        %v1285 = vpop.f32.mrb[0].mxu0
        %v1286 = vadd.f32 0.0, %v1285
        %v1287 = vpop.f32.mrb[0].mxu0
        %v1288 = vpop.f32.mrb[0].mxu0
        %v1289 = vadd.f32 0.0, %v1288
        %v1290 = vpop.f32.mrb[0].mxu0
        %1291 = vdwg.mxu0
        %v1292 = vpack.c.bf16 %v1289, %v1286
        %1294 = vrot.lane.b32.xlu0 %v1163, 96
        %v1295 = vpop.permute.xlu0 %1294
        %1297 = vrot.lane.b32.xlu0 %v1164, 96
        %v1298 = vpop.permute.xlu0 %1297
        %v1300 = vsel %vm1176, %v1295, 0
        %v1303 = vsel %vm1176, %v1298, 0
        %1305 = vmatprep.subr.bf16.mxu0 0
        %1306 = vmatpush1.bf16.xpose.msra.mxu0 %v1303
        %1307 = vmatprep.subr.bf16.mxu0 0
        %1308 = vmatpush1.bf16.xpose.msra.mxu0 0
        %1309 = vmatprep.subr.bf16.mxu0 0
        %1310 = vmatpush1.bf16.xpose.msra.mxu0 0
        %1311 = vmatprep.subr.bf16.mxu0 0
        %1312 = vmatpush1.bf16.xpose.msra.mxu0 0
        %1313 = vmatprep.subr.bf16.mxu0 0
        %1314 = vmatpush1.bf16.xpose.msra.mxu0 0
        %1315 = vmatprep.subr.bf16.mxu0 0
        %1316 = vmatpush1.bf16.xpose.msra.mxu0 0
        %1317 = vmatprep.subr.bf16.mxu0 0
        %1318 = vmatpush1.bf16.xpose.msra.mxu0 0
        %1319 = vmatprep.subr.bf16.mxu0 0
        %1320 = vmatpush1.bf16.xpose.msra.mxu0 0
        %1321 = vmatprep.subr.bf16.mxu0 0
        %1322 = vmatpush1.bf16.xpose.msra.mxu0 0
        %1323 = vmatprep.subr.bf16.mxu0 0
        %1324 = vmatpush1.bf16.xpose.msra.mxu0 0
        %1325 = vmatprep.subr.bf16.mxu0 0
        %1326 = vmatpush1.bf16.xpose.msra.mxu0 0
        %1327 = vmatprep.subr.bf16.mxu0 0
        %1328 = vmatpush1.bf16.xpose.msra.mxu0 0
        %1329 = vmatprep.subr.bf16.mxu0 0
        %1330 = vmatpush1.bf16.xpose.msra.mxu0 0
        %1331 = vmatprep.subr.bf16.mxu0 0
        %1332 = vmatpush1.bf16.xpose.msra.mxu0 0
        %1333 = vmatprep.subr.bf16.mxu0 0
        %1334 = vmatpush1.bf16.xpose.msra.mxu0 0
        %1335 = vmatprep.subr.bf16.mxu0 0
        %1336 = vmatpush1.bf16.xpose.msra.mxu0 0
        %1337 = vmatprep.mubr.bf16.mxu0 0
        %1338 = vmatmul.mubr.bf16.gmra.mrb[0].mxu0 %v1300
        %v1339 = vpop.f32.mrb[0].mxu0
        %v1340 = vadd.f32 %v1174, %v1339
        %v1341 = vpop.f32.mrb[0].mxu0
        %v1342 = vpop.f32.mrb[0].mxu0
        %v1343 = vadd.f32 %v1174, %v1342
        %v1344 = vpop.f32.mrb[0].mxu0
        %1345 = vdwg.mxu0
        %v1346 = vsel %vm1224, %v1340, -inf
        %1347 = vmax.xlane.f32.xlu0 %v1346
        %v1348 = vpop.xlane.xlu0 %1347
        %v1349 = vsel %vm1224, %v1343, -inf
        %1350 = vmax.xlane.f32.xlu0 %v1349
        %v1351 = vpop.xlane.xlu0 %1350
        %v1352 = vsub.f32 %v1340, %v1348
        %v1353 = vsub.f32 %v1343, %v1351
        %v1354 = vmul.f32 %v1352, 1.442695
        %v1355 = vpow.pop %v1354
        %v1356 = vmul.f32 %v1353, 1.442695
        %v1357 = vpow.pop %v1356
        %v1358 = vsel %vm1224, %v1355, 0.0
        %1359 = vadd.xlane.f32.xlu0 %v1358
        %v1360 = vpop.xlane.xlu0 %1359
        %v1361 = vsel %vm1224, %v1357, 0.0
        %1362 = vadd.xlane.f32.xlu0 %v1361
        %v1363 = vpop.xlane.xlu0 %1362
        %v1364 = vrcp.pop %v1360
        %v1365 = vrcp.pop %v1363
        %v1366 = vmul.f32 %v1355, %v1364
        %v1367 = vmul.f32 %v1357, %v1365
        %v1368 = vpack.c.bf16 %v1367, %v1366
        %1370 = vrot.lane.b32.xlu0 %v1165, 96
        %v1371 = vpop.permute.xlu0 %1370
        %v1374 = vsel %vm1224, %v1368, 0
        %1376 = vmatprep.subr.bf16.mxu0 0
        %1377 = vmatpush1.bf16.msra.mxu0 %v1371
        %1378 = vmatprep.subr.bf16.mxu0 0
        %1379 = vmatpush1.bf16.msra.mxu0 0
        %1380 = vmatprep.subr.bf16.mxu0 0
        %1381 = vmatpush1.bf16.msra.mxu0 0
        %1382 = vmatprep.subr.bf16.mxu0 0
        %1383 = vmatpush1.bf16.msra.mxu0 0
        %1384 = vmatprep.subr.bf16.mxu0 0
        %1385 = vmatpush1.bf16.msra.mxu0 0
        %1386 = vmatprep.subr.bf16.mxu0 0
        %1387 = vmatpush1.bf16.msra.mxu0 0
        %1388 = vmatprep.subr.bf16.mxu0 0
        %1389 = vmatpush1.bf16.msra.mxu0 0
        %1390 = vmatprep.subr.bf16.mxu0 0
        %1391 = vmatpush1.bf16.msra.mxu0 0
        %1392 = vmatprep.subr.bf16.mxu0 0
        %1393 = vmatpush1.bf16.msra.mxu0 0
        %1394 = vmatprep.subr.bf16.mxu0 0
        %1395 = vmatpush1.bf16.msra.mxu0 0
        %1396 = vmatprep.subr.bf16.mxu0 0
        %1397 = vmatpush1.bf16.msra.mxu0 0
        %1398 = vmatprep.subr.bf16.mxu0 0
        %1399 = vmatpush1.bf16.msra.mxu0 0
        %1400 = vmatprep.subr.bf16.mxu0 0
        %1401 = vmatpush1.bf16.msra.mxu0 0
        %1402 = vmatprep.subr.bf16.mxu0 0
        %1403 = vmatpush1.bf16.msra.mxu0 0
        %1404 = vmatprep.subr.bf16.mxu0 0
        %1405 = vmatpush1.bf16.msra.mxu0 0
        %1406 = vmatprep.subr.bf16.mxu0 0
        %1407 = vmatpush1.bf16.msra.mxu0 0
        %1408 = vmatprep.mubr.bf16.mxu0 0
        %1409 = vmatmul.mubr.bf16.gmra.mrb[0].mxu0 %v1374
        %v1410 = vpop.f32.mrb[0].mxu0
        %v1411 = vadd.f32 0.0, %v1410
        %v1412 = vpop.f32.mrb[0].mxu0
        %v1413 = vpop.f32.mrb[0].mxu0
        %v1414 = vadd.f32 0.0, %v1413
        %v1415 = vpop.f32.mrb[0].mxu0
        %1416 = vdwg.mxu0
        %v1417 = vpack.c.bf16 %v1414, %v1411
        %1418 = vrot.lane.b32.xlu0 %v1163, 64
        %v1419 = vpop.permute.xlu0 %1418
        %1420 = vrot.lane.b32.xlu0 %v1164, 64
        %v1421 = vpop.permute.xlu0 %1420
        %v1423 = vsel %vm1176, %v1419, 0
        %v1426 = vsel %vm1176, %v1421, 0
        %1428 = vmatprep.subr.bf16.mxu0 0
        %1429 = vmatpush1.bf16.xpose.msra.mxu0 %v1426
        %1430 = vmatprep.subr.bf16.mxu0 0
        %1431 = vmatpush1.bf16.xpose.msra.mxu0 0
        %1432 = vmatprep.subr.bf16.mxu0 0
        %1433 = vmatpush1.bf16.xpose.msra.mxu0 0
        %1434 = vmatprep.subr.bf16.mxu0 0
        %1435 = vmatpush1.bf16.xpose.msra.mxu0 0
        %1436 = vmatprep.subr.bf16.mxu0 0
        %1437 = vmatpush1.bf16.xpose.msra.mxu0 0
        %1438 = vmatprep.subr.bf16.mxu0 0
        %1439 = vmatpush1.bf16.xpose.msra.mxu0 0
        %1440 = vmatprep.subr.bf16.mxu0 0
        %1441 = vmatpush1.bf16.xpose.msra.mxu0 0
        %1442 = vmatprep.subr.bf16.mxu0 0
        %1443 = vmatpush1.bf16.xpose.msra.mxu0 0
        %1444 = vmatprep.subr.bf16.mxu0 0
        %1445 = vmatpush1.bf16.xpose.msra.mxu0 0
        %1446 = vmatprep.subr.bf16.mxu0 0
        %1447 = vmatpush1.bf16.xpose.msra.mxu0 0
        %1448 = vmatprep.subr.bf16.mxu0 0
        %1449 = vmatpush1.bf16.xpose.msra.mxu0 0
        %1450 = vmatprep.subr.bf16.mxu0 0
        %1451 = vmatpush1.bf16.xpose.msra.mxu0 0
        %1452 = vmatprep.subr.bf16.mxu0 0
        %1453 = vmatpush1.bf16.xpose.msra.mxu0 0
        %1454 = vmatprep.subr.bf16.mxu0 0
        %1455 = vmatpush1.bf16.xpose.msra.mxu0 0
        %1456 = vmatprep.subr.bf16.mxu0 0
        %1457 = vmatpush1.bf16.xpose.msra.mxu0 0
        %1458 = vmatprep.subr.bf16.mxu0 0
        %1459 = vmatpush1.bf16.xpose.msra.mxu0 0
        %1460 = vmatprep.mubr.bf16.mxu0 0
        %1461 = vmatmul.mubr.bf16.gmra.mrb[0].mxu0 %v1423
        %v1462 = vpop.f32.mrb[0].mxu0
        %v1463 = vadd.f32 %v1174, %v1462
        %v1464 = vpop.f32.mrb[0].mxu0
        %v1465 = vpop.f32.mrb[0].mxu0
        %v1466 = vadd.f32 %v1174, %v1465
        %v1467 = vpop.f32.mrb[0].mxu0
        %1468 = vdwg.mxu0
        %v1469 = vsel %vm1224, %v1463, -inf
        %1470 = vmax.xlane.f32.xlu0 %v1469
        %v1471 = vpop.xlane.xlu0 %1470
        %v1472 = vsel %vm1224, %v1466, -inf
        %1473 = vmax.xlane.f32.xlu0 %v1472
        %v1474 = vpop.xlane.xlu0 %1473
        %v1475 = vsub.f32 %v1463, %v1471
        %v1476 = vsub.f32 %v1466, %v1474
        %v1477 = vmul.f32 %v1475, 1.442695
        %v1478 = vpow.pop %v1477
        %v1479 = vmul.f32 %v1476, 1.442695
        %v1480 = vpow.pop %v1479
        %v1481 = vsel %vm1224, %v1478, 0.0
        %1482 = vadd.xlane.f32.xlu0 %v1481
        %v1483 = vpop.xlane.xlu0 %1482
        %v1484 = vsel %vm1224, %v1480, 0.0
        %1485 = vadd.xlane.f32.xlu0 %v1484
        %v1486 = vpop.xlane.xlu0 %1485
        %v1487 = vrcp.pop %v1483
        %v1488 = vrcp.pop %v1486
        %v1489 = vmul.f32 %v1478, %v1487
        %v1490 = vmul.f32 %v1480, %v1488
        %v1491 = vpack.c.bf16 %v1490, %v1489
        %1492 = vrot.lane.b32.xlu0 %v1165, 64
        %v1493 = vpop.permute.xlu0 %1492
        %v1496 = vsel %vm1224, %v1491, 0
        %1498 = vmatprep.subr.bf16.mxu0 0
        %1499 = vmatpush1.bf16.msra.mxu0 %v1493
        %1500 = vmatprep.subr.bf16.mxu0 0
        %1501 = vmatpush1.bf16.msra.mxu0 0
        %1502 = vmatprep.subr.bf16.mxu0 0
        %1503 = vmatpush1.bf16.msra.mxu0 0
        %1504 = vmatprep.subr.bf16.mxu0 0
        %1505 = vmatpush1.bf16.msra.mxu0 0
        %1506 = vmatprep.subr.bf16.mxu0 0
        %1507 = vmatpush1.bf16.msra.mxu0 0
        %1508 = vmatprep.subr.bf16.mxu0 0
        %1509 = vmatpush1.bf16.msra.mxu0 0
        %1510 = vmatprep.subr.bf16.mxu0 0
        %1511 = vmatpush1.bf16.msra.mxu0 0
        %1512 = vmatprep.subr.bf16.mxu0 0
        %1513 = vmatpush1.bf16.msra.mxu0 0
        %1514 = vmatprep.subr.bf16.mxu0 0
        %1515 = vmatpush1.bf16.msra.mxu0 0
        %1516 = vmatprep.subr.bf16.mxu0 0
        %1517 = vmatpush1.bf16.msra.mxu0 0
        %1518 = vmatprep.subr.bf16.mxu0 0
        %1519 = vmatpush1.bf16.msra.mxu0 0
        %1520 = vmatprep.subr.bf16.mxu0 0
        %1521 = vmatpush1.bf16.msra.mxu0 0
        %1522 = vmatprep.subr.bf16.mxu0 0
        %1523 = vmatpush1.bf16.msra.mxu0 0
        %1524 = vmatprep.subr.bf16.mxu0 0
        %1525 = vmatpush1.bf16.msra.mxu0 0
        %1526 = vmatprep.subr.bf16.mxu0 0
        %1527 = vmatpush1.bf16.msra.mxu0 0
        %1528 = vmatprep.subr.bf16.mxu0 0
        %1529 = vmatpush1.bf16.msra.mxu0 0
        %1530 = vmatprep.mubr.bf16.mxu0 0
        %1531 = vmatmul.mubr.bf16.gmra.mrb[0].mxu0 %v1496
        %v1532 = vpop.f32.mrb[0].mxu0
        %v1533 = vadd.f32 0.0, %v1532
        %v1534 = vpop.f32.mrb[0].mxu0
        %v1535 = vpop.f32.mrb[0].mxu0
        %v1536 = vadd.f32 0.0, %v1535
        %v1537 = vpop.f32.mrb[0].mxu0
        %1538 = vdwg.mxu0
        %v1539 = vpack.c.bf16 %v1536, %v1533
        %1540 = vrot.lane.b32.xlu0 %v1163, 32
        %v1541 = vpop.permute.xlu0 %1540
        %1542 = vrot.lane.b32.xlu0 %v1164, 32
        %v1543 = vpop.permute.xlu0 %1542
        %v1545 = vsel %vm1176, %v1541, 0
        %v1548 = vsel %vm1176, %v1543, 0
        %1550 = vmatprep.subr.bf16.mxu0 0
        %1551 = vmatpush1.bf16.xpose.msra.mxu0 %v1548
        %1552 = vmatprep.subr.bf16.mxu0 0
        %1553 = vmatpush1.bf16.xpose.msra.mxu0 0
        %1554 = vmatprep.subr.bf16.mxu0 0
        %1555 = vmatpush1.bf16.xpose.msra.mxu0 0
        %1556 = vmatprep.subr.bf16.mxu0 0
        %1557 = vmatpush1.bf16.xpose.msra.mxu0 0
        %1558 = vmatprep.subr.bf16.mxu0 0
        %1559 = vmatpush1.bf16.xpose.msra.mxu0 0
        %1560 = vmatprep.subr.bf16.mxu0 0
        %1561 = vmatpush1.bf16.xpose.msra.mxu0 0
        %1562 = vmatprep.subr.bf16.mxu0 0
        %1563 = vmatpush1.bf16.xpose.msra.mxu0 0
        %1564 = vmatprep.subr.bf16.mxu0 0
        %1565 = vmatpush1.bf16.xpose.msra.mxu0 0
        %1566 = vmatprep.subr.bf16.mxu0 0
        %1567 = vmatpush1.bf16.xpose.msra.mxu0 0
        %1568 = vmatprep.subr.bf16.mxu0 0
        %1569 = vmatpush1.bf16.xpose.msra.mxu0 0
        %1570 = vmatprep.subr.bf16.mxu0 0
        %1571 = vmatpush1.bf16.xpose.msra.mxu0 0
        %1572 = vmatprep.subr.bf16.mxu0 0
        %1573 = vmatpush1.bf16.xpose.msra.mxu0 0
        %1574 = vmatprep.subr.bf16.mxu0 0
        %1575 = vmatpush1.bf16.xpose.msra.mxu0 0
        %1576 = vmatprep.subr.bf16.mxu0 0
        %1577 = vmatpush1.bf16.xpose.msra.mxu0 0
        %1578 = vmatprep.subr.bf16.mxu0 0
        %1579 = vmatpush1.bf16.xpose.msra.mxu0 0
        %1580 = vmatprep.subr.bf16.mxu0 0
        %1581 = vmatpush1.bf16.xpose.msra.mxu0 0
        %1582 = vmatprep.mubr.bf16.mxu0 0
        %1583 = vmatmul.mubr.bf16.gmra.mrb[0].mxu0 %v1545
        %v1584 = vpop.f32.mrb[0].mxu0
        %v1585 = vadd.f32 %v1174, %v1584
        %v1586 = vpop.f32.mrb[0].mxu0
        %v1587 = vpop.f32.mrb[0].mxu0
        %v1588 = vadd.f32 %v1174, %v1587
        %v1589 = vpop.f32.mrb[0].mxu0
        %1590 = vdwg.mxu0
        %v1591 = vsel %vm1224, %v1585, -inf
        %1592 = vmax.xlane.f32.xlu0 %v1591
        %v1593 = vpop.xlane.xlu0 %1592
        %v1594 = vsel %vm1224, %v1588, -inf
        %1595 = vmax.xlane.f32.xlu0 %v1594
        %v1596 = vpop.xlane.xlu0 %1595
        %v1597 = vsub.f32 %v1585, %v1593
        %v1598 = vsub.f32 %v1588, %v1596
        %v1599 = vmul.f32 %v1597, 1.442695
        %v1600 = vpow.pop %v1599
        %v1601 = vmul.f32 %v1598, 1.442695
        %v1602 = vpow.pop %v1601
        %v1603 = vsel %vm1224, %v1600, 0.0
        %1604 = vadd.xlane.f32.xlu0 %v1603
        %v1605 = vpop.xlane.xlu0 %1604
        %v1606 = vsel %vm1224, %v1602, 0.0
        %1607 = vadd.xlane.f32.xlu0 %v1606
        %v1608 = vpop.xlane.xlu0 %1607
        %v1609 = vrcp.pop %v1605
        %v1610 = vrcp.pop %v1608
        %v1611 = vmul.f32 %v1600, %v1609
        %v1612 = vmul.f32 %v1602, %v1610
        %v1613 = vpack.c.bf16 %v1612, %v1611
        %1614 = vrot.lane.b32.xlu0 %v1165, 32
        %v1615 = vpop.permute.xlu0 %1614
        %v1618 = vsel %vm1224, %v1613, 0
        %1620 = vmatprep.subr.bf16.mxu0 0
        %1621 = vmatpush1.bf16.msra.mxu0 %v1615
        %1622 = vmatprep.subr.bf16.mxu0 0
        %1623 = vmatpush1.bf16.msra.mxu0 0
        %1624 = vmatprep.subr.bf16.mxu0 0
        %1625 = vmatpush1.bf16.msra.mxu0 0
        %1626 = vmatprep.subr.bf16.mxu0 0
        %1627 = vmatpush1.bf16.msra.mxu0 0
        %1628 = vmatprep.subr.bf16.mxu0 0
        %1629 = vmatpush1.bf16.msra.mxu0 0
        %1630 = vmatprep.subr.bf16.mxu0 0
        %1631 = vmatpush1.bf16.msra.mxu0 0
        %1632 = vmatprep.subr.bf16.mxu0 0
        %1633 = vmatpush1.bf16.msra.mxu0 0
        %1634 = vmatprep.subr.bf16.mxu0 0
        %1635 = vmatpush1.bf16.msra.mxu0 0
        %1636 = vmatprep.subr.bf16.mxu0 0
        %1637 = vmatpush1.bf16.msra.mxu0 0
        %1638 = vmatprep.subr.bf16.mxu0 0
        %1639 = vmatpush1.bf16.msra.mxu0 0
        %1640 = vmatprep.subr.bf16.mxu0 0
        %1641 = vmatpush1.bf16.msra.mxu0 0
        %1642 = vmatprep.subr.bf16.mxu0 0
        %1643 = vmatpush1.bf16.msra.mxu0 0
        %1644 = vmatprep.subr.bf16.mxu0 0
        %1645 = vmatpush1.bf16.msra.mxu0 0
        %1646 = vmatprep.subr.bf16.mxu0 0
        %1647 = vmatpush1.bf16.msra.mxu0 0
        %1648 = vmatprep.subr.bf16.mxu0 0
        %1649 = vmatpush1.bf16.msra.mxu0 0
        %1650 = vmatprep.subr.bf16.mxu0 0
        %1651 = vmatpush1.bf16.msra.mxu0 0
        %1652 = vmatprep.mubr.bf16.mxu0 0
        %1653 = vmatmul.mubr.bf16.gmra.mrb[0].mxu0 %v1618
        %v1654 = vpop.f32.mrb[0].mxu0
        %v1655 = vadd.f32 0.0, %v1654
        %v1656 = vpop.f32.mrb[0].mxu0
        %v1657 = vpop.f32.mrb[0].mxu0
        %v1658 = vadd.f32 0.0, %v1657
        %v1659 = vpop.f32.mrb[0].mxu0
        %1660 = vdwg.mxu0
        %v1661 = vpack.c.bf16 %v1658, %v1655
        %1663 = vrot.lane.b32.xlu0 %v1417, 32
        %v1664 = vpop.permute.xlu0 %1663
        %1666 = vrot.lane.b32.xlu0 %v1539, 64
        %v1667 = vpop.permute.xlu0 %1666
        %1669 = vrot.lane.b32.xlu0 %v1661, 96
        %v1670 = vpop.permute.xlu0 %1669
        %v1673 = vsel %vm1176, %v1292, %v1664
        %vm1674 = vcmask 523264
        %v1676 = vsel %vm1674, %v1673, %v1667
        %vm1677 = vcmask 785408
        %v1679 = vsel %vm1677, %v1676, %v1670
        %s1681 = scalar_lea.vmem %s3, 1
        %v1682 = vld [vmem:[%s1681] sm:$0x1]
        %v1684 = vlaneseq
        %v1685 = vshrl.u32 %v1684, 7
        %v1686 = vsub.s32 0, %v1685
        %v1687 = vrot.slane %v1682, %v1686
        %v1690 = vsel %vm1176, %v1166, 0
        %v1693 = vsel %vm1176, %v1167, 0
        %1695 = vmatprep.subr.bf16.mxu0 0
        %1696 = vmatpush1.bf16.xpose.msra.mxu0 %v1693
        %1697 = vmatprep.subr.bf16.mxu0 0
        %1698 = vmatpush1.bf16.xpose.msra.mxu0 0
        %1699 = vmatprep.subr.bf16.mxu0 0
        %1700 = vmatpush1.bf16.xpose.msra.mxu0 0
        %1701 = vmatprep.subr.bf16.mxu0 0
        %1702 = vmatpush1.bf16.xpose.msra.mxu0 0
        %1703 = vmatprep.subr.bf16.mxu0 0
        %1704 = vmatpush1.bf16.xpose.msra.mxu0 0
        %1705 = vmatprep.subr.bf16.mxu0 0
        %1706 = vmatpush1.bf16.xpose.msra.mxu0 0
        %1707 = vmatprep.subr.bf16.mxu0 0
        %1708 = vmatpush1.bf16.xpose.msra.mxu0 0
        %1709 = vmatprep.subr.bf16.mxu0 0
        %1710 = vmatpush1.bf16.xpose.msra.mxu0 0
        %1711 = vmatprep.subr.bf16.mxu0 0
        %1712 = vmatpush1.bf16.xpose.msra.mxu0 0
        %1713 = vmatprep.subr.bf16.mxu0 0
        %1714 = vmatpush1.bf16.xpose.msra.mxu0 0
        %1715 = vmatprep.subr.bf16.mxu0 0
        %1716 = vmatpush1.bf16.xpose.msra.mxu0 0
        %1717 = vmatprep.subr.bf16.mxu0 0
        %1718 = vmatpush1.bf16.xpose.msra.mxu0 0
        %1719 = vmatprep.subr.bf16.mxu0 0
        %1720 = vmatpush1.bf16.xpose.msra.mxu0 0
        %1721 = vmatprep.subr.bf16.mxu0 0
        %1722 = vmatpush1.bf16.xpose.msra.mxu0 0
        %1723 = vmatprep.subr.bf16.mxu0 0
        %1724 = vmatpush1.bf16.xpose.msra.mxu0 0
        %1725 = vmatprep.subr.bf16.mxu0 0
        %1726 = vmatpush1.bf16.xpose.msra.mxu0 0
        %1727 = vmatprep.mubr.bf16.mxu0 0
        %1728 = vmatmul.mubr.bf16.gmra.mrb[0].mxu0 %v1690
        %v1729 = vpop.f32.mrb[0].mxu0
        %v1730 = vadd.f32 %v1687, %v1729
        %v1731 = vpop.f32.mrb[0].mxu0
        %v1732 = vpop.f32.mrb[0].mxu0
        %v1733 = vadd.f32 %v1687, %v1732
        %v1734 = vpop.f32.mrb[0].mxu0
        %1735 = vdwg.mxu0
        %v1736 = vsel %vm1224, %v1730, -inf
        %1737 = vmax.xlane.f32.xlu0 %v1736
        %v1738 = vpop.xlane.xlu0 %1737
        %v1739 = vsel %vm1224, %v1733, -inf
        %1740 = vmax.xlane.f32.xlu0 %v1739
        %v1741 = vpop.xlane.xlu0 %1740
        %v1742 = vsub.f32 %v1730, %v1738
        %v1743 = vsub.f32 %v1733, %v1741
        %v1744 = vmul.f32 %v1742, 1.442695
        %v1745 = vpow.pop %v1744
        %v1746 = vmul.f32 %v1743, 1.442695
        %v1747 = vpow.pop %v1746
        %v1748 = vsel %vm1224, %v1745, 0.0
        %1749 = vadd.xlane.f32.xlu0 %v1748
        %v1750 = vpop.xlane.xlu0 %1749
        %v1751 = vsel %vm1224, %v1747, 0.0
        %1752 = vadd.xlane.f32.xlu0 %v1751
        %v1753 = vpop.xlane.xlu0 %1752
        %v1754 = vrcp.pop %v1750
        %v1755 = vrcp.pop %v1753
        %v1756 = vmul.f32 %v1745, %v1754
        %v1757 = vmul.f32 %v1747, %v1755
        %v1758 = vpack.c.bf16 %v1757, %v1756
        %v1760 = vsel %vm1224, %v1758, 0
        %1762 = vmatprep.subr.bf16.mxu0 0
        %1763 = vmatpush1.bf16.msra.mxu0 %v1168
        %1764 = vmatprep.subr.bf16.mxu0 0
        %1765 = vmatpush1.bf16.msra.mxu0 0
        %1766 = vmatprep.subr.bf16.mxu0 0
        %1767 = vmatpush1.bf16.msra.mxu0 0
        %1768 = vmatprep.subr.bf16.mxu0 0
        %1769 = vmatpush1.bf16.msra.mxu0 0
        %1770 = vmatprep.subr.bf16.mxu0 0
        %1771 = vmatpush1.bf16.msra.mxu0 0
        %1772 = vmatprep.subr.bf16.mxu0 0
        %1773 = vmatpush1.bf16.msra.mxu0 0
        %1774 = vmatprep.subr.bf16.mxu0 0
        %1775 = vmatpush1.bf16.msra.mxu0 0
        %1776 = vmatprep.subr.bf16.mxu0 0
        %1777 = vmatpush1.bf16.msra.mxu0 0
        %1778 = vmatprep.subr.bf16.mxu0 0
        %1779 = vmatpush1.bf16.msra.mxu0 0
        %1780 = vmatprep.subr.bf16.mxu0 0
        %1781 = vmatpush1.bf16.msra.mxu0 0
        %1782 = vmatprep.subr.bf16.mxu0 0
        %1783 = vmatpush1.bf16.msra.mxu0 0
        %1784 = vmatprep.subr.bf16.mxu0 0
        %1785 = vmatpush1.bf16.msra.mxu0 0
        %1786 = vmatprep.subr.bf16.mxu0 0
        %1787 = vmatpush1.bf16.msra.mxu0 0
        %1788 = vmatprep.subr.bf16.mxu0 0
        %1789 = vmatpush1.bf16.msra.mxu0 0
        %1790 = vmatprep.subr.bf16.mxu0 0
        %1791 = vmatpush1.bf16.msra.mxu0 0
        %1792 = vmatprep.subr.bf16.mxu0 0
        %1793 = vmatpush1.bf16.msra.mxu0 0
        %1794 = vmatprep.mubr.bf16.mxu0 0
        %1795 = vmatmul.mubr.bf16.gmra.mrb[0].mxu0 %v1760
        %v1796 = vpop.f32.mrb[0].mxu0
        %v1797 = vadd.f32 0.0, %v1796
        %v1798 = vpop.f32.mrb[0].mxu0
        %v1799 = vpop.f32.mrb[0].mxu0
        %v1800 = vadd.f32 0.0, %v1799
        %v1801 = vpop.f32.mrb[0].mxu0
        %1802 = vdwg.mxu0
        %v1803 = vpack.c.bf16 %v1800, %v1797
        %1805 = vrot.lane.b32.xlu0 %v1166, 96
        %v1806 = vpop.permute.xlu0 %1805
        %1808 = vrot.lane.b32.xlu0 %v1167, 96
        %v1809 = vpop.permute.xlu0 %1808
        %v1811 = vsel %vm1176, %v1806, 0
        %v1814 = vsel %vm1176, %v1809, 0
        %1816 = vmatprep.subr.bf16.mxu0 0
        %1817 = vmatpush1.bf16.xpose.msra.mxu0 %v1814
        %1818 = vmatprep.subr.bf16.mxu0 0
        %1819 = vmatpush1.bf16.xpose.msra.mxu0 0
        %1820 = vmatprep.subr.bf16.mxu0 0
        %1821 = vmatpush1.bf16.xpose.msra.mxu0 0
        %1822 = vmatprep.subr.bf16.mxu0 0
        %1823 = vmatpush1.bf16.xpose.msra.mxu0 0
        %1824 = vmatprep.subr.bf16.mxu0 0
        %1825 = vmatpush1.bf16.xpose.msra.mxu0 0
        %1826 = vmatprep.subr.bf16.mxu0 0
        %1827 = vmatpush1.bf16.xpose.msra.mxu0 0
        %1828 = vmatprep.subr.bf16.mxu0 0
        %1829 = vmatpush1.bf16.xpose.msra.mxu0 0
        %1830 = vmatprep.subr.bf16.mxu0 0
        %1831 = vmatpush1.bf16.xpose.msra.mxu0 0
        %1832 = vmatprep.subr.bf16.mxu0 0
        %1833 = vmatpush1.bf16.xpose.msra.mxu0 0
        %1834 = vmatprep.subr.bf16.mxu0 0
        %1835 = vmatpush1.bf16.xpose.msra.mxu0 0
        %1836 = vmatprep.subr.bf16.mxu0 0
        %1837 = vmatpush1.bf16.xpose.msra.mxu0 0
        %1838 = vmatprep.subr.bf16.mxu0 0
        %1839 = vmatpush1.bf16.xpose.msra.mxu0 0
        %1840 = vmatprep.subr.bf16.mxu0 0
        %1841 = vmatpush1.bf16.xpose.msra.mxu0 0
        %1842 = vmatprep.subr.bf16.mxu0 0
        %1843 = vmatpush1.bf16.xpose.msra.mxu0 0
        %1844 = vmatprep.subr.bf16.mxu0 0
        %1845 = vmatpush1.bf16.xpose.msra.mxu0 0
        %1846 = vmatprep.subr.bf16.mxu0 0
        %1847 = vmatpush1.bf16.xpose.msra.mxu0 0
        %1848 = vmatprep.mubr.bf16.mxu0 0
        %1849 = vmatmul.mubr.bf16.gmra.mrb[0].mxu0 %v1811
        %v1850 = vpop.f32.mrb[0].mxu0
        %v1851 = vadd.f32 %v1687, %v1850
        %v1852 = vpop.f32.mrb[0].mxu0
        %v1853 = vpop.f32.mrb[0].mxu0
        %v1854 = vadd.f32 %v1687, %v1853
        %v1855 = vpop.f32.mrb[0].mxu0
        %1856 = vdwg.mxu0
        %v1857 = vsel %vm1224, %v1851, -inf
        %1858 = vmax.xlane.f32.xlu0 %v1857
        %v1859 = vpop.xlane.xlu0 %1858
        %v1860 = vsel %vm1224, %v1854, -inf
        %1861 = vmax.xlane.f32.xlu0 %v1860
        %v1862 = vpop.xlane.xlu0 %1861
        %v1863 = vsub.f32 %v1851, %v1859
        %v1864 = vsub.f32 %v1854, %v1862
        %v1865 = vmul.f32 %v1863, 1.442695
        %v1866 = vpow.pop %v1865
        %v1867 = vmul.f32 %v1864, 1.442695
        %v1868 = vpow.pop %v1867
        %v1869 = vsel %vm1224, %v1866, 0.0
        %1870 = vadd.xlane.f32.xlu0 %v1869
        %v1871 = vpop.xlane.xlu0 %1870
        %v1872 = vsel %vm1224, %v1868, 0.0
        %1873 = vadd.xlane.f32.xlu0 %v1872
        %v1874 = vpop.xlane.xlu0 %1873
        %v1875 = vrcp.pop %v1871
        %v1876 = vrcp.pop %v1874
        %v1877 = vmul.f32 %v1866, %v1875
        %v1878 = vmul.f32 %v1868, %v1876
        %v1879 = vpack.c.bf16 %v1878, %v1877
        %1881 = vrot.lane.b32.xlu0 %v1168, 96
        %v1882 = vpop.permute.xlu0 %1881
        %v1885 = vsel %vm1224, %v1879, 0
        %1887 = vmatprep.subr.bf16.mxu0 0
        %1888 = vmatpush1.bf16.msra.mxu0 %v1882
        %1889 = vmatprep.subr.bf16.mxu0 0
        %1890 = vmatpush1.bf16.msra.mxu0 0
        %1891 = vmatprep.subr.bf16.mxu0 0
        %1892 = vmatpush1.bf16.msra.mxu0 0
        %1893 = vmatprep.subr.bf16.mxu0 0
        %1894 = vmatpush1.bf16.msra.mxu0 0
        %1895 = vmatprep.subr.bf16.mxu0 0
        %1896 = vmatpush1.bf16.msra.mxu0 0
        %1897 = vmatprep.subr.bf16.mxu0 0
        %1898 = vmatpush1.bf16.msra.mxu0 0
        %1899 = vmatprep.subr.bf16.mxu0 0
        %1900 = vmatpush1.bf16.msra.mxu0 0
        %1901 = vmatprep.subr.bf16.mxu0 0
        %1902 = vmatpush1.bf16.msra.mxu0 0
        %1903 = vmatprep.subr.bf16.mxu0 0
        %1904 = vmatpush1.bf16.msra.mxu0 0
        %1905 = vmatprep.subr.bf16.mxu0 0
        %1906 = vmatpush1.bf16.msra.mxu0 0
        %1907 = vmatprep.subr.bf16.mxu0 0
        %1908 = vmatpush1.bf16.msra.mxu0 0
        %1909 = vmatprep.subr.bf16.mxu0 0
        %1910 = vmatpush1.bf16.msra.mxu0 0
        %1911 = vmatprep.subr.bf16.mxu0 0
        %1912 = vmatpush1.bf16.msra.mxu0 0
        %1913 = vmatprep.subr.bf16.mxu0 0
        %1914 = vmatpush1.bf16.msra.mxu0 0
        %1915 = vmatprep.subr.bf16.mxu0 0
        %1916 = vmatpush1.bf16.msra.mxu0 0
        %1917 = vmatprep.subr.bf16.mxu0 0
        %1918 = vmatpush1.bf16.msra.mxu0 0
        %1919 = vmatprep.mubr.bf16.mxu0 0
        %1920 = vmatmul.mubr.bf16.gmra.mrb[0].mxu0 %v1885
        %v1921 = vpop.f32.mrb[0].mxu0
        %v1922 = vadd.f32 0.0, %v1921
        %v1923 = vpop.f32.mrb[0].mxu0
        %v1924 = vpop.f32.mrb[0].mxu0
        %v1925 = vadd.f32 0.0, %v1924
        %v1926 = vpop.f32.mrb[0].mxu0
        %1927 = vdwg.mxu0
        %v1928 = vpack.c.bf16 %v1925, %v1922
        %1929 = vrot.lane.b32.xlu0 %v1166, 64
        %v1930 = vpop.permute.xlu0 %1929
        %1931 = vrot.lane.b32.xlu0 %v1167, 64
        %v1932 = vpop.permute.xlu0 %1931
        %v1934 = vsel %vm1176, %v1930, 0
        %v1937 = vsel %vm1176, %v1932, 0
        %1939 = vmatprep.subr.bf16.mxu0 0
        %1940 = vmatpush1.bf16.xpose.msra.mxu0 %v1937
        %1941 = vmatprep.subr.bf16.mxu0 0
        %1942 = vmatpush1.bf16.xpose.msra.mxu0 0
        %1943 = vmatprep.subr.bf16.mxu0 0
        %1944 = vmatpush1.bf16.xpose.msra.mxu0 0
        %1945 = vmatprep.subr.bf16.mxu0 0
        %1946 = vmatpush1.bf16.xpose.msra.mxu0 0
        %1947 = vmatprep.subr.bf16.mxu0 0
        %1948 = vmatpush1.bf16.xpose.msra.mxu0 0
        %1949 = vmatprep.subr.bf16.mxu0 0
        %1950 = vmatpush1.bf16.xpose.msra.mxu0 0
        %1951 = vmatprep.subr.bf16.mxu0 0
        %1952 = vmatpush1.bf16.xpose.msra.mxu0 0
        %1953 = vmatprep.subr.bf16.mxu0 0
        %1954 = vmatpush1.bf16.xpose.msra.mxu0 0
        %1955 = vmatprep.subr.bf16.mxu0 0
        %1956 = vmatpush1.bf16.xpose.msra.mxu0 0
        %1957 = vmatprep.subr.bf16.mxu0 0
        %1958 = vmatpush1.bf16.xpose.msra.mxu0 0
        %1959 = vmatprep.subr.bf16.mxu0 0
        %1960 = vmatpush1.bf16.xpose.msra.mxu0 0
        %1961 = vmatprep.subr.bf16.mxu0 0
        %1962 = vmatpush1.bf16.xpose.msra.mxu0 0
        %1963 = vmatprep.subr.bf16.mxu0 0
        %1964 = vmatpush1.bf16.xpose.msra.mxu0 0
        %1965 = vmatprep.subr.bf16.mxu0 0
        %1966 = vmatpush1.bf16.xpose.msra.mxu0 0
        %1967 = vmatprep.subr.bf16.mxu0 0
        %1968 = vmatpush1.bf16.xpose.msra.mxu0 0
        %1969 = vmatprep.subr.bf16.mxu0 0
        %1970 = vmatpush1.bf16.xpose.msra.mxu0 0
        %1971 = vmatprep.mubr.bf16.mxu0 0
        %1972 = vmatmul.mubr.bf16.gmra.mrb[0].mxu0 %v1934
        %v1973 = vpop.f32.mrb[0].mxu0
        %v1974 = vadd.f32 %v1687, %v1973
        %v1975 = vpop.f32.mrb[0].mxu0
        %v1976 = vpop.f32.mrb[0].mxu0
        %v1977 = vadd.f32 %v1687, %v1976
        %v1978 = vpop.f32.mrb[0].mxu0
        %1979 = vdwg.mxu0
        %v1980 = vsel %vm1224, %v1974, -inf
        %1981 = vmax.xlane.f32.xlu0 %v1980
        %v1982 = vpop.xlane.xlu0 %1981
        %v1983 = vsel %vm1224, %v1977, -inf
        %1984 = vmax.xlane.f32.xlu0 %v1983
        %v1985 = vpop.xlane.xlu0 %1984
        %v1986 = vsub.f32 %v1974, %v1982
        %v1987 = vsub.f32 %v1977, %v1985
        %v1988 = vmul.f32 %v1986, 1.442695
        %v1989 = vpow.pop %v1988
        %v1990 = vmul.f32 %v1987, 1.442695
        %v1991 = vpow.pop %v1990
        %v1992 = vsel %vm1224, %v1989, 0.0
        %1993 = vadd.xlane.f32.xlu0 %v1992
        %v1994 = vpop.xlane.xlu0 %1993
        %v1995 = vsel %vm1224, %v1991, 0.0
        %1996 = vadd.xlane.f32.xlu0 %v1995
        %v1997 = vpop.xlane.xlu0 %1996
        %v1998 = vrcp.pop %v1994
        %v1999 = vrcp.pop %v1997
        %v2000 = vmul.f32 %v1989, %v1998
        %v2001 = vmul.f32 %v1991, %v1999
        %v2002 = vpack.c.bf16 %v2001, %v2000
        %2003 = vrot.lane.b32.xlu0 %v1168, 64
        %v2004 = vpop.permute.xlu0 %2003
        %v2007 = vsel %vm1224, %v2002, 0
        %2009 = vmatprep.subr.bf16.mxu0 0
        %2010 = vmatpush1.bf16.msra.mxu0 %v2004
        %2011 = vmatprep.subr.bf16.mxu0 0
        %2012 = vmatpush1.bf16.msra.mxu0 0
        %2013 = vmatprep.subr.bf16.mxu0 0
        %2014 = vmatpush1.bf16.msra.mxu0 0
        %2015 = vmatprep.subr.bf16.mxu0 0
        %2016 = vmatpush1.bf16.msra.mxu0 0
        %2017 = vmatprep.subr.bf16.mxu0 0
        %2018 = vmatpush1.bf16.msra.mxu0 0
        %2019 = vmatprep.subr.bf16.mxu0 0
        %2020 = vmatpush1.bf16.msra.mxu0 0
        %2021 = vmatprep.subr.bf16.mxu0 0
        %2022 = vmatpush1.bf16.msra.mxu0 0
        %2023 = vmatprep.subr.bf16.mxu0 0
        %2024 = vmatpush1.bf16.msra.mxu0 0
        %2025 = vmatprep.subr.bf16.mxu0 0
        %2026 = vmatpush1.bf16.msra.mxu0 0
        %2027 = vmatprep.subr.bf16.mxu0 0
        %2028 = vmatpush1.bf16.msra.mxu0 0
        %2029 = vmatprep.subr.bf16.mxu0 0
        %2030 = vmatpush1.bf16.msra.mxu0 0
        %2031 = vmatprep.subr.bf16.mxu0 0
        %2032 = vmatpush1.bf16.msra.mxu0 0
        %2033 = vmatprep.subr.bf16.mxu0 0
        %2034 = vmatpush1.bf16.msra.mxu0 0
        %2035 = vmatprep.subr.bf16.mxu0 0
        %2036 = vmatpush1.bf16.msra.mxu0 0
        %2037 = vmatprep.subr.bf16.mxu0 0
        %2038 = vmatpush1.bf16.msra.mxu0 0
        %2039 = vmatprep.subr.bf16.mxu0 0
        %2040 = vmatpush1.bf16.msra.mxu0 0
        %2041 = vmatprep.mubr.bf16.mxu0 0
        %2042 = vmatmul.mubr.bf16.gmra.mrb[0].mxu0 %v2007
        %v2043 = vpop.f32.mrb[0].mxu0
        %v2044 = vadd.f32 0.0, %v2043
        %v2045 = vpop.f32.mrb[0].mxu0
        %v2046 = vpop.f32.mrb[0].mxu0
        %v2047 = vadd.f32 0.0, %v2046
        %v2048 = vpop.f32.mrb[0].mxu0
        %2049 = vdwg.mxu0
        %v2050 = vpack.c.bf16 %v2047, %v2044
        %2051 = vrot.lane.b32.xlu0 %v1166, 32
        %v2052 = vpop.permute.xlu0 %2051
        %2053 = vrot.lane.b32.xlu0 %v1167, 32
        %v2054 = vpop.permute.xlu0 %2053
        %v2056 = vsel %vm1176, %v2052, 0
        %v2059 = vsel %vm1176, %v2054, 0
        %2061 = vmatprep.subr.bf16.mxu0 0
        %2062 = vmatpush1.bf16.xpose.msra.mxu0 %v2059
        %2063 = vmatprep.subr.bf16.mxu0 0
        %2064 = vmatpush1.bf16.xpose.msra.mxu0 0
        %2065 = vmatprep.subr.bf16.mxu0 0
        %2066 = vmatpush1.bf16.xpose.msra.mxu0 0
        %2067 = vmatprep.subr.bf16.mxu0 0
        %2068 = vmatpush1.bf16.xpose.msra.mxu0 0
        %2069 = vmatprep.subr.bf16.mxu0 0
        %2070 = vmatpush1.bf16.xpose.msra.mxu0 0
        %2071 = vmatprep.subr.bf16.mxu0 0
        %2072 = vmatpush1.bf16.xpose.msra.mxu0 0
        %2073 = vmatprep.subr.bf16.mxu0 0
        %2074 = vmatpush1.bf16.xpose.msra.mxu0 0
        %2075 = vmatprep.subr.bf16.mxu0 0
        %2076 = vmatpush1.bf16.xpose.msra.mxu0 0
        %2077 = vmatprep.subr.bf16.mxu0 0
        %2078 = vmatpush1.bf16.xpose.msra.mxu0 0
        %2079 = vmatprep.subr.bf16.mxu0 0
        %2080 = vmatpush1.bf16.xpose.msra.mxu0 0
        %2081 = vmatprep.subr.bf16.mxu0 0
        %2082 = vmatpush1.bf16.xpose.msra.mxu0 0
        %2083 = vmatprep.subr.bf16.mxu0 0
        %2084 = vmatpush1.bf16.xpose.msra.mxu0 0
        %2085 = vmatprep.subr.bf16.mxu0 0
        %2086 = vmatpush1.bf16.xpose.msra.mxu0 0
        %2087 = vmatprep.subr.bf16.mxu0 0
        %2088 = vmatpush1.bf16.xpose.msra.mxu0 0
        %2089 = vmatprep.subr.bf16.mxu0 0
        %2090 = vmatpush1.bf16.xpose.msra.mxu0 0
        %2091 = vmatprep.subr.bf16.mxu0 0
        %2092 = vmatpush1.bf16.xpose.msra.mxu0 0
        %2093 = vmatprep.mubr.bf16.mxu0 0
        %2094 = vmatmul.mubr.bf16.gmra.mrb[0].mxu0 %v2056
        %v2095 = vpop.f32.mrb[0].mxu0
        %v2096 = vadd.f32 %v1687, %v2095
        %v2097 = vpop.f32.mrb[0].mxu0
        %v2098 = vpop.f32.mrb[0].mxu0
        %v2099 = vadd.f32 %v1687, %v2098
        %v2100 = vpop.f32.mrb[0].mxu0
        %2101 = vdwg.mxu0
        %v2102 = vsel %vm1224, %v2096, -inf
        %2103 = vmax.xlane.f32.xlu0 %v2102
        %v2104 = vpop.xlane.xlu0 %2103
        %v2105 = vsel %vm1224, %v2099, -inf
        %2106 = vmax.xlane.f32.xlu0 %v2105
        %v2107 = vpop.xlane.xlu0 %2106
        %v2108 = vsub.f32 %v2096, %v2104
        %v2109 = vsub.f32 %v2099, %v2107
        %v2110 = vmul.f32 %v2108, 1.442695
        %v2111 = vpow.pop %v2110
        %v2112 = vmul.f32 %v2109, 1.442695
        %v2113 = vpow.pop %v2112
        %v2114 = vsel %vm1224, %v2111, 0.0
        %2115 = vadd.xlane.f32.xlu0 %v2114
        %v2116 = vpop.xlane.xlu0 %2115
        %v2117 = vsel %vm1224, %v2113, 0.0
        %2118 = vadd.xlane.f32.xlu0 %v2117
        %v2119 = vpop.xlane.xlu0 %2118
        %v2120 = vrcp.pop %v2116
        %v2121 = vrcp.pop %v2119
        %v2122 = vmul.f32 %v2111, %v2120
        %v2123 = vmul.f32 %v2113, %v2121
        %v2124 = vpack.c.bf16 %v2123, %v2122
        %2125 = vrot.lane.b32.xlu0 %v1168, 32
        %v2126 = vpop.permute.xlu0 %2125
        %v2129 = vsel %vm1224, %v2124, 0
        %2131 = vmatprep.subr.bf16.mxu0 0
        %2132 = vmatpush1.bf16.msra.mxu0 %v2126
        %2133 = vmatprep.subr.bf16.mxu0 0
        %2134 = vmatpush1.bf16.msra.mxu0 0
        %2135 = vmatprep.subr.bf16.mxu0 0
        %2136 = vmatpush1.bf16.msra.mxu0 0
        %2137 = vmatprep.subr.bf16.mxu0 0
        %2138 = vmatpush1.bf16.msra.mxu0 0
        %2139 = vmatprep.subr.bf16.mxu0 0
        %2140 = vmatpush1.bf16.msra.mxu0 0
        %2141 = vmatprep.subr.bf16.mxu0 0
        %2142 = vmatpush1.bf16.msra.mxu0 0
        %2143 = vmatprep.subr.bf16.mxu0 0
        %2144 = vmatpush1.bf16.msra.mxu0 0
        %2145 = vmatprep.subr.bf16.mxu0 0
        %2146 = vmatpush1.bf16.msra.mxu0 0
        %2147 = vmatprep.subr.bf16.mxu0 0
        %2148 = vmatpush1.bf16.msra.mxu0 0
        %2149 = vmatprep.subr.bf16.mxu0 0
        %2150 = vmatpush1.bf16.msra.mxu0 0
        %2151 = vmatprep.subr.bf16.mxu0 0
        %2152 = vmatpush1.bf16.msra.mxu0 0
        %2153 = vmatprep.subr.bf16.mxu0 0
        %2154 = vmatpush1.bf16.msra.mxu0 0
        %2155 = vmatprep.subr.bf16.mxu0 0
        %2156 = vmatpush1.bf16.msra.mxu0 0
        %2157 = vmatprep.subr.bf16.mxu0 0
        %2158 = vmatpush1.bf16.msra.mxu0 0
        %2159 = vmatprep.subr.bf16.mxu0 0
        %2160 = vmatpush1.bf16.msra.mxu0 0
        %2161 = vmatprep.subr.bf16.mxu0 0
        %2162 = vmatpush1.bf16.msra.mxu0 0
        %2163 = vmatprep.mubr.bf16.mxu0 0
        %2164 = vmatmul.mubr.bf16.gmra.mrb[0].mxu0 %v2129
        %v2165 = vpop.f32.mrb[0].mxu0
        %v2166 = vadd.f32 0.0, %v2165
        %v2167 = vpop.f32.mrb[0].mxu0
        %v2168 = vpop.f32.mrb[0].mxu0
        %v2169 = vadd.f32 0.0, %v2168
        %v2170 = vpop.f32.mrb[0].mxu0
        %2171 = vdwg.mxu0
        %v2172 = vpack.c.bf16 %v2169, %v2166
        %2174 = vrot.lane.b32.xlu0 %v1928, 32
        %v2175 = vpop.permute.xlu0 %2174
        %2177 = vrot.lane.b32.xlu0 %v2050, 64
        %v2178 = vpop.permute.xlu0 %2177
        %2180 = vrot.lane.b32.xlu0 %v2172, 96
        %v2181 = vpop.permute.xlu0 %2180
        %v2184 = vsel %vm1176, %v1803, %v2175
        %v2186 = vsel %vm1674, %v2184, %v2178
        %v2188 = vsel %vm1677, %v2186, %v2181
        %v2190 = vld [vmem:[%s761] sm:$0xf]
        %v2191 = vld [vmem:[%s761 + $0x4] sm:$0xf]
        %v2192 = vld [vmem:[%s761 + $0x8] sm:$0xf]
        %v2193 = vld [vmem:[%s761 + $0xc] sm:$0xf]
        %v2194 = vld [vmem:[%s761 + $0x10] sm:$0xf]
        %v2195 = vld [vmem:[%s761 + $0x14] sm:$0xf]
        %v2196 = vld [vmem:[%s761 + $0x18] sm:$0xf]
        %v2197 = vld [vmem:[%s761 + $0x1c] sm:$0xf]
        %v2198 = vld [vmem:[%s761 + $0x20] sm:$0xf]
        %v2199 = vld [vmem:[%s761 + $0x24] sm:$0xf]
        %v2200 = vld [vmem:[%s761 + $0x28] sm:$0xf]
        %v2201 = vld [vmem:[%s761 + $0x2c] sm:$0xf]
        %v2202 = vld [vmem:[%s761 + $0x30] sm:$0xf]
        %v2203 = vld [vmem:[%s761 + $0x34] sm:$0xf]
        %v2204 = vld [vmem:[%s761 + $0x38] sm:$0xf]
        %v2205 = vld [vmem:[%s761 + $0x3c] sm:$0xf]
        %v2206 = vld [vmem:[%s764] sm:$0x1]
        %v2208 = vlaneseq
        %v2209 = vshrl.u32 %v2208, 7
        %v2210 = vsub.s32 0, %v2209
        %v2211 = vrot.slane %v2206, %v2210
        %v2229 = vunpack.c.l.b16 %v2190
        %v2230 = vunpack.c.l.b16 %v2191
        %v2231 = vunpack.c.l.b16 %v2192
        %v2232 = vunpack.c.l.b16 %v2193
        %v2233 = vunpack.c.l.b16 %v2194
        %v2234 = vunpack.c.l.b16 %v2195
        %v2235 = vunpack.c.l.b16 %v2196
        %v2236 = vunpack.c.l.b16 %v2197
        %v2237 = vunpack.c.l.b16 %v2198
        %v2238 = vunpack.c.l.b16 %v2199
        %v2239 = vunpack.c.l.b16 %v2200
        %v2240 = vunpack.c.l.b16 %v2201
        %v2241 = vunpack.c.l.b16 %v2202
        %v2242 = vunpack.c.l.b16 %v2203
        %v2243 = vunpack.c.l.b16 %v2204
        %v2244 = vunpack.c.l.b16 %v2205
        %v2245 = vpack.c.b16 %v2230, %v2229
        %v2246 = vpack.c.b16 %v2232, %v2231
        %v2247 = vpack.c.b16 %v2234, %v2233
        %v2248 = vpack.c.b16 %v2236, %v2235
        %v2249 = vpack.c.b16 %v2238, %v2237
        %v2250 = vpack.c.b16 %v2240, %v2239
        %v2251 = vpack.c.b16 %v2242, %v2241
        %v2252 = vpack.c.b16 %v2244, %v2243
        %2261 = vmatprep.subr.bf16.mxu0 0
        %2262 = vmatpush1.bf16.msra.mxu0 %v2245
        %2263 = vmatprep.subr.bf16.mxu0 0
        %2264 = vmatpush1.bf16.msra.mxu0 %v2246
        %2265 = vmatprep.subr.bf16.mxu0 0
        %2266 = vmatpush1.bf16.msra.mxu0 %v2247
        %2267 = vmatprep.subr.bf16.mxu0 0
        %2268 = vmatpush1.bf16.msra.mxu0 %v2248
        %2269 = vmatprep.subr.bf16.mxu0 0
        %2270 = vmatpush1.bf16.msra.mxu0 %v2249
        %2271 = vmatprep.subr.bf16.mxu0 0
        %2272 = vmatpush1.bf16.msra.mxu0 %v2250
        %2273 = vmatprep.subr.bf16.mxu0 0
        %2274 = vmatpush1.bf16.msra.mxu0 %v2251
        %2275 = vmatprep.subr.bf16.mxu0 0
        %2276 = vmatpush1.bf16.msra.mxu0 %v2252
        %2277 = vmatprep.subr.bf16.mxu0 0
        %2278 = vmatpush1.bf16.msra.mxu0 0
        %2279 = vmatprep.subr.bf16.mxu0 0
        %2280 = vmatpush1.bf16.msra.mxu0 0
        %2281 = vmatprep.subr.bf16.mxu0 0
        %2282 = vmatpush1.bf16.msra.mxu0 0
        %2283 = vmatprep.subr.bf16.mxu0 0
        %2284 = vmatpush1.bf16.msra.mxu0 0
        %2285 = vmatprep.subr.bf16.mxu0 0
        %2286 = vmatpush1.bf16.msra.mxu0 0
        %2287 = vmatprep.subr.bf16.mxu0 0
        %2288 = vmatpush1.bf16.msra.mxu0 0
        %2289 = vmatprep.subr.bf16.mxu0 0
        %2290 = vmatpush1.bf16.msra.mxu0 0
        %2291 = vmatprep.subr.bf16.mxu0 0
        %2292 = vmatpush1.bf16.msra.mxu0 0
        %2293 = vmatprep.mubr.bf16.mxu0 0
        %2294 = vmatmul.mubr.bf16.gmra.mrb[0].mxu0 %v1679
        %v2295 = vpop.f32.mrb[0].mxu0
        %v2296 = vadd.f32 %v2211, %v2295
        %v2297 = vpop.f32.mrb[0].mxu0
        %v2298 = vpop.f32.mrb[0].mxu0
        %v2299 = vadd.f32 %v2211, %v2298
        %v2300 = vpop.f32.mrb[0].mxu0
        %2301 = vmatprep.mubr.bf16.mxu0 0
        %2302 = vmatmul.mubr.bf16.gmra.mrb[0].mxu0 %v2188
        %v2303 = vpop.f32.mrb[0].mxu0
        %v2304 = vadd.f32 %v2211, %v2303
        %v2305 = vpop.f32.mrb[0].mxu0
        %v2306 = vpop.f32.mrb[0].mxu0
        %v2307 = vadd.f32 %v2211, %v2306
        %v2308 = vpop.f32.mrb[0].mxu0
        %2309 = vdwg.mxu0
        %v2310 = vadd.f32 %v2296, %v880
        %v2311 = vadd.f32 %v2299, %v881
        %v2312 = vadd.f32 %v2304, %v882
        %v2313 = vadd.f32 %v2307, %v883
        %v2314 = vld [vmem:[%s767] sm:$0x1]
        %v2315 = vld [vmem:[%s770] sm:$0x1]
        %2316 = vadd.xlane.f32.xlu0 %v2310
        %v2317 = vpop.xlane.xlu0 %2316
        %2318 = vadd.xlane.f32.xlu0 %v2311
        %v2319 = vpop.xlane.xlu0 %2318
        %2320 = vadd.xlane.f32.xlu0 %v2312
        %v2321 = vpop.xlane.xlu0 %2320
        %2322 = vadd.xlane.f32.xlu0 %v2313
        %v2323 = vpop.xlane.xlu0 %2322
        %v2324 = vrcp.pop 128.0
        %v2325 = vmul.f32 %v2317, %v2324
        %v2326 = vmul.f32 %v2319, %v2324
        %v2327 = vmul.f32 %v2321, %v2324
        %v2328 = vmul.f32 %v2323, %v2324
        %v2329 = vsub.f32 %v2310, %v2325
        %v2330 = vsub.f32 %v2311, %v2326
        %v2331 = vsub.f32 %v2312, %v2327
        %v2332 = vsub.f32 %v2313, %v2328
        %v2333 = vmul.f32 %v2329, %v2329
        %v2334 = vmul.f32 %v2330, %v2330
        %v2335 = vmul.f32 %v2331, %v2331
        %v2336 = vmul.f32 %v2332, %v2332
        %2337 = vadd.xlane.f32.xlu0 %v2333
        %v2338 = vpop.xlane.xlu0 %2337
        %2339 = vadd.xlane.f32.xlu0 %v2334
        %v2340 = vpop.xlane.xlu0 %2339
        %2341 = vadd.xlane.f32.xlu0 %v2335
        %v2342 = vpop.xlane.xlu0 %2341
        %2343 = vadd.xlane.f32.xlu0 %v2336
        %v2344 = vpop.xlane.xlu0 %2343
        %v2345 = vmul.f32 %v2338, %v2324
        %v2346 = vmul.f32 %v2340, %v2324
        %v2347 = vmul.f32 %v2342, %v2324
        %v2348 = vmul.f32 %v2344, %v2324
        %v2349 = vadd.f32 %v2345, 1e-12
        %v2350 = vadd.f32 %v2346, 1e-12
        %v2351 = vadd.f32 %v2347, 1e-12
        %v2352 = vadd.f32 %v2348, 1e-12
        %v2353 = vrsqrt.pop %v2349
        %v2354 = vrsqrt.pop %v2350
        %v2355 = vrsqrt.pop %v2351
        %v2356 = vrsqrt.pop %v2352
        %v2357 = vmul.f32 %v2329, %v2353
        %v2358 = vmul.f32 %v2330, %v2354
        %v2359 = vmul.f32 %v2331, %v2355
        %v2360 = vmul.f32 %v2332, %v2356
        %v2362 = vlaneseq
        %v2363 = vshrl.u32 %v2362, 7
        %v2364 = vsub.s32 0, %v2363
        %v2365 = vrot.slane %v2314, %v2364
        %v2367 = vmul.f32 %v2357, %v2365
        %v2368 = vmul.f32 %v2358, %v2365
        %v2369 = vmul.f32 %v2359, %v2365
        %v2370 = vmul.f32 %v2360, %v2365
        %v2372 = vlaneseq
        %v2373 = vshrl.u32 %v2372, 7
        %v2374 = vsub.s32 0, %v2373
        %v2375 = vrot.slane %v2315, %v2374
        %v2377 = vadd.f32 %v2367, %v2375
        %v2378 = vadd.f32 %v2368, %v2375
        %v2379 = vadd.f32 %v2369, %v2375
        %v2380 = vadd.f32 %v2370, %v2375
        %v2381 = vpack.c.bf16 %v2378, %v2377
        %v2382 = vpack.c.bf16 %v2380, %v2379
        %v2383 = vld [vmem:[%s775] sm:$0xff]
        %v2384 = vld [vmem:[%s775 + $0x8] sm:$0xff]
        %v2385 = vld [vmem:[%s775 + $0x10] sm:$0xff]
        %v2386 = vld [vmem:[%s775 + $0x18] sm:$0xff]
        %v2387 = vld [vmem:[%s775 + $0x20] sm:$0xff]
        %v2388 = vld [vmem:[%s775 + $0x28] sm:$0xff]
        %v2389 = vld [vmem:[%s775 + $0x30] sm:$0xff]
        %v2390 = vld [vmem:[%s775 + $0x38] sm:$0xff]
        %v2391 = vld [vmem:[%s775 + $0x40] sm:$0xff]
        %v2392 = vld [vmem:[%s775 + $0x48] sm:$0xff]
        %v2393 = vld [vmem:[%s775 + $0x50] sm:$0xff]
        %v2394 = vld [vmem:[%s775 + $0x58] sm:$0xff]
        %v2395 = vld [vmem:[%s775 + $0x60] sm:$0xff]
        %v2396 = vld [vmem:[%s775 + $0x68] sm:$0xff]
        %v2397 = vld [vmem:[%s775 + $0x70] sm:$0xff]
        %v2398 = vld [vmem:[%s775 + $0x78] sm:$0xff]
        %v2399 = vld [vmem:[%s775 + $0x80] sm:$0xff]
        %v2400 = vld [vmem:[%s775 + $0x88] sm:$0xff]
        %v2401 = vld [vmem:[%s775 + $0x90] sm:$0xff]
        %v2402 = vld [vmem:[%s775 + $0x98] sm:$0xff]
        %v2403 = vld [vmem:[%s775 + $0xa0] sm:$0xff]
        %v2404 = vld [vmem:[%s775 + $0xa8] sm:$0xff]
        %v2405 = vld [vmem:[%s775 + $0xb0] sm:$0xff]
        %v2406 = vld [vmem:[%s775 + $0xb8] sm:$0xff]
        %v2407 = vld [vmem:[%s775 + $0xc0] sm:$0xff]
        %v2408 = vld [vmem:[%s775 + $0xc8] sm:$0xff]
        %v2409 = vld [vmem:[%s775 + $0xd0] sm:$0xff]
        %v2410 = vld [vmem:[%s775 + $0xd8] sm:$0xff]
        %v2411 = vld [vmem:[%s775 + $0xe0] sm:$0xff]
        %v2412 = vld [vmem:[%s775 + $0xe8] sm:$0xff]
        %v2413 = vld [vmem:[%s775 + $0xf0] sm:$0xff]
        %v2414 = vld [vmem:[%s775 + $0xf8] sm:$0xff]
        %v2415 = vld [vmem:[%s779] sm:$0xf]
        %v2417 = vlaneseq
        %v2418 = vshrl.u32 %v2417, 7
        %v2419 = vsub.s32 0, %v2418
        %v2420 = vrot.slane %v2415, %v2419
        %v2421 = vlaneseq
        %v2422 = vshrl.u32 %v2421, 7
        %v2423 = vsub.s32 1, %v2422
        %v2424 = vrot.slane %v2415, %v2423
        %v2425 = vlaneseq
        %v2426 = vshrl.u32 %v2425, 7
        %v2427 = vsub.s32 2, %v2426
        %v2428 = vrot.slane %v2415, %v2427
        %v2429 = vlaneseq
        %v2430 = vshrl.u32 %v2429, 7
        %v2431 = vsub.s32 3, %v2430
        %v2432 = vrot.slane %v2415, %v2431
        %v2469 = vunpack.c.l.b16 %v2383
        %v2470 = vunpack.c.h.b16 %v2383
        %v2471 = vunpack.c.l.b16 %v2384
        %v2472 = vunpack.c.h.b16 %v2384
        %v2473 = vunpack.c.l.b16 %v2385
        %v2474 = vunpack.c.h.b16 %v2385
        %v2475 = vunpack.c.l.b16 %v2386
        %v2476 = vunpack.c.h.b16 %v2386
        %v2477 = vunpack.c.l.b16 %v2387
        %v2478 = vunpack.c.h.b16 %v2387
        %v2479 = vunpack.c.l.b16 %v2388
        %v2480 = vunpack.c.h.b16 %v2388
        %v2481 = vunpack.c.l.b16 %v2389
        %v2482 = vunpack.c.h.b16 %v2389
        %v2483 = vunpack.c.l.b16 %v2390
        %v2484 = vunpack.c.h.b16 %v2390
        %v2485 = vunpack.c.l.b16 %v2391
        %v2486 = vunpack.c.h.b16 %v2391
        %v2487 = vunpack.c.l.b16 %v2392
        %v2488 = vunpack.c.h.b16 %v2392
        %v2489 = vunpack.c.l.b16 %v2393
        %v2490 = vunpack.c.h.b16 %v2393
        %v2491 = vunpack.c.l.b16 %v2394
        %v2492 = vunpack.c.h.b16 %v2394
        %v2493 = vunpack.c.l.b16 %v2395
        %v2494 = vunpack.c.h.b16 %v2395
        %v2495 = vunpack.c.l.b16 %v2396
        %v2496 = vunpack.c.h.b16 %v2396
        %v2497 = vunpack.c.l.b16 %v2397
        %v2498 = vunpack.c.h.b16 %v2397
        %v2499 = vunpack.c.l.b16 %v2398
        %v2500 = vunpack.c.h.b16 %v2398
        %v2501 = vunpack.c.l.b16 %v2399
        %v2502 = vunpack.c.h.b16 %v2399
        %v2503 = vunpack.c.l.b16 %v2400
        %v2504 = vunpack.c.h.b16 %v2400
        %v2505 = vunpack.c.l.b16 %v2401
        %v2506 = vunpack.c.h.b16 %v2401
        %v2507 = vunpack.c.l.b16 %v2402
        %v2508 = vunpack.c.h.b16 %v2402
        %v2509 = vunpack.c.l.b16 %v2403
        %v2510 = vunpack.c.h.b16 %v2403
        %v2511 = vunpack.c.l.b16 %v2404
        %v2512 = vunpack.c.h.b16 %v2404
        %v2513 = vunpack.c.l.b16 %v2405
        %v2514 = vunpack.c.h.b16 %v2405
        %v2515 = vunpack.c.l.b16 %v2406
        %v2516 = vunpack.c.h.b16 %v2406
        %v2517 = vunpack.c.l.b16 %v2407
        %v2518 = vunpack.c.h.b16 %v2407
        %v2519 = vunpack.c.l.b16 %v2408
        %v2520 = vunpack.c.h.b16 %v2408
        %v2521 = vunpack.c.l.b16 %v2409
        %v2522 = vunpack.c.h.b16 %v2409
        %v2523 = vunpack.c.l.b16 %v2410
        %v2524 = vunpack.c.h.b16 %v2410
        %v2525 = vunpack.c.l.b16 %v2411
        %v2526 = vunpack.c.h.b16 %v2411
        %v2527 = vunpack.c.l.b16 %v2412
        %v2528 = vunpack.c.h.b16 %v2412
        %v2529 = vunpack.c.l.b16 %v2413
        %v2530 = vunpack.c.h.b16 %v2413
        %v2531 = vunpack.c.l.b16 %v2414
        %v2532 = vunpack.c.h.b16 %v2414
        %v2533 = vpack.c.b16 %v2473, %v2469
        %v2534 = vpack.c.b16 %v2474, %v2470
        %v2535 = vpack.c.b16 %v2475, %v2471
        %v2536 = vpack.c.b16 %v2476, %v2472
        %v2537 = vpack.c.b16 %v2481, %v2477
        %v2538 = vpack.c.b16 %v2482, %v2478
        %v2539 = vpack.c.b16 %v2483, %v2479
        %v2540 = vpack.c.b16 %v2484, %v2480
        %v2541 = vpack.c.b16 %v2489, %v2485
        %v2542 = vpack.c.b16 %v2490, %v2486
        %v2543 = vpack.c.b16 %v2491, %v2487
        %v2544 = vpack.c.b16 %v2492, %v2488
        %v2545 = vpack.c.b16 %v2497, %v2493
        %v2546 = vpack.c.b16 %v2498, %v2494
        %v2547 = vpack.c.b16 %v2499, %v2495
        %v2548 = vpack.c.b16 %v2500, %v2496
        %v2549 = vpack.c.b16 %v2505, %v2501
        %v2550 = vpack.c.b16 %v2506, %v2502
        %v2551 = vpack.c.b16 %v2507, %v2503
        %v2552 = vpack.c.b16 %v2508, %v2504
        %v2553 = vpack.c.b16 %v2513, %v2509
        %v2554 = vpack.c.b16 %v2514, %v2510
        %v2555 = vpack.c.b16 %v2515, %v2511
        %v2556 = vpack.c.b16 %v2516, %v2512
        %v2557 = vpack.c.b16 %v2521, %v2517
        %v2558 = vpack.c.b16 %v2522, %v2518
        %v2559 = vpack.c.b16 %v2523, %v2519
        %v2560 = vpack.c.b16 %v2524, %v2520
        %v2561 = vpack.c.b16 %v2529, %v2525
        %v2562 = vpack.c.b16 %v2530, %v2526
        %v2563 = vpack.c.b16 %v2531, %v2527
        %v2564 = vpack.c.b16 %v2532, %v2528
        %2597 = vmatprep.subr.bf16.mxu0 %v2534
        %2598 = vmatpush1.bf16.msra.mxu0 %v2533
        %2599 = vmatprep.subr.bf16.mxu0 %v2538
        %2600 = vmatpush1.bf16.msra.mxu0 %v2537
        %2601 = vmatprep.subr.bf16.mxu0 %v2542
        %2602 = vmatpush1.bf16.msra.mxu0 %v2541
        %2603 = vmatprep.subr.bf16.mxu0 %v2546
        %2604 = vmatpush1.bf16.msra.mxu0 %v2545
        %2605 = vmatprep.subr.bf16.mxu0 %v2550
        %2606 = vmatpush1.bf16.msra.mxu0 %v2549
        %2607 = vmatprep.subr.bf16.mxu0 %v2554
        %2608 = vmatpush1.bf16.msra.mxu0 %v2553
        %2609 = vmatprep.subr.bf16.mxu0 %v2558
        %2610 = vmatpush1.bf16.msra.mxu0 %v2557
        %2611 = vmatprep.subr.bf16.mxu0 %v2562
        %2612 = vmatpush1.bf16.msra.mxu0 %v2561
        %2613 = vmatprep.subr.bf16.mxu0 0
        %2614 = vmatpush1.bf16.msra.mxu0 0
        %2615 = vmatprep.subr.bf16.mxu0 0
        %2616 = vmatpush1.bf16.msra.mxu0 0
        %2617 = vmatprep.subr.bf16.mxu0 0
        %2618 = vmatpush1.bf16.msra.mxu0 0
        %2619 = vmatprep.subr.bf16.mxu0 0
        %2620 = vmatpush1.bf16.msra.mxu0 0
        %2621 = vmatprep.subr.bf16.mxu0 0
        %2622 = vmatpush1.bf16.msra.mxu0 0
        %2623 = vmatprep.subr.bf16.mxu0 0
        %2624 = vmatpush1.bf16.msra.mxu0 0
        %2625 = vmatprep.subr.bf16.mxu0 0
        %2626 = vmatpush1.bf16.msra.mxu0 0
        %2627 = vmatprep.subr.bf16.mxu0 0
        %2628 = vmatpush1.bf16.msra.mxu0 0
        %2629 = vmatprep.mubr.bf16.mxu0 0
        %2630 = vmatmul.mubr.bf16.gmra.mrb[0].mxu0 %v2381
        %v2631 = vpop.f32.mrb[0].mxu0
        %v2632 = vadd.f32 %v2420, %v2631
        %v2633 = vpop.f32.mrb[0].mxu0
        %v2634 = vadd.f32 %v2424, %v2633
        %v2635 = vpop.f32.mrb[0].mxu0
        %v2636 = vadd.f32 %v2420, %v2635
        %v2637 = vpop.f32.mrb[0].mxu0
        %v2638 = vadd.f32 %v2424, %v2637
        %2639 = vmatprep.mubr.bf16.mxu0 0
        %2640 = vmatmul.mubr.bf16.gmra.mrb[0].mxu0 %v2382
        %v2641 = vpop.f32.mrb[0].mxu0
        %v2642 = vadd.f32 %v2420, %v2641
        %v2643 = vpop.f32.mrb[0].mxu0
        %v2644 = vadd.f32 %v2424, %v2643
        %v2645 = vpop.f32.mrb[0].mxu0
        %v2646 = vadd.f32 %v2420, %v2645
        %v2647 = vpop.f32.mrb[0].mxu0
        %v2648 = vadd.f32 %v2424, %v2647
        %2649 = vdwg.mxu0
        %2650 = vmatprep.subr.bf16.mxu0 %v2536
        %2651 = vmatpush1.bf16.msra.mxu0 %v2535
        %2652 = vmatprep.subr.bf16.mxu0 %v2540
        %2653 = vmatpush1.bf16.msra.mxu0 %v2539
        %2654 = vmatprep.subr.bf16.mxu0 %v2544
        %2655 = vmatpush1.bf16.msra.mxu0 %v2543
        %2656 = vmatprep.subr.bf16.mxu0 %v2548
        %2657 = vmatpush1.bf16.msra.mxu0 %v2547
        %2658 = vmatprep.subr.bf16.mxu0 %v2552
        %2659 = vmatpush1.bf16.msra.mxu0 %v2551
        %2660 = vmatprep.subr.bf16.mxu0 %v2556
        %2661 = vmatpush1.bf16.msra.mxu0 %v2555
        %2662 = vmatprep.subr.bf16.mxu0 %v2560
        %2663 = vmatpush1.bf16.msra.mxu0 %v2559
        %2664 = vmatprep.subr.bf16.mxu0 %v2564
        %2665 = vmatpush1.bf16.msra.mxu0 %v2563
        %2666 = vmatprep.subr.bf16.mxu0 0
        %2667 = vmatpush1.bf16.msra.mxu0 0
        %2668 = vmatprep.subr.bf16.mxu0 0
        %2669 = vmatpush1.bf16.msra.mxu0 0
        %2670 = vmatprep.subr.bf16.mxu0 0
        %2671 = vmatpush1.bf16.msra.mxu0 0
        %2672 = vmatprep.subr.bf16.mxu0 0
        %2673 = vmatpush1.bf16.msra.mxu0 0
        %2674 = vmatprep.subr.bf16.mxu0 0
        %2675 = vmatpush1.bf16.msra.mxu0 0
        %2676 = vmatprep.subr.bf16.mxu0 0
        %2677 = vmatpush1.bf16.msra.mxu0 0
        %2678 = vmatprep.subr.bf16.mxu0 0
        %2679 = vmatpush1.bf16.msra.mxu0 0
        %2680 = vmatprep.subr.bf16.mxu0 0
        %2681 = vmatpush1.bf16.msra.mxu0 0
        %2682 = vmatprep.mubr.bf16.mxu0 0
        %2683 = vmatmul.mubr.bf16.gmra.mrb[0].mxu0 %v2381
        %v2684 = vpop.f32.mrb[0].mxu0
        %v2685 = vadd.f32 %v2428, %v2684
        %v2686 = vpop.f32.mrb[0].mxu0
        %v2687 = vadd.f32 %v2432, %v2686
        %v2688 = vpop.f32.mrb[0].mxu0
        %v2689 = vadd.f32 %v2428, %v2688
        %v2690 = vpop.f32.mrb[0].mxu0
        %v2691 = vadd.f32 %v2432, %v2690
        %2692 = vmatprep.mubr.bf16.mxu0 0
        %2693 = vmatmul.mubr.bf16.gmra.mrb[0].mxu0 %v2382
        %v2694 = vpop.f32.mrb[0].mxu0
        %v2695 = vadd.f32 %v2428, %v2694
        %v2696 = vpop.f32.mrb[0].mxu0
        %v2697 = vadd.f32 %v2432, %v2696
        %v2698 = vpop.f32.mrb[0].mxu0
        %v2699 = vadd.f32 %v2428, %v2698
        %v2700 = vpop.f32.mrb[0].mxu0
        %v2701 = vadd.f32 %v2432, %v2700
        %2702 = vdwg.mxu0
        %v2703 = vmul.f32 %v2632, 0.5
        %v2704 = vmul.f32 %v2634, 0.5
        %v2705 = vmul.f32 %v2685, 0.5
        %v2706 = vmul.f32 %v2687, 0.5
        %v2707 = vmul.f32 %v2636, 0.5
        %v2708 = vmul.f32 %v2638, 0.5
        %v2709 = vmul.f32 %v2689, 0.5
        %v2710 = vmul.f32 %v2691, 0.5
        %v2711 = vmul.f32 %v2642, 0.5
        %v2712 = vmul.f32 %v2644, 0.5
        %v2713 = vmul.f32 %v2695, 0.5
        %v2714 = vmul.f32 %v2697, 0.5
        %v2715 = vmul.f32 %v2646, 0.5
        %v2716 = vmul.f32 %v2648, 0.5
        %v2717 = vmul.f32 %v2699, 0.5
        %v2718 = vmul.f32 %v2701, 0.5
        %v2719 = vmul.f32 %v2632, 0.044715
        %v2720 = vmul.f32 %v2634, 0.044715
        %v2721 = vmul.f32 %v2685, 0.044715
        %v2722 = vmul.f32 %v2687, 0.044715
        %v2723 = vmul.f32 %v2636, 0.044715
        %v2724 = vmul.f32 %v2638, 0.044715
        %v2725 = vmul.f32 %v2689, 0.044715
        %v2726 = vmul.f32 %v2691, 0.044715
        %v2727 = vmul.f32 %v2642, 0.044715
        %v2728 = vmul.f32 %v2644, 0.044715
        %v2729 = vmul.f32 %v2695, 0.044715
        %v2730 = vmul.f32 %v2697, 0.044715
        %v2731 = vmul.f32 %v2646, 0.044715
        %v2732 = vmul.f32 %v2648, 0.044715
        %v2733 = vmul.f32 %v2699, 0.044715
        %v2734 = vmul.f32 %v2701, 0.044715
        %v2735 = vmul.f32 %v2719, %v2632
        %v2736 = vmul.f32 %v2720, %v2634
        %v2737 = vmul.f32 %v2721, %v2685
        %v2738 = vmul.f32 %v2722, %v2687
        %v2739 = vmul.f32 %v2723, %v2636
        %v2740 = vmul.f32 %v2724, %v2638
        %v2741 = vmul.f32 %v2725, %v2689
        %v2742 = vmul.f32 %v2726, %v2691
        %v2743 = vmul.f32 %v2727, %v2642
        %v2744 = vmul.f32 %v2728, %v2644
        %v2745 = vmul.f32 %v2729, %v2695
        %v2746 = vmul.f32 %v2730, %v2697
        %v2747 = vmul.f32 %v2731, %v2646
        %v2748 = vmul.f32 %v2732, %v2648
        %v2749 = vmul.f32 %v2733, %v2699
        %v2750 = vmul.f32 %v2734, %v2701
        %v2751 = vmul.f32 %v2735, %v2632
        %v2752 = vmul.f32 %v2736, %v2634
        %v2753 = vmul.f32 %v2737, %v2685
        %v2754 = vmul.f32 %v2738, %v2687
        %v2755 = vmul.f32 %v2739, %v2636
        %v2756 = vmul.f32 %v2740, %v2638
        %v2757 = vmul.f32 %v2741, %v2689
        %v2758 = vmul.f32 %v2742, %v2691
        %v2759 = vmul.f32 %v2743, %v2642
        %v2760 = vmul.f32 %v2744, %v2644
        %v2761 = vmul.f32 %v2745, %v2695
        %v2762 = vmul.f32 %v2746, %v2697
        %v2763 = vmul.f32 %v2747, %v2646
        %v2764 = vmul.f32 %v2748, %v2648
        %v2765 = vmul.f32 %v2749, %v2699
        %v2766 = vmul.f32 %v2750, %v2701
        %v2767 = vadd.f32 %v2632, %v2751
        %v2768 = vadd.f32 %v2634, %v2752
        %v2769 = vadd.f32 %v2685, %v2753
        %v2770 = vadd.f32 %v2687, %v2754
        %v2771 = vadd.f32 %v2636, %v2755
        %v2772 = vadd.f32 %v2638, %v2756
        %v2773 = vadd.f32 %v2689, %v2757
        %v2774 = vadd.f32 %v2691, %v2758
        %v2775 = vadd.f32 %v2642, %v2759
        %v2776 = vadd.f32 %v2644, %v2760
        %v2777 = vadd.f32 %v2695, %v2761
        %v2778 = vadd.f32 %v2697, %v2762
        %v2779 = vadd.f32 %v2646, %v2763
        %v2780 = vadd.f32 %v2648, %v2764
        %v2781 = vadd.f32 %v2699, %v2765
        %v2782 = vadd.f32 %v2701, %v2766
        %v2783 = vmul.f32 %v2767, 0.7978846
        %v2784 = vmul.f32 %v2768, 0.7978846
        %v2785 = vmul.f32 %v2769, 0.7978846
        %v2786 = vmul.f32 %v2770, 0.7978846
        %v2787 = vmul.f32 %v2771, 0.7978846
        %v2788 = vmul.f32 %v2772, 0.7978846
        %v2789 = vmul.f32 %v2773, 0.7978846
        %v2790 = vmul.f32 %v2774, 0.7978846
        %v2791 = vmul.f32 %v2775, 0.7978846
        %v2792 = vmul.f32 %v2776, 0.7978846
        %v2793 = vmul.f32 %v2777, 0.7978846
        %v2794 = vmul.f32 %v2778, 0.7978846
        %v2795 = vmul.f32 %v2779, 0.7978846
        %v2796 = vmul.f32 %v2780, 0.7978846
        %v2797 = vmul.f32 %v2781, 0.7978846
        %v2798 = vmul.f32 %v2782, 0.7978846
        %v2799 = vtanh.pop %v2783
        %v2800 = vtanh.pop %v2784
        %v2801 = vtanh.pop %v2785
        %v2802 = vtanh.pop %v2786
        %v2803 = vtanh.pop %v2787
        %v2804 = vtanh.pop %v2788
        %v2805 = vtanh.pop %v2789
        %v2806 = vtanh.pop %v2790
        %v2807 = vtanh.pop %v2791
        %v2808 = vtanh.pop %v2792
        %v2809 = vtanh.pop %v2793
        %v2810 = vtanh.pop %v2794
        %v2811 = vtanh.pop %v2795
        %v2812 = vtanh.pop %v2796
        %v2813 = vtanh.pop %v2797
        %v2814 = vtanh.pop %v2798
        %v2815 = vadd.f32 %v2799, 1.0
        %v2816 = vadd.f32 %v2800, 1.0
        %v2817 = vadd.f32 %v2801, 1.0
        %v2818 = vadd.f32 %v2802, 1.0
        %v2819 = vadd.f32 %v2803, 1.0
        %v2820 = vadd.f32 %v2804, 1.0
        %v2821 = vadd.f32 %v2805, 1.0
        %v2822 = vadd.f32 %v2806, 1.0
        %v2823 = vadd.f32 %v2807, 1.0
        %v2824 = vadd.f32 %v2808, 1.0
        %v2825 = vadd.f32 %v2809, 1.0
        %v2826 = vadd.f32 %v2810, 1.0
        %v2827 = vadd.f32 %v2811, 1.0
        %v2828 = vadd.f32 %v2812, 1.0
        %v2829 = vadd.f32 %v2813, 1.0
        %v2830 = vadd.f32 %v2814, 1.0
        %v2831 = vmul.f32 %v2703, %v2815
        %v2832 = vmul.f32 %v2704, %v2816
        %v2833 = vmul.f32 %v2705, %v2817
        %v2834 = vmul.f32 %v2706, %v2818
        %v2835 = vmul.f32 %v2707, %v2819
        %v2836 = vmul.f32 %v2708, %v2820
        %v2837 = vmul.f32 %v2709, %v2821
        %v2838 = vmul.f32 %v2710, %v2822
        %v2839 = vmul.f32 %v2711, %v2823
        %v2840 = vmul.f32 %v2712, %v2824
        %v2841 = vmul.f32 %v2713, %v2825
        %v2842 = vmul.f32 %v2714, %v2826
        %v2843 = vmul.f32 %v2715, %v2827
        %v2844 = vmul.f32 %v2716, %v2828
        %v2845 = vmul.f32 %v2717, %v2829
        %v2846 = vmul.f32 %v2718, %v2830
        %v2847 = vpack.c.bf16 %v2835, %v2831
        %v2848 = vpack.c.bf16 %v2836, %v2832
        %v2849 = vpack.c.bf16 %v2837, %v2833
        %v2850 = vpack.c.bf16 %v2838, %v2834
        %v2851 = vpack.c.bf16 %v2843, %v2839
        %v2852 = vpack.c.bf16 %v2844, %v2840
        %v2853 = vpack.c.bf16 %v2845, %v2841
        %v2854 = vpack.c.bf16 %v2846, %v2842
        %v2855 = vld [vmem:[%s784] sm:$0xf]
        %v2856 = vld [vmem:[%s784 + $0x4] sm:$0xf]
        %v2857 = vld [vmem:[%s784 + $0x8] sm:$0xf]
        %v2858 = vld [vmem:[%s784 + $0xc] sm:$0xf]
        %v2859 = vld [vmem:[%s784 + $0x10] sm:$0xf]
        %v2860 = vld [vmem:[%s784 + $0x14] sm:$0xf]
        %v2861 = vld [vmem:[%s784 + $0x18] sm:$0xf]
        %v2862 = vld [vmem:[%s784 + $0x1c] sm:$0xf]
        %v2863 = vld [vmem:[%s784 + $0x20] sm:$0xf]
        %v2864 = vld [vmem:[%s784 + $0x24] sm:$0xf]
        %v2865 = vld [vmem:[%s784 + $0x28] sm:$0xf]
        %v2866 = vld [vmem:[%s784 + $0x2c] sm:$0xf]
        %v2867 = vld [vmem:[%s784 + $0x30] sm:$0xf]
        %v2868 = vld [vmem:[%s784 + $0x34] sm:$0xf]
        %v2869 = vld [vmem:[%s784 + $0x38] sm:$0xf]
        %v2870 = vld [vmem:[%s784 + $0x3c] sm:$0xf]
        %v2871 = vld [vmem:[%s784 + $0x40] sm:$0xf]
        %v2872 = vld [vmem:[%s784 + $0x44] sm:$0xf]
        %v2873 = vld [vmem:[%s784 + $0x48] sm:$0xf]
        %v2874 = vld [vmem:[%s784 + $0x4c] sm:$0xf]
        %v2875 = vld [vmem:[%s784 + $0x50] sm:$0xf]
        %v2876 = vld [vmem:[%s784 + $0x54] sm:$0xf]
        %v2877 = vld [vmem:[%s784 + $0x58] sm:$0xf]
        %v2878 = vld [vmem:[%s784 + $0x5c] sm:$0xf]
        %v2879 = vld [vmem:[%s784 + $0x60] sm:$0xf]
        %v2880 = vld [vmem:[%s784 + $0x64] sm:$0xf]
        %v2881 = vld [vmem:[%s784 + $0x68] sm:$0xf]
        %v2882 = vld [vmem:[%s784 + $0x6c] sm:$0xf]
        %v2883 = vld [vmem:[%s784 + $0x70] sm:$0xf]
        %v2884 = vld [vmem:[%s784 + $0x74] sm:$0xf]
        %v2885 = vld [vmem:[%s784 + $0x78] sm:$0xf]
        %v2886 = vld [vmem:[%s784 + $0x7c] sm:$0xf]
        %v2887 = vld [vmem:[%s784 + $0x80] sm:$0xf]
        %v2888 = vld [vmem:[%s784 + $0x84] sm:$0xf]
        %v2889 = vld [vmem:[%s784 + $0x88] sm:$0xf]
        %v2890 = vld [vmem:[%s784 + $0x8c] sm:$0xf]
        %v2891 = vld [vmem:[%s784 + $0x90] sm:$0xf]
        %v2892 = vld [vmem:[%s784 + $0x94] sm:$0xf]
        %v2893 = vld [vmem:[%s784 + $0x98] sm:$0xf]
        %v2894 = vld [vmem:[%s784 + $0x9c] sm:$0xf]
        %v2895 = vld [vmem:[%s784 + $0xa0] sm:$0xf]
        %v2896 = vld [vmem:[%s784 + $0xa4] sm:$0xf]
        %v2897 = vld [vmem:[%s784 + $0xa8] sm:$0xf]
        %v2898 = vld [vmem:[%s784 + $0xac] sm:$0xf]
        %v2899 = vld [vmem:[%s784 + $0xb0] sm:$0xf]
        %v2900 = vld [vmem:[%s784 + $0xb4] sm:$0xf]
        %v2901 = vld [vmem:[%s784 + $0xb8] sm:$0xf]
        %v2902 = vld [vmem:[%s784 + $0xbc] sm:$0xf]
        %v2903 = vld [vmem:[%s784 + $0xc0] sm:$0xf]
        %v2904 = vld [vmem:[%s784 + $0xc4] sm:$0xf]
        %v2905 = vld [vmem:[%s784 + $0xc8] sm:$0xf]
        %v2906 = vld [vmem:[%s784 + $0xcc] sm:$0xf]
        %v2907 = vld [vmem:[%s784 + $0xd0] sm:$0xf]
        %v2908 = vld [vmem:[%s784 + $0xd4] sm:$0xf]
        %v2909 = vld [vmem:[%s784 + $0xd8] sm:$0xf]
        %v2910 = vld [vmem:[%s784 + $0xdc] sm:$0xf]
        %v2911 = vld [vmem:[%s784 + $0xe0] sm:$0xf]
        %v2912 = vld [vmem:[%s784 + $0xe4] sm:$0xf]
        %v2913 = vld [vmem:[%s784 + $0xe8] sm:$0xf]
        %v2914 = vld [vmem:[%s784 + $0xec] sm:$0xf]
        %v2915 = vld [vmem:[%s784 + $0xf0] sm:$0xf]
        %v2916 = vld [vmem:[%s784 + $0xf4] sm:$0xf]
        %v2917 = vld [vmem:[%s784 + $0xf8] sm:$0xf]
        %v2918 = vld [vmem:[%s784 + $0xfc] sm:$0xf]
        %v2919 = vld [vmem:[%s787] sm:$0x1]
        %v2921 = vlaneseq
        %v2922 = vshrl.u32 %v2921, 7
        %v2923 = vsub.s32 0, %v2922
        %v2924 = vrot.slane %v2919, %v2923
        %v2990 = vunpack.c.l.b16 %v2855
        %v2991 = vunpack.c.l.b16 %v2856
        %v2992 = vunpack.c.l.b16 %v2857
        %v2993 = vunpack.c.l.b16 %v2858
        %v2994 = vunpack.c.l.b16 %v2859
        %v2995 = vunpack.c.l.b16 %v2860
        %v2996 = vunpack.c.l.b16 %v2861
        %v2997 = vunpack.c.l.b16 %v2862
        %v2998 = vunpack.c.l.b16 %v2863
        %v2999 = vunpack.c.l.b16 %v2864
        %v3000 = vunpack.c.l.b16 %v2865
        %v3001 = vunpack.c.l.b16 %v2866
        %v3002 = vunpack.c.l.b16 %v2867
        %v3003 = vunpack.c.l.b16 %v2868
        %v3004 = vunpack.c.l.b16 %v2869
        %v3005 = vunpack.c.l.b16 %v2870
        %v3006 = vunpack.c.l.b16 %v2871
        %v3007 = vunpack.c.l.b16 %v2872
        %v3008 = vunpack.c.l.b16 %v2873
        %v3009 = vunpack.c.l.b16 %v2874
        %v3010 = vunpack.c.l.b16 %v2875
        %v3011 = vunpack.c.l.b16 %v2876
        %v3012 = vunpack.c.l.b16 %v2877
        %v3013 = vunpack.c.l.b16 %v2878
        %v3014 = vunpack.c.l.b16 %v2879
        %v3015 = vunpack.c.l.b16 %v2880
        %v3016 = vunpack.c.l.b16 %v2881
        %v3017 = vunpack.c.l.b16 %v2882
        %v3018 = vunpack.c.l.b16 %v2883
        %v3019 = vunpack.c.l.b16 %v2884
        %v3020 = vunpack.c.l.b16 %v2885
        %v3021 = vunpack.c.l.b16 %v2886
        %v3022 = vunpack.c.l.b16 %v2887
        %v3023 = vunpack.c.l.b16 %v2888
        %v3024 = vunpack.c.l.b16 %v2889
        %v3025 = vunpack.c.l.b16 %v2890
        %v3026 = vunpack.c.l.b16 %v2891
        %v3027 = vunpack.c.l.b16 %v2892
        %v3028 = vunpack.c.l.b16 %v2893
        %v3029 = vunpack.c.l.b16 %v2894
        %v3030 = vunpack.c.l.b16 %v2895
        %v3031 = vunpack.c.l.b16 %v2896
        %v3032 = vunpack.c.l.b16 %v2897
        %v3033 = vunpack.c.l.b16 %v2898
        %v3034 = vunpack.c.l.b16 %v2899
        %v3035 = vunpack.c.l.b16 %v2900
        %v3036 = vunpack.c.l.b16 %v2901
        %v3037 = vunpack.c.l.b16 %v2902
        %v3038 = vunpack.c.l.b16 %v2903
        %v3039 = vunpack.c.l.b16 %v2904
        %v3040 = vunpack.c.l.b16 %v2905
        %v3041 = vunpack.c.l.b16 %v2906
        %v3042 = vunpack.c.l.b16 %v2907
        %v3043 = vunpack.c.l.b16 %v2908
        %v3044 = vunpack.c.l.b16 %v2909
        %v3045 = vunpack.c.l.b16 %v2910
        %v3046 = vunpack.c.l.b16 %v2911
        %v3047 = vunpack.c.l.b16 %v2912
        %v3048 = vunpack.c.l.b16 %v2913
        %v3049 = vunpack.c.l.b16 %v2914
        %v3050 = vunpack.c.l.b16 %v2915
        %v3051 = vunpack.c.l.b16 %v2916
        %v3052 = vunpack.c.l.b16 %v2917
        %v3053 = vunpack.c.l.b16 %v2918
        %v3054 = vpack.c.b16 %v2991, %v2990
        %v3055 = vpack.c.b16 %v2993, %v2992
        %v3056 = vpack.c.b16 %v2995, %v2994
        %v3057 = vpack.c.b16 %v2997, %v2996
        %v3058 = vpack.c.b16 %v2999, %v2998
        %v3059 = vpack.c.b16 %v3001, %v3000
        %v3060 = vpack.c.b16 %v3003, %v3002
        %v3061 = vpack.c.b16 %v3005, %v3004
        %v3062 = vpack.c.b16 %v3007, %v3006
        %v3063 = vpack.c.b16 %v3009, %v3008
        %v3064 = vpack.c.b16 %v3011, %v3010
        %v3065 = vpack.c.b16 %v3013, %v3012
        %v3066 = vpack.c.b16 %v3015, %v3014
        %v3067 = vpack.c.b16 %v3017, %v3016
        %v3068 = vpack.c.b16 %v3019, %v3018
        %v3069 = vpack.c.b16 %v3021, %v3020
        %v3070 = vpack.c.b16 %v3023, %v3022
        %v3071 = vpack.c.b16 %v3025, %v3024
        %v3072 = vpack.c.b16 %v3027, %v3026
        %v3073 = vpack.c.b16 %v3029, %v3028
        %v3074 = vpack.c.b16 %v3031, %v3030
        %v3075 = vpack.c.b16 %v3033, %v3032
        %v3076 = vpack.c.b16 %v3035, %v3034
        %v3077 = vpack.c.b16 %v3037, %v3036
        %v3078 = vpack.c.b16 %v3039, %v3038
        %v3079 = vpack.c.b16 %v3041, %v3040
        %v3080 = vpack.c.b16 %v3043, %v3042
        %v3081 = vpack.c.b16 %v3045, %v3044
        %v3082 = vpack.c.b16 %v3047, %v3046
        %v3083 = vpack.c.b16 %v3049, %v3048
        %v3084 = vpack.c.b16 %v3051, %v3050
        %v3085 = vpack.c.b16 %v3053, %v3052
        %3118 = vmatprep.subr.bf16.mxu0 0
        %3119 = vmatpush1.bf16.msra.mxu0 %v3054
        %3120 = vmatprep.subr.bf16.mxu0 0
        %3121 = vmatpush1.bf16.msra.mxu0 %v3055
        %3122 = vmatprep.subr.bf16.mxu0 0
        %3123 = vmatpush1.bf16.msra.mxu0 %v3056
        %3124 = vmatprep.subr.bf16.mxu0 0
        %3125 = vmatpush1.bf16.msra.mxu0 %v3057
        %3126 = vmatprep.subr.bf16.mxu0 0
        %3127 = vmatpush1.bf16.msra.mxu0 %v3058
        %3128 = vmatprep.subr.bf16.mxu0 0
        %3129 = vmatpush1.bf16.msra.mxu0 %v3059
        %3130 = vmatprep.subr.bf16.mxu0 0
        %3131 = vmatpush1.bf16.msra.mxu0 %v3060
        %3132 = vmatprep.subr.bf16.mxu0 0
        %3133 = vmatpush1.bf16.msra.mxu0 %v3061
        %3134 = vmatprep.subr.bf16.mxu0 0
        %3135 = vmatpush1.bf16.msra.mxu0 %v3062
        %3136 = vmatprep.subr.bf16.mxu0 0
        %3137 = vmatpush1.bf16.msra.mxu0 %v3063
        %3138 = vmatprep.subr.bf16.mxu0 0
        %3139 = vmatpush1.bf16.msra.mxu0 %v3064
        %3140 = vmatprep.subr.bf16.mxu0 0
        %3141 = vmatpush1.bf16.msra.mxu0 %v3065
        %3142 = vmatprep.subr.bf16.mxu0 0
        %3143 = vmatpush1.bf16.msra.mxu0 %v3066
        %3144 = vmatprep.subr.bf16.mxu0 0
        %3145 = vmatpush1.bf16.msra.mxu0 %v3067
        %3146 = vmatprep.subr.bf16.mxu0 0
        %3147 = vmatpush1.bf16.msra.mxu0 %v3068
        %3148 = vmatprep.subr.bf16.mxu0 0
        %3149 = vmatpush1.bf16.msra.mxu0 %v3069
        %3150 = vmatprep.mubr.bf16.mxu0 %v2848
        %3151 = vmatmul.mubr.bf16.gmra.mrb[0].mxu0 %v2847
        %v3152 = vpop.f32.mrb[0].mxu0
        %v3153 = vadd.f32 %v2924, %v3152
        %v3154 = vpop.f32.mrb[0].mxu0
        %v3155 = vpop.f32.mrb[0].mxu0
        %v3156 = vadd.f32 %v2924, %v3155
        %v3157 = vpop.f32.mrb[0].mxu0
        %3158 = vmatprep.mubr.bf16.mxu0 %v2852
        %3159 = vmatmul.mubr.bf16.gmra.mrb[0].mxu0 %v2851
        %v3160 = vpop.f32.mrb[0].mxu0
        %v3161 = vadd.f32 %v2924, %v3160
        %v3162 = vpop.f32.mrb[0].mxu0
        %v3163 = vpop.f32.mrb[0].mxu0
        %v3164 = vadd.f32 %v2924, %v3163
        %v3165 = vpop.f32.mrb[0].mxu0
        %3166 = vdwg.mxu0
        %3167 = vmatprep.subr.bf16.mxu0 0
        %3168 = vmatpush1.bf16.msra.mxu0 %v3070
        %3169 = vmatprep.subr.bf16.mxu0 0
        %3170 = vmatpush1.bf16.msra.mxu0 %v3071
        %3171 = vmatprep.subr.bf16.mxu0 0
        %3172 = vmatpush1.bf16.msra.mxu0 %v3072
        %3173 = vmatprep.subr.bf16.mxu0 0
        %3174 = vmatpush1.bf16.msra.mxu0 %v3073
        %3175 = vmatprep.subr.bf16.mxu0 0
        %3176 = vmatpush1.bf16.msra.mxu0 %v3074
        %3177 = vmatprep.subr.bf16.mxu0 0
        %3178 = vmatpush1.bf16.msra.mxu0 %v3075
        %3179 = vmatprep.subr.bf16.mxu0 0
        %3180 = vmatpush1.bf16.msra.mxu0 %v3076
        %3181 = vmatprep.subr.bf16.mxu0 0
        %3182 = vmatpush1.bf16.msra.mxu0 %v3077
        %3183 = vmatprep.subr.bf16.mxu0 0
        %3184 = vmatpush1.bf16.msra.mxu0 %v3078
        %3185 = vmatprep.subr.bf16.mxu0 0
        %3186 = vmatpush1.bf16.msra.mxu0 %v3079
        %3187 = vmatprep.subr.bf16.mxu0 0
        %3188 = vmatpush1.bf16.msra.mxu0 %v3080
        %3189 = vmatprep.subr.bf16.mxu0 0
        %3190 = vmatpush1.bf16.msra.mxu0 %v3081
        %3191 = vmatprep.subr.bf16.mxu0 0
        %3192 = vmatpush1.bf16.msra.mxu0 %v3082
        %3193 = vmatprep.subr.bf16.mxu0 0
        %3194 = vmatpush1.bf16.msra.mxu0 %v3083
        %3195 = vmatprep.subr.bf16.mxu0 0
        %3196 = vmatpush1.bf16.msra.mxu0 %v3084
        %3197 = vmatprep.subr.bf16.mxu0 0
        %3198 = vmatpush1.bf16.msra.mxu0 %v3085
        %3199 = vmatprep.mubr.bf16.mxu0 %v2850
        %3200 = vmatmul.mubr.bf16.gmra.mrb[0].mxu0 %v2849
        %v3201 = vpop.f32.mrb[0].mxu0
        %v3202 = vadd.f32 %v3153, %v3201
        %v3203 = vpop.f32.mrb[0].mxu0
        %v3204 = vpop.f32.mrb[0].mxu0
        %v3205 = vadd.f32 %v3156, %v3204
        %v3206 = vpop.f32.mrb[0].mxu0
        %3207 = vmatprep.mubr.bf16.mxu0 %v2854
        %3208 = vmatmul.mubr.bf16.gmra.mrb[0].mxu0 %v2853
        %v3209 = vpop.f32.mrb[0].mxu0
        %v3210 = vadd.f32 %v3161, %v3209
        %v3211 = vpop.f32.mrb[0].mxu0
        %v3212 = vpop.f32.mrb[0].mxu0
        %v3213 = vadd.f32 %v3164, %v3212
        %v3214 = vpop.f32.mrb[0].mxu0
        %3215 = vdwg.mxu0
        %v3216 = vadd.f32 %v3202, %v2377
        %v3217 = vadd.f32 %v3205, %v2378
        %v3218 = vadd.f32 %v3210, %v2379
        %v3219 = vadd.f32 %v3213, %v2380
        %v3220 = vld [vmem:[%s790] sm:$0x1]
        %v3221 = vld [vmem:[%s793] sm:$0x1]
        %3222 = vadd.xlane.f32.xlu0 %v3216
        %v3223 = vpop.xlane.xlu0 %3222
        %3224 = vadd.xlane.f32.xlu0 %v3217
        %v3225 = vpop.xlane.xlu0 %3224
        %3226 = vadd.xlane.f32.xlu0 %v3218
        %v3227 = vpop.xlane.xlu0 %3226
        %3228 = vadd.xlane.f32.xlu0 %v3219
        %v3229 = vpop.xlane.xlu0 %3228
        %v3230 = vmul.f32 %v3223, %v2324
        %v3231 = vmul.f32 %v3225, %v2324
        %v3232 = vmul.f32 %v3227, %v2324
        %v3233 = vmul.f32 %v3229, %v2324
        %v3234 = vsub.f32 %v3216, %v3230
        %v3235 = vsub.f32 %v3217, %v3231
        %v3236 = vsub.f32 %v3218, %v3232
        %v3237 = vsub.f32 %v3219, %v3233
        %v3238 = vmul.f32 %v3234, %v3234
        %v3239 = vmul.f32 %v3235, %v3235
        %v3240 = vmul.f32 %v3236, %v3236
        %v3241 = vmul.f32 %v3237, %v3237
        %3242 = vadd.xlane.f32.xlu0 %v3238
        %v3243 = vpop.xlane.xlu0 %3242
        %3244 = vadd.xlane.f32.xlu0 %v3239
        %v3245 = vpop.xlane.xlu0 %3244
        %3246 = vadd.xlane.f32.xlu0 %v3240
        %v3247 = vpop.xlane.xlu0 %3246
        %3248 = vadd.xlane.f32.xlu0 %v3241
        %v3249 = vpop.xlane.xlu0 %3248
        %v3250 = vmul.f32 %v3243, %v2324
        %v3251 = vmul.f32 %v3245, %v2324
        %v3252 = vmul.f32 %v3247, %v2324
        %v3253 = vmul.f32 %v3249, %v2324
        %v3254 = vadd.f32 %v3250, 1e-12
        %v3255 = vadd.f32 %v3251, 1e-12
        %v3256 = vadd.f32 %v3252, 1e-12
        %v3257 = vadd.f32 %v3253, 1e-12
        %v3258 = vrsqrt.pop %v3254
        %v3259 = vrsqrt.pop %v3255
        %v3260 = vrsqrt.pop %v3256
        %v3261 = vrsqrt.pop %v3257
        %v3262 = vmul.f32 %v3234, %v3258
        %v3263 = vmul.f32 %v3235, %v3259
        %v3264 = vmul.f32 %v3236, %v3260
        %v3265 = vmul.f32 %v3237, %v3261
        %v3267 = vlaneseq
        %v3268 = vshrl.u32 %v3267, 7
        %v3269 = vsub.s32 0, %v3268
        %v3270 = vrot.slane %v3220, %v3269
        %v3272 = vmul.f32 %v3262, %v3270
        %v3273 = vmul.f32 %v3263, %v3270
        %v3274 = vmul.f32 %v3264, %v3270
        %v3275 = vmul.f32 %v3265, %v3270
        %v3277 = vlaneseq
        %v3278 = vshrl.u32 %v3277, 7
        %v3279 = vsub.s32 0, %v3278
        %v3280 = vrot.slane %v3221, %v3279
        %v3282 = vadd.f32 %v3272, %v3280
        %v3283 = vadd.f32 %v3273, %v3280
        %v3284 = vadd.f32 %v3274, %v3280
        %v3285 = vadd.f32 %v3275, %v3280
        %v3286 = vpack.c.bf16 %v3283, %v3282
        %v3287 = vpack.c.bf16 %v3285, %v3284
        %3288 = vst [vmem:[#allocation2] sm:$0xff] %v3286
        %3289 = vst [vmem:[#allocation2 + $0x8] sm:$0xff] %v3287
        %p3290 = scmp.eq.s32.totalorder %s32, 1
        // Predicated region
        $region105: #{distilbert_class_forward.1} parent=99 // pred_check
          %p3291 = pneg %p3290
        $region106: #{distilbert_class_forward.1} parent=99 // pred_check_branch
          %3293 = sbr.rel (%p3291) target = $region108
        $region107: #{distilbert_class_forward.1} parent=99 // pred_region
          %v3295 = vrot.slane %v3284, 7
          %vm3297 = vcmask 1040384
          %v3298 = vsel %vm3297, %v3282, %v3295
          %v3299 = vpack.c.bf16 %v3298, %v3298
          %v3300 = vld [vmem:[%s16] sm:$0xf]
          %v3301 = vld [vmem:[%s16 + $0x4] sm:$0xf]
          %v3302 = vld [vmem:[%s16 + $0x8] sm:$0xf]
          %v3303 = vld [vmem:[%s16 + $0xc] sm:$0xf]
          %v3304 = vld [vmem:[%s16 + $0x10] sm:$0xf]
          %v3305 = vld [vmem:[%s16 + $0x14] sm:$0xf]
          %v3306 = vld [vmem:[%s16 + $0x18] sm:$0xf]
          %v3307 = vld [vmem:[%s16 + $0x1c] sm:$0xf]
          %v3308 = vld [vmem:[%s16 + $0x20] sm:$0xf]
          %v3309 = vld [vmem:[%s16 + $0x24] sm:$0xf]
          %v3310 = vld [vmem:[%s16 + $0x28] sm:$0xf]
          %v3311 = vld [vmem:[%s16 + $0x2c] sm:$0xf]
          %v3312 = vld [vmem:[%s16 + $0x30] sm:$0xf]
          %v3313 = vld [vmem:[%s16 + $0x34] sm:$0xf]
          %v3314 = vld [vmem:[%s16 + $0x38] sm:$0xf]
          %v3315 = vld [vmem:[%s16 + $0x3c] sm:$0xf]
          %v3316 = vld [vmem:[%s17] sm:$0x1]
          %v3318 = vlaneseq
          %v3319 = vshrl.u32 %v3318, 7
          %v3320 = vsub.s32 0, %v3319
          %v3321 = vrot.slane %v3316, %v3320
          %v3339 = vunpack.c.l.b16 %v3300
          %v3340 = vunpack.c.l.b16 %v3301
          %v3341 = vunpack.c.l.b16 %v3302
          %v3342 = vunpack.c.l.b16 %v3303
          %v3343 = vunpack.c.l.b16 %v3304
          %v3344 = vunpack.c.l.b16 %v3305
          %v3345 = vunpack.c.l.b16 %v3306
          %v3346 = vunpack.c.l.b16 %v3307
          %v3347 = vunpack.c.l.b16 %v3308
          %v3348 = vunpack.c.l.b16 %v3309
          %v3349 = vunpack.c.l.b16 %v3310
          %v3350 = vunpack.c.l.b16 %v3311
          %v3351 = vunpack.c.l.b16 %v3312
          %v3352 = vunpack.c.l.b16 %v3313
          %v3353 = vunpack.c.l.b16 %v3314
          %v3354 = vunpack.c.l.b16 %v3315
          %v3355 = vpack.c.b16 %v3340, %v3339
          %v3356 = vpack.c.b16 %v3342, %v3341
          %v3357 = vpack.c.b16 %v3344, %v3343
          %v3358 = vpack.c.b16 %v3346, %v3345
          %v3359 = vpack.c.b16 %v3348, %v3347
          %v3360 = vpack.c.b16 %v3350, %v3349
          %v3361 = vpack.c.b16 %v3352, %v3351
          %v3362 = vpack.c.b16 %v3354, %v3353
          %3371 = vmatprep.subr.bf16.mxu0 0
          %3372 = vmatpush1.bf16.msra.mxu0 %v3355
          %3373 = vmatprep.subr.bf16.mxu0 0
          %3374 = vmatpush1.bf16.msra.mxu0 %v3356
          %3375 = vmatprep.subr.bf16.mxu0 0
          %3376 = vmatpush1.bf16.msra.mxu0 %v3357
          %3377 = vmatprep.subr.bf16.mxu0 0
          %3378 = vmatpush1.bf16.msra.mxu0 %v3358
          %3379 = vmatprep.subr.bf16.mxu0 0
          %3380 = vmatpush1.bf16.msra.mxu0 %v3359
          %3381 = vmatprep.subr.bf16.mxu0 0
          %3382 = vmatpush1.bf16.msra.mxu0 %v3360
          %3383 = vmatprep.subr.bf16.mxu0 0
          %3384 = vmatpush1.bf16.msra.mxu0 %v3361
          %3385 = vmatprep.subr.bf16.mxu0 0
          %3386 = vmatpush1.bf16.msra.mxu0 %v3362
          %3387 = vmatprep.subr.bf16.mxu0 0
          %3388 = vmatpush1.bf16.msra.mxu0 0
          %3389 = vmatprep.subr.bf16.mxu0 0
          %3390 = vmatpush1.bf16.msra.mxu0 0
          %3391 = vmatprep.subr.bf16.mxu0 0
          %3392 = vmatpush1.bf16.msra.mxu0 0
          %3393 = vmatprep.subr.bf16.mxu0 0
          %3394 = vmatpush1.bf16.msra.mxu0 0
          %3395 = vmatprep.subr.bf16.mxu0 0
          %3396 = vmatpush1.bf16.msra.mxu0 0
          %3397 = vmatprep.subr.bf16.mxu0 0
          %3398 = vmatpush1.bf16.msra.mxu0 0
          %3399 = vmatprep.subr.bf16.mxu0 0
          %3400 = vmatpush1.bf16.msra.mxu0 0
          %3401 = vmatprep.subr.bf16.mxu0 0
          %3402 = vmatpush1.bf16.msra.mxu0 0
          %3403 = vmatprep.mubr.bf16.mxu0 0
          %3404 = vmatmul.mubr.bf16.gmra.mrb[0].mxu0 %v3299
          %v3405 = vpop.f32.mrb[0].mxu0
          %v3406 = vadd.f32 %v3321, %v3405
          %v3407 = vpop.f32.mrb[0].mxu0
          %v3408 = vpop.f32.mrb[0].mxu0
          %v3409 = vpop.f32.mrb[0].mxu0
          %3410 = vdwg.mxu0
          %v3411 = vmax.f32 %v3406, 0.0
          %v3412 = vpack.c.bf16 %v3411, %v3411
          %v3413 = vld [vmem:[%s18] sm:$0xf]
          %v3414 = vld [vmem:[%s18 + $0x4] sm:$0xf]
          %v3415 = vld [vmem:[%s18 + $0x8] sm:$0xf]
          %v3416 = vld [vmem:[%s18 + $0xc] sm:$0xf]
          %v3417 = vld [vmem:[%s18 + $0x10] sm:$0xf]
          %v3418 = vld [vmem:[%s18 + $0x14] sm:$0xf]
          %v3419 = vld [vmem:[%s18 + $0x18] sm:$0xf]
          %v3420 = vld [vmem:[%s18 + $0x1c] sm:$0xf]
          %v3421 = vld [vmem:[%s18 + $0x20] sm:$0xf]
          %v3422 = vld [vmem:[%s18 + $0x24] sm:$0xf]
          %v3423 = vld [vmem:[%s18 + $0x28] sm:$0xf]
          %v3424 = vld [vmem:[%s18 + $0x2c] sm:$0xf]
          %v3425 = vld [vmem:[%s18 + $0x30] sm:$0xf]
          %v3426 = vld [vmem:[%s18 + $0x34] sm:$0xf]
          %v3427 = vld [vmem:[%s18 + $0x38] sm:$0xf]
          %v3428 = vld [vmem:[%s18 + $0x3c] sm:$0xf]
          %v3429 = vld [vmem:[%s19] sm:$0x1]
          %v3431 = vlaneseq
          %v3432 = vshrl.u32 %v3431, 7
          %v3433 = vsub.s32 0, %v3432
          %v3434 = vrot.slane %v3429, %v3433
          %v3452 = vunpack.c.l.b16 %v3413
          %v3453 = vunpack.c.l.b16 %v3414
          %v3454 = vunpack.c.l.b16 %v3415
          %v3455 = vunpack.c.l.b16 %v3416
          %v3456 = vunpack.c.l.b16 %v3417
          %v3457 = vunpack.c.l.b16 %v3418
          %v3458 = vunpack.c.l.b16 %v3419
          %v3459 = vunpack.c.l.b16 %v3420
          %v3460 = vunpack.c.l.b16 %v3421
          %v3461 = vunpack.c.l.b16 %v3422
          %v3462 = vunpack.c.l.b16 %v3423
          %v3463 = vunpack.c.l.b16 %v3424
          %v3464 = vunpack.c.l.b16 %v3425
          %v3465 = vunpack.c.l.b16 %v3426
          %v3466 = vunpack.c.l.b16 %v3427
          %v3467 = vunpack.c.l.b16 %v3428
          %v3468 = vpack.c.b16 %v3453, %v3452
          %v3469 = vpack.c.b16 %v3455, %v3454
          %v3470 = vpack.c.b16 %v3457, %v3456
          %v3471 = vpack.c.b16 %v3459, %v3458
          %v3472 = vpack.c.b16 %v3461, %v3460
          %v3473 = vpack.c.b16 %v3463, %v3462
          %v3474 = vpack.c.b16 %v3465, %v3464
          %v3475 = vpack.c.b16 %v3467, %v3466
          %3484 = vmatprep.subr.bf16.mxu0 0
          %3485 = vmatpush1.bf16.msra.mxu0 %v3468
          %3486 = vmatprep.subr.bf16.mxu0 0
          %3487 = vmatpush1.bf16.msra.mxu0 %v3469
          %3488 = vmatprep.subr.bf16.mxu0 0
          %3489 = vmatpush1.bf16.msra.mxu0 %v3470
          %3490 = vmatprep.subr.bf16.mxu0 0
          %3491 = vmatpush1.bf16.msra.mxu0 %v3471
          %3492 = vmatprep.subr.bf16.mxu0 0
          %3493 = vmatpush1.bf16.msra.mxu0 %v3472
          %3494 = vmatprep.subr.bf16.mxu0 0
          %3495 = vmatpush1.bf16.msra.mxu0 %v3473
          %3496 = vmatprep.subr.bf16.mxu0 0
          %3497 = vmatpush1.bf16.msra.mxu0 %v3474
          %3498 = vmatprep.subr.bf16.mxu0 0
          %3499 = vmatpush1.bf16.msra.mxu0 %v3475
          %3500 = vmatprep.subr.bf16.mxu0 0
          %3501 = vmatpush1.bf16.msra.mxu0 0
          %3502 = vmatprep.subr.bf16.mxu0 0
          %3503 = vmatpush1.bf16.msra.mxu0 0
          %3504 = vmatprep.subr.bf16.mxu0 0
          %3505 = vmatpush1.bf16.msra.mxu0 0
          %3506 = vmatprep.subr.bf16.mxu0 0
          %3507 = vmatpush1.bf16.msra.mxu0 0
          %3508 = vmatprep.subr.bf16.mxu0 0
          %3509 = vmatpush1.bf16.msra.mxu0 0
          %3510 = vmatprep.subr.bf16.mxu0 0
          %3511 = vmatpush1.bf16.msra.mxu0 0
          %3512 = vmatprep.subr.bf16.mxu0 0
          %3513 = vmatpush1.bf16.msra.mxu0 0
          %3514 = vmatprep.subr.bf16.mxu0 0
          %3515 = vmatpush1.bf16.msra.mxu0 0
          %3516 = vmatprep.mubr.bf16.mxu0 0
          %3517 = vmatmul.mubr.bf16.gmra.mrb[0].mxu0 %v3412
          %v3518 = vpop.f32.mrb[0].mxu0
          %v3519 = vadd.f32 %v3434, %v3518
          %v3520 = vpop.f32.mrb[0].mxu0
          %v3521 = vpop.f32.mrb[0].mxu0
          %v3522 = vpop.f32.mrb[0].mxu0
          %3523 = vdwg.mxu0
          %3524 = vst [vmem:[#allocation3] sm:$0x3] %v3519
        $region108: #{distilbert_class_forward.1} parent=99 // pred_fallthru
          _
        // Predicated region
        $region109: #{distilbert_class_forward.1} parent=99 // pred_check
          %p3525 = pneg %p525
        $region110: #{distilbert_class_forward.1} parent=99 // pred_check_branch
          %3527 = sbr.rel (%p3525) target = $region112
        $region111: #{distilbert_class_forward.1} parent=99 // pred_region
          %s3529 = ssub.s32 32, 32
          %3530 = vsyncadd [#allocation4], %s3529
          %s3532 = sshll.u32 [#allocation3], 4
          %s3533 = int_to_ptr.vmem [resolvable:$true] %s3532
          %3535 = dma.vmem_to_hbm [thread:$0]  %s3533, 32, %s20, [#allocation4]
        $region112: #{distilbert_class_forward.1} parent=99 // pred_fallthru
          _
        // Predicated region
        $region113: #{distilbert_class_forward.1} parent=99 // pred_check
          %p3536 = pneg %p525
        $region114: #{distilbert_class_forward.1} parent=99 // pred_check_branch
          %3538 = sbr.rel (%p3536) target = $region116
        $region115: #{distilbert_class_forward.1} parent=99 // pred_region
          %3539 = dma.done [#allocation4], 32
        $region116: #{distilbert_class_forward.1} parent=99 // pred_fallthru
          _
      $region100: #{distilbert_class_forward.1} parent=5 // pred_fallthru
        _
      %p3540 = scmp.le.s32.totalorder 2, %s27
      // Predicated region
      $region117: #{distilbert_class_forward.1} parent=5 // pred_check
        %p3541 = pneg %p3540
      $region118: #{distilbert_class_forward.1} parent=5 // pred_check_branch
        %3543 = sbr.rel (%p3541) target = $region120
      $region119: #{distilbert_class_forward.1} parent=5 // pred_region
        %s3544 = ssub.s32 %s27, 2
      $region120: #{distilbert_class_forward.1} parent=5 // pred_fallthru
        _
    $region6: #{distilbert_class_forward.1} parent=1 // loop_footer
      %s31 = sadd.s32 1, %s27
    $region7: #{distilbert_class_forward.1} parent=1 // loop_footer_branch
      %26 = sbr.rel target = $region3
    $region8: #{distilbert_class_forward.1} parent=1 // loop_exit
      _
    %3545 = vsyncpa [#allocation4], 1
    %s3546 = scalar_lea.sflag [#allocation4], 1
    %3547 = vsyncpa %s3546, 1

</llo_original>
